<compile_context>
chip_gen: v5e
topology: v5e:2x2
jax: 0.10.0
libtpu: 0.0.40
codegen_flags: <defaults>
</compile_context>

<pallas_src>
import functools
import math

import jax
import jax.numpy as jnp
from jax.experimental import pallas as pl
from jax.experimental.pallas import tpu as pltpu


def _self_attn_kernel(x_ref, wqkv_ref, wout_ref, bias_ref, o_ref, qkv_ref,
                      *, heads, dim_head, hidden, tq, scale):
    # x_ref:    (1, C, HW)      native NCHW image, spatial axis lane-dense
    # wqkv_ref: (C, 3*hidden)   merged q|k|v projection weights (columns = q|k|v)
    # wout_ref: (C, hidden)     to_out projection weight
    # bias_ref: (C, 1)          to_out bias
    # o_ref:    (1, C, tq)      output tile (NCHW layout)
    # qkv_ref:  (HW, 3*hidden)  bf16 VMEM scratch holding q|k|v for the whole image
    qt = pl.program_id(1)

    # ---- QKV projection: ONE (HW, C) @ (C, 3*hidden) matmul, once per image --------
    @pl.when(qt == 0)
    def _project_qkv():
        xb = x_ref[0].astype(jnp.bfloat16)                              # (C, HW)
        w_all = wqkv_ref[...]                                           # (C, 3*hidden) f32
        col = jax.lax.broadcasted_iota(jnp.int32, (1, 3 * hidden), 1)
        # fold the q scale into the q third of the weight (tiny elementwise op)
        w_all = jnp.where(col < hidden, w_all * scale, w_all).astype(jnp.bfloat16)
        # qkv[n, o] = sum_c x[c, n] * w[c, o]  (transposed-LHS form, MXU-native)
        qkv = jax.lax.dot_general(xb, w_all, (((0,), (0,)), ((), ())),
                                  preferred_element_type=jnp.float32)   # (HW, 3*hidden)
        qkv_ref[...] = qkv.astype(jnp.bfloat16)

    row0 = pl.multiple_of(qt * tq, tq)

    # ---- per-head attention over this query tile (static unroll; heads is small) ----
    head_outs = []
    for h in range(heads):
        q_h = qkv_ref[pl.ds(row0, tq), pl.ds(h * dim_head, dim_head)]          # (tq, dh)
        k_h = qkv_ref[:, pl.ds(hidden + h * dim_head, dim_head)]               # (HW, dh)
        v_h = qkv_ref[:, pl.ds(2 * hidden + h * dim_head, dim_head)]           # (HW, dh)

        sim = jax.lax.dot_general(q_h, k_h, (((1,), (1,)), ((), ())),
                                  preferred_element_type=jnp.float32)          # (tq, HW)
        m = jnp.max(sim, axis=-1, keepdims=True)
        p = jnp.exp(sim - m)
        denom = jnp.sum(p, axis=-1, keepdims=True)                             # (tq, 1)
        # Deferred softmax normalization: PV on un-normalized exp (bf16), then one
        # (tq, dh) multiply by the EUP reciprocal.
        o_un = jnp.dot(p.astype(jnp.bfloat16), v_h,
                       preferred_element_type=jnp.float32)                     # (tq, dh)
        o_h = o_un * pl.reciprocal(denom, approx=True)
        head_outs.append(o_h.astype(jnp.bfloat16))

    out_all = jnp.concatenate(head_outs, axis=-1)                              # (tq, hidden)

    # ---- output projection: ONE (C, hidden) @ (hidden, tq) matmul + bias ------------
    wo = wout_ref[...].astype(jnp.bfloat16)                                    # (C, hidden)
    y = jax.lax.dot_general(wo, out_all, (((1,), (1,)), ((), ())),
                            preferred_element_type=jnp.float32)                # (C, tq)
    o_ref[0] = (y + bias_ref[...]).astype(o_ref.dtype)


def self_attention_2d(x, w_qkv, w_out, b_out, *, heads=4, dim_head=32, q_tile=None):
    """SelfAttention2D forward (PyTorch NCHW semantics).

    x:      (N, C, H, W)
    w_qkv:  (3*heads*dim_head, C, 1, 1)   to_qkv conv weight (no bias)
    w_out:  (C, heads*dim_head, 1, 1)     to_out conv weight
    b_out:  (C,)                          to_out conv bias
    """
    N, C, H, W = x.shape
    dh = dim_head
    hidden = heads * dh
    HW = H * W
    scale = dh ** (-0.5)

    # Query-tile size: whole image when small, else the largest tile dividing HW.
    # Bounds the live (tq, HW) attention buffers so large images fit v7x's 64 MiB VMEM.
    if q_tile is None:
        q_tile = HW
        if HW > 1024:
            for cand in (1024, 512, 256):
                if HW % cand == 0:
                    q_tile = cand
                    break
    assert HW % q_tile == 0, "q_tile must divide H*W"
    n_qt = HW // q_tile
    # TODO(synk): for v7x batch-1 workloads, a 'parallel' q-tile axis (recomputing K/V
    # per tile instead of carrying them in scratch) would engage the second TensorCore.

    # x stays in native NCHW layout: (N, C, HW) is a pure reshape, no HBM transpose.
    x_flat = x.reshape(N, C, HW)

    # Merged projection weights (tiny; transposing them in the wrapper is free).
    wqkv_t = jnp.transpose(w_qkv.reshape(3 * hidden, C))      # (C, 3*hidden), cols = q|k|v
    wout_t = w_out.reshape(C, hidden)                         # (C, hidden)
    bias2 = b_out.reshape(C, 1)

    itemsize = x.dtype.itemsize
    vmem_est = (
        2 * C * HW * itemsize                 # x block, double-buffered
        + 2 * C * q_tile * itemsize           # output block, double-buffered
        + HW * 3 * hidden * 2                 # qkv scratch (bf16)
        + 3 * q_tile * HW * 4                 # sim / exp temporaries (f32)
        + q_tile * HW * 2                     # exp in bf16 for the PV matmul
        + 8 * C * hidden * itemsize           # weights
        + (2 << 20)                           # slack
    )
    vmem_limit = int(min(max(vmem_est, 32 * 2**20), 64 * 2**20))

    kernel = functools.partial(
        _self_attn_kernel,
        heads=heads, dim_head=dh, hidden=hidden, tq=q_tile, scale=scale)

    y = pl.pallas_call(
        kernel,
        out_shape=jax.ShapeDtypeStruct((N, C, HW), x.dtype),
        grid_spec=pltpu.PrefetchScalarGridSpec(
            num_scalar_prefetch=0,
            grid=(N, n_qt),                    # batch parallel, query tiles arbitrary
            in_specs=[
                pl.BlockSpec((1, C, HW), lambda b, qt: (b, 0, 0)),
                pl.BlockSpec((C, 3 * hidden), lambda b, qt: (0, 0)),
                pl.BlockSpec((C, hidden), lambda b, qt: (0, 0)),
                pl.BlockSpec((C, 1), lambda b, qt: (0, 0)),
            ],
            out_specs=pl.BlockSpec((1, C, q_tile), lambda b, qt: (b, 0, qt)),
            scratch_shapes=[pltpu.VMEM((HW, 3 * hidden), jnp.bfloat16)],
        ),
        compiler_params=pltpu.CompilerParams(
            dimension_semantics=("parallel", "arbitrary"),
            vmem_limit_bytes=vmem_limit,
        ),
    )(x_flat, wqkv_t, wout_t, bias2)

    return y.reshape(N, C, H, W)


def self_attention_2d_reference(x, w_qkv, w_out, b_out, *, heads=4, dim_head=32):
    """Plain-JAX reference matching the PyTorch module's forward exactly."""
    N, C, H, W = x.shape
    dh = dim_head
    hidden = heads * dh
    HW = H * W
    x_flat = x.reshape(N, C, HW)
    qkv = jnp.einsum("oc,bcn->bon", w_qkv.reshape(3 * hidden, C), x_flat)
    q, k, v = jnp.split(qkv, 3, axis=1)
    q = q.reshape(N, heads, dh, HW) * (dh ** (-0.5))
    k = k.reshape(N, heads, dh, HW)
    v = v.reshape(N, heads, dh, HW)
    sim = jnp.einsum("bhdn,bhdm->bhnm", q, k)
    attn = jax.nn.softmax(sim, axis=-1)
    out = jnp.einsum("bhnm,bhdm->bhdn", attn, v)
    out = out.reshape(N, hidden, HW)
    y = jnp.einsum("oc,bcn->bon", w_out.reshape(C, hidden), out) + b_out[None, :, None]
    return y.reshape(N, C, H, W)


def init_params(key, dim, heads=4, dim_head=32, dtype=jnp.float32):
    """Deterministic init matching nn.Conv2d defaults (kaiming_uniform, a=sqrt(5))."""
    hidden = heads * dim_head
    k1, k2, k3 = jax.random.split(key, 3)
    qkv_bound = 1.0 / math.sqrt(dim)       # to_qkv: fan_in = dim
    w_qkv = jax.random.uniform(k1, (3 * hidden, dim, 1, 1), dtype, -qkv_bound, qkv_bound)
    out_bound = 1.0 / math.sqrt(hidden)    # to_out: fan_in = hidden
    w_out = jax.random.uniform(k2, (dim, hidden, 1, 1), dtype, -out_bound, out_bound)
    b_out = jax.random.uniform(k3, (dim,), dtype, -out_bound, out_bound)
    return w_qkv, w_out, b_out


if __name__ == "__main__":
    key = jax.random.PRNGKey(0)
    k_x, k_p = jax.random.split(key)

    N, dim, H, W = 2, 4, 16, 16
    heads, dim_head = 4, 32

    x = jax.random.normal(k_x, (N, dim, H, W), jnp.float32)
    w_qkv, w_out, b_out = init_params(k_p, dim, heads, dim_head)

    y = self_attention_2d(x, w_qkv, w_out, b_out, heads=heads, dim_head=dim_head)
    y = jax.block_until_ready(y)

    ref = self_attention_2d_reference(x, w_qkv, w_out, b_out, heads=heads, dim_head=dim_head)
    assert y.shape == (N, dim, H, W)
    # Kernel matmuls run with bf16 MXU operands (f32 accumulation); XLA's f32 reference
    # uses multi-pass bf16 MXU — compare at that granularity.
    assert jnp.allclose(y, ref, atol=2e-2, rtol=2e-2), float(jnp.max(jnp.abs(y - ref)))

    print("KERNEL_OK")
</pallas_src>

<mosaic_0001>
module attributes {stable_mosaic.version = 11 : i64} {
  func.func @_self_attn_kernel(%arg0: i32, %arg1: i32, %arg2: memref<1x4x256xf32, #tpu.memory_space<vmem>>, %arg3: memref<4x384xf32, #tpu.memory_space<vmem>>, %arg4: memref<4x128xf32, #tpu.memory_space<vmem>>, %arg5: memref<4x1xf32, #tpu.memory_space<vmem>>, %arg6: memref<1x4x256xf32, #tpu.memory_space<vmem>>, %arg7: memref<256x384xbf16, #tpu.memory_space<vmem>>) attributes {dimension_semantics = [#tpu.dimension_semantics<parallel>, #tpu.dimension_semantics<arbitrary>], iteration_bounds = array<i64: 2, 1>, scalar_prefetch = 0 : i64, scratch_operands = 1 : i64, tpu.core_type = #tpu.core_type<tc>, window_params = [{transform_indices = @transform_0, window_bounds = array<i64: 1, 4, 256>}, {pipeline_mode = #tpu.pipeline_mode<synchronous>, transform_indices = @transform_1, window_bounds = array<i64: 4, 384>}, {pipeline_mode = #tpu.pipeline_mode<synchronous>, transform_indices = @transform_2, window_bounds = array<i64: 4, 128>}, {pipeline_mode = #tpu.pipeline_mode<synchronous>, transform_indices = @transform_3, window_bounds = array<i64: 4, 1>}, {transform_indices = @transform_4, window_bounds = array<i64: 1, 4, 256>}]} {
    %c0_i32 = arith.constant 0 : i32
    %0 = arith.cmpi eq, %arg1, %c0_i32 : i32
    %1 = arith.extui %0 : i1 to i32
    %c0_i32_0 = arith.constant 0 : i32
    %2 = arith.cmpi ne, %1, %c0_i32_0 : i32
    scf.if %2 {
      %c0_32 = arith.constant 0 : index
      %c0_33 = arith.constant 0 : index
      %c0_34 = arith.constant 0 : index
      %87 = vector.load %arg2[%c0_32, %c0_33, %c0_34] : memref<1x4x256xf32, #tpu.memory_space<vmem>>, vector<1x4x256xf32>
      %88 = vector.shape_cast %87 : vector<1x4x256xf32> to vector<4x256xf32>
      %89 = arith.truncf %88 : vector<4x256xf32> to vector<4x256xbf16>
      %c0_35 = arith.constant 0 : index
      %c0_36 = arith.constant 0 : index
      %90 = vector.load %arg3[%c0_35, %c0_36] : memref<4x384xf32, #tpu.memory_space<vmem>>, vector<4x384xf32>
      %91 = tpu.iota {dimensions = array<i32: 1>} : vector<1x384xi32>
      %c128_i32 = arith.constant 128 : i32
      %92 = vector.broadcast %c128_i32 : i32 to vector<1x384xi32>
      %93 = arith.cmpi slt, %91, %92 : vector<1x384xi32>
      %cst_37 = arith.constant 0.176776692 : f32
      %94 = vector.broadcast %cst_37 : f32 to vector<4x384xf32>
      %95 = arith.mulf %90, %94 : vector<4x384xf32>
      %96 = vector.shape_cast %93 : vector<1x384xi1> to vector<1x384xi1>
      %97 = vector.broadcast %96 : vector<1x384xi1> to vector<4x384xi1>
      %98 = arith.select %97, %95, %90 : vector<4x384xi1>, vector<4x384xf32>
      %99 = arith.truncf %98 : vector<4x384xf32> to vector<4x384xbf16>
      %cst_38 = arith.constant dense<0.000000e+00> : vector<256x384xf32>
      %100 = tpu.matmul %89, %99, %cst_38 {dimension_numbers = #tpu.dot_dimension_numbers<[0], [0], [1], [1], [0, 1, 1, 1], [], []>} : vector<4x256xbf16>, vector<4x384xbf16>, vector<256x384xf32> -> vector<256x384xf32>
      %101 = arith.truncf %100 : vector<256x384xf32> to vector<256x384xbf16>
      %c0_39 = arith.constant 0 : index
      %c0_40 = arith.constant 0 : index
      %102 = vector.load %arg7[%c0_39, %c0_40] : memref<256x384xbf16, #tpu.memory_space<vmem>>, vector<256x384xbf16>
      tpu.vector_store %arg7[%c0_39, %c0_40], %101 {strides = array<i32>} : memref<256x384xbf16, #tpu.memory_space<vmem>>, vector<256x384xbf16>,
    } else {
    }
    %c256_i32 = arith.constant 256 : i32
    %3 = arith.muli %arg1, %c256_i32 : i32
    %4 = tpu.assume_multiple %3, 256 : i32
    %5 = arith.index_cast %4 : i32 to index
    %c0 = arith.constant 0 : index
    %6 = vector.load %arg7[%5, %c0] : memref<256x384xbf16, #tpu.memory_space<vmem>>, vector<256x32xbf16>
    %c0_1 = arith.constant 0 : index
    %c128 = arith.constant 128 : index
    %7 = vector.load %arg7[%c0_1, %c128] : memref<256x384xbf16, #tpu.memory_space<vmem>>, vector<256x32xbf16>
    %c0_2 = arith.constant 0 : index
    %c256 = arith.constant 256 : index
    %8 = vector.load %arg7[%c0_2, %c256] : memref<256x384xbf16, #tpu.memory_space<vmem>>, vector<256x32xbf16>
    %cst = arith.constant dense<0.000000e+00> : vector<256x256xf32>
    %9 = tpu.matmul %6, %7, %cst {dimension_numbers = #tpu.dot_dimension_numbers<[1], [1], [0], [0], [0, 0, 1, 0], [], []>} : vector<256x32xbf16>, vector<256x32xbf16>, vector<256x256xf32> -> vector<256x256xf32>
    %cst_3 = arith.constant dense<0xFF800000> : vector<256xf32>
    %10 = vector.multi_reduction <maximumf>, %9, %cst_3 [1] : vector<256x256xf32> to vector<256xf32>
    %11 = vector.shape_cast %10 : vector<256xf32> to vector<256x1xf32>
    %12 = vector.broadcast %11 : vector<256x1xf32> to vector<256x256xf32>
    %13 = arith.subf %9, %12 : vector<256x256xf32>
    %14 = math.exp %13 : vector<256x256xf32>
    %cst_4 = arith.constant dense<0.000000e+00> : vector<256xf32>
    %15 = vector.multi_reduction <add>, %14, %cst_4 [1] : vector<256x256xf32> to vector<256xf32>
    %16 = vector.shape_cast %15 : vector<256xf32> to vector<256x1xf32>
    %17 = arith.truncf %14 : vector<256x256xf32> to vector<256x256xbf16>
    %cst_5 = arith.constant dense<0.000000e+00> : vector<256x32xf32>
    %18 = tpu.matmul %17, %8, %cst_5 {dimension_numbers = #tpu.dot_dimension_numbers<[1], [0], [0], [1], [0, 0, 1, 1], [], []>} : vector<256x256xbf16>, vector<256x32xbf16>, vector<256x32xf32> -> vector<256x32xf32>
    %19 = tpu.reciprocal %16 {approx = true} : vector<256x1xf32> -> vector<256x1xf32>
    %20 = vector.broadcast %19 : vector<256x1xf32> to vector<256x32xf32>
    %21 = arith.mulf %18, %20 : vector<256x32xf32>
    %22 = arith.truncf %21 : vector<256x32xf32> to vector<256x32xbf16>
    %23 = arith.index_cast %4 : i32 to index
    %c32 = arith.constant 32 : index
    %24 = vector.load %arg7[%23, %c32] : memref<256x384xbf16, #tpu.memory_space<vmem>>, vector<256x32xbf16>
    %c0_6 = arith.constant 0 : index
    %c160 = arith.constant 160 : index
    %25 = vector.load %arg7[%c0_6, %c160] : memref<256x384xbf16, #tpu.memory_space<vmem>>, vector<256x32xbf16>
    %c0_7 = arith.constant 0 : index
    %c288 = arith.constant 288 : index
    %26 = vector.load %arg7[%c0_7, %c288] : memref<256x384xbf16, #tpu.memory_space<vmem>>, vector<256x32xbf16>
    %cst_8 = arith.constant dense<0.000000e+00> : vector<256x256xf32>
    %27 = tpu.matmul %24, %25, %cst_8 {dimension_numbers = #tpu.dot_dimension_numbers<[1], [1], [0], [0], [0, 0, 1, 0], [], []>} : vector<256x32xbf16>, vector<256x32xbf16>, vector<256x256xf32> -> vector<256x256xf32>
    %cst_9 = arith.constant dense<0xFF800000> : vector<256xf32>
    %28 = vector.multi_reduction <maximumf>, %27, %cst_9 [1] : vector<256x256xf32> to vector<256xf32>
    %29 = vector.shape_cast %28 : vector<256xf32> to vector<256x1xf32>
    %30 = vector.broadcast %29 : vector<256x1xf32> to vector<256x256xf32>
    %31 = arith.subf %27, %30 : vector<256x256xf32>
    %32 = math.exp %31 : vector<256x256xf32>
    %cst_10 = arith.constant dense<0.000000e+00> : vector<256xf32>
    %33 = vector.multi_reduction <add>, %32, %cst_10 [1] : vector<256x256xf32> to vector<256xf32>
    %34 = vector.shape_cast %33 : vector<256xf32> to vector<256x1xf32>
    %35 = arith.truncf %32 : vector<256x256xf32> to vector<256x256xbf16>
    %cst_11 = arith.constant dense<0.000000e+00> : vector<256x32xf32>
    %36 = tpu.matmul %35, %26, %cst_11 {dimension_numbers = #tpu.dot_dimension_numbers<[1], [0], [0], [1], [0, 0, 1, 1], [], []>} : vector<256x256xbf16>, vector<256x32xbf16>, vector<256x32xf32> -> vector<256x32xf32>
    %37 = tpu.reciprocal %34 {approx = true} : vector<256x1xf32> -> vector<256x1xf32>
    %38 = vector.broadcast %37 : vector<256x1xf32> to vector<256x32xf32>
    %39 = arith.mulf %36, %38 : vector<256x32xf32>
    %40 = arith.truncf %39 : vector<256x32xf32> to vector<256x32xbf16>
    %41 = arith.index_cast %4 : i32 to index
    %c64 = arith.constant 64 : index
    %42 = vector.load %arg7[%41, %c64] : memref<256x384xbf16, #tpu.memory_space<vmem>>, vector<256x32xbf16>
    %c0_12 = arith.constant 0 : index
    %c192 = arith.constant 192 : index
    %43 = vector.load %arg7[%c0_12, %c192] : memref<256x384xbf16, #tpu.memory_space<vmem>>, vector<256x32xbf16>
    %c0_13 = arith.constant 0 : index
    %c320 = arith.constant 320 : index
    %44 = vector.load %arg7[%c0_13, %c320] : memref<256x384xbf16, #tpu.memory_space<vmem>>, vector<256x32xbf16>
    %cst_14 = arith.constant dense<0.000000e+00> : vector<256x256xf32>
    %45 = tpu.matmul %42, %43, %cst_14 {dimension_numbers = #tpu.dot_dimension_numbers<[1], [1], [0], [0], [0, 0, 1, 0], [], []>} : vector<256x32xbf16>, vector<256x32xbf16>, vector<256x256xf32> -> vector<256x256xf32>
    %cst_15 = arith.constant dense<0xFF800000> : vector<256xf32>
    %46 = vector.multi_reduction <maximumf>, %45, %cst_15 [1] : vector<256x256xf32> to vector<256xf32>
    %47 = vector.shape_cast %46 : vector<256xf32> to vector<256x1xf32>
    %48 = vector.broadcast %47 : vector<256x1xf32> to vector<256x256xf32>
    %49 = arith.subf %45, %48 : vector<256x256xf32>
    %50 = math.exp %49 : vector<256x256xf32>
    %cst_16 = arith.constant dense<0.000000e+00> : vector<256xf32>
    %51 = vector.multi_reduction <add>, %50, %cst_16 [1] : vector<256x256xf32> to vector<256xf32>
    %52 = vector.shape_cast %51 : vector<256xf32> to vector<256x1xf32>
    %53 = arith.truncf %50 : vector<256x256xf32> to vector<256x256xbf16>
    %cst_17 = arith.constant dense<0.000000e+00> : vector<256x32xf32>
    %54 = tpu.matmul %53, %44, %cst_17 {dimension_numbers = #tpu.dot_dimension_numbers<[1], [0], [0], [1], [0, 0, 1, 1], [], []>} : vector<256x256xbf16>, vector<256x32xbf16>, vector<256x32xf32> -> vector<256x32xf32>
    %55 = tpu.reciprocal %52 {approx = true} : vector<256x1xf32> -> vector<256x1xf32>
    %56 = vector.broadcast %55 : vector<256x1xf32> to vector<256x32xf32>
    %57 = arith.mulf %54, %56 : vector<256x32xf32>
    %58 = arith.truncf %57 : vector<256x32xf32> to vector<256x32xbf16>
    %59 = arith.index_cast %4 : i32 to index
    %c96 = arith.constant 96 : index
    %60 = vector.load %arg7[%59, %c96] : memref<256x384xbf16, #tpu.memory_space<vmem>>, vector<256x32xbf16>
    %c0_18 = arith.constant 0 : index
    %c224 = arith.constant 224 : index
    %61 = vector.load %arg7[%c0_18, %c224] : memref<256x384xbf16, #tpu.memory_space<vmem>>, vector<256x32xbf16>
    %c0_19 = arith.constant 0 : index
    %c352 = arith.constant 352 : index
    %62 = vector.load %arg7[%c0_19, %c352] : memref<256x384xbf16, #tpu.memory_space<vmem>>, vector<256x32xbf16>
    %cst_20 = arith.constant dense<0.000000e+00> : vector<256x256xf32>
    %63 = tpu.matmul %60, %61, %cst_20 {dimension_numbers = #tpu.dot_dimension_numbers<[1], [1], [0], [0], [0, 0, 1, 0], [], []>} : vector<256x32xbf16>, vector<256x32xbf16>, vector<256x256xf32> -> vector<256x256xf32>
    %cst_21 = arith.constant dense<0xFF800000> : vector<256xf32>
    %64 = vector.multi_reduction <maximumf>, %63, %cst_21 [1] : vector<256x256xf32> to vector<256xf32>
    %65 = vector.shape_cast %64 : vector<256xf32> to vector<256x1xf32>
    %66 = vector.broadcast %65 : vector<256x1xf32> to vector<256x256xf32>
    %67 = arith.subf %63, %66 : vector<256x256xf32>
    %68 = math.exp %67 : vector<256x256xf32>
    %cst_22 = arith.constant dense<0.000000e+00> : vector<256xf32>
    %69 = vector.multi_reduction <add>, %68, %cst_22 [1] : vector<256x256xf32> to vector<256xf32>
    %70 = vector.shape_cast %69 : vector<256xf32> to vector<256x1xf32>
    %71 = arith.truncf %68 : vector<256x256xf32> to vector<256x256xbf16>
    %cst_23 = arith.constant dense<0.000000e+00> : vector<256x32xf32>
    %72 = tpu.matmul %71, %62, %cst_23 {dimension_numbers = #tpu.dot_dimension_numbers<[1], [0], [0], [1], [0, 0, 1, 1], [], []>} : vector<256x256xbf16>, vector<256x32xbf16>, vector<256x32xf32> -> vector<256x32xf32>
    %73 = tpu.reciprocal %70 {approx = true} : vector<256x1xf32> -> vector<256x1xf32>
    %74 = vector.broadcast %73 : vector<256x1xf32> to vector<256x32xf32>
    %75 = arith.mulf %72, %74 : vector<256x32xf32>
    %76 = arith.truncf %75 : vector<256x32xf32> to vector<256x32xbf16>
    %77 = tpu.concatenate %22, %40, %58, %76 in 1 : vector<256x32xbf16>, vector<256x32xbf16>, vector<256x32xbf16>, vector<256x32xbf16> -> vector<256x128xbf16>
    %c0_24 = arith.constant 0 : index
    %c0_25 = arith.constant 0 : index
    %78 = vector.load %arg4[%c0_24, %c0_25] : memref<4x128xf32, #tpu.memory_space<vmem>>, vector<4x128xf32>
    %79 = arith.truncf %78 : vector<4x128xf32> to vector<4x128xbf16>
    %cst_26 = arith.constant dense<0.000000e+00> : vector<4x256xf32>
    %80 = tpu.matmul %79, %77, %cst_26 {dimension_numbers = #tpu.dot_dimension_numbers<[1], [1], [0], [0], [0, 0, 1, 0], [], []>} : vector<4x128xbf16>, vector<256x128xbf16>, vector<4x256xf32> -> vector<4x256xf32>
    %c0_27 = arith.constant 0 : index
    %c0_28 = arith.constant 0 : index
    %81 = vector.load %arg5[%c0_27, %c0_28] : memref<4x1xf32, #tpu.memory_space<vmem>>, vector<4x1xf32>
    %82 = vector.broadcast %81 : vector<4x1xf32> to vector<4x256xf32>
    %83 = arith.addf %80, %82 : vector<4x256xf32>
    %c0_29 = arith.constant 0 : index
    %c0_30 = arith.constant 0 : index
    %c0_31 = arith.constant 0 : index
    %84 = vector.load %arg6[%c0_29, %c0_30, %c0_31] : memref<1x4x256xf32, #tpu.memory_space<vmem>>, vector<1x4x256xf32>
    %85 = vector.shape_cast %84 : vector<1x4x256xf32> to vector<4x256xf32>
    %86 = vector.shape_cast %83 : vector<4x256xf32> to vector<1x4x256xf32>
    tpu.vector_store %arg6[%c0_29, %c0_30, %c0_31], %86 {strides = array<i32>} : memref<1x4x256xf32, #tpu.memory_space<vmem>>, vector<1x4x256xf32>,
    return
  }
  func.func @transform_0(%arg0: i32, %arg1: i32) -> (i32, i32, i32) {
    %c0_i32 = arith.constant 0 : i32
    %c0_i32_0 = arith.constant 0 : i32
    %c0_i32_1 = arith.constant 0 : i32
    return %arg0, %c0_i32, %c0_i32_0 : i32, i32, i32
  }
  func.func @transform_1(%arg0: i32, %arg1: i32) -> (i32, i32) {
    %c0_i32 = arith.constant 0 : i32
    %c0_i32_0 = arith.constant 0 : i32
    %c0_i32_1 = arith.constant 0 : i32
    return %c0_i32, %c0_i32_0 : i32, i32
  }
  func.func @transform_2(%arg0: i32, %arg1: i32) -> (i32, i32) {
    %c0_i32 = arith.constant 0 : i32
    %c0_i32_0 = arith.constant 0 : i32
    %c0_i32_1 = arith.constant 0 : i32
    return %c0_i32, %c0_i32_0 : i32, i32
  }
  func.func @transform_3(%arg0: i32, %arg1: i32) -> (i32, i32) {
    %c0_i32 = arith.constant 0 : i32
    %c0_i32_0 = arith.constant 0 : i32
    %c0_i32_1 = arith.constant 0 : i32
    return %c0_i32, %c0_i32_0 : i32, i32
  }
  func.func @transform_4(%arg0: i32, %arg1: i32) -> (i32, i32, i32) {
    %c0_i32 = arith.constant 0 : i32
    %c0_i32_0 = arith.constant 0 : i32
    return %arg0, %c0_i32, %arg1 : i32, i32, i32
  }
}

</mosaic_0001>

<llo_original>
// kernel: tpu_custom_call.1
$region0: #{tpu_custom_call.1}
  #allocation0 [shape = 'u32[]', space=smem, size = 0x4, offset = 0x4, fixed_abs, tag = 'smem constant byte address 0x4 - core index']
  #allocation1 [shape = 'u32[72,128]{1,0:T(1,128)}', space=vmem, size = 0x9000, scoped, tag = 'internal scratch']
  #allocation2 [shape = 'bf16[256,384]{1,0:T(8,128)(2,1)}', space=vmem, size = 0x30000, scoped, tag = 'scratch operand']
  %s0 = inlined_call_operand.hbm [shape: f32[2,4,256], index: 0, kind: input, shape index: {}]
  %s1 = inlined_call_operand.hbm [shape: f32[4,384], index: 1, kind: input, shape index: {}]
  %s2 = inlined_call_operand.vmem [shape: f32[4,128], index: 2, kind: input, shape index: {}]
  %s3 = inlined_call_operand.vmem [shape: f32[4,1], index: 3, kind: input, shape index: {}]
  %s4 = inlined_call_operand.hbm [shape: f32[2,4,256], index: 4, kind: output, shape index: {}]
  %s5 = sld [smem:[#allocation0]]
  $region61: #{tpu_custom_call.1} parent=0
    _
  %s7 = ssub.s32 1, %s5
  %s8 = scalar_select 0, %s7, %s5
  $region1: #{tpu_custom_call.1} parent=0
    #allocation3 [shape = 'u8[8192]{0}', space=vmem, size = 0x2000, scoped, tag = 'input window, operand 0']
    #allocation4 [shape = 's32[2]{0}', space=sflag, size = 0x8, scoped, tag = 'scoped memory for tpu_custom_call.1']
    #allocation5 [shape = 's32[2]{0}', space=sflag, size = 0x8, scoped, tag = 'scoped memory for tpu_custom_call.1']
    #allocation6 [shape = 'u8[6144]{0}', space=vmem, size = 0x1800, scoped, tag = 'input window, operand 1, single buffered']
    #allocation7 [shape = 's32[1]{0}', space=sflag, size = 0x4, scoped, tag = 'scoped memory for tpu_custom_call.1']
    #allocation8 [shape = 'u8[8192]{0}', space=vmem, size = 0x2000, scoped, tag = 'output window, operand 0']
    %9 = vsyncpa [#allocation4], 0
    %s10 = scalar_lea.sflag [#allocation4], 1
    %11 = vsyncpa %s10, 0
    %12 = vsyncpa [#allocation7], 0
    %13 = vsyncpa [#allocation5], 0
    %s14 = scalar_lea.sflag [#allocation5], 1
    %15 = vsyncpa %s14, 0
    loop: start=0, step=1, limit=4
    $region2: #{tpu_custom_call.1} parent=1 // loop_pre_header
      _
    $region3: #{tpu_custom_call.1} parent=1 // loop_header
      %s17 = sphi 0, %s21
      %p18 = scmp.ge.s32.totalorder %s17, 4
      %s24 = sphi 0, %s36
      %s25 = sphi 0, %s32
      %s26 = sphi 0, %s24
      %s27 = sphi 0, %s25
      %s28 = sphi 0, %s26
      %s29 = sphi 0, %s27
      %s39 = sphi 0, %s41
      %s42 = sphi 0, %s39
      %s43 = sphi 0, %s42
      %s59 = sphi 0, %s43
      %s63 = sphi 0, %s63
      %s65 = sphi 0, %s63
      %s66 = sphi 0, %s65
      %s80 = sphi 0, %s66
      %s84 = sphi 0, %s84
      %s86 = sphi 0, %s84
      %s87 = sphi 0, %s86
      %s101 = sphi 0, %s87
      %s105 = sphi 0, %s105
      %s107 = sphi 0, %s105
      %s108 = sphi 0, %s107
      %s122 = sphi 0, %s108
      %s130 = sphi 0, %s132
      %s133 = sphi 0, %s130
      %s134 = sphi 0, %s133
      %s150 = sphi 0, %s134
    $region4: #{tpu_custom_call.1} parent=1 // loop_header_branch
      %20 = sbr.rel (%p18) target = $region8
    $region5: #{tpu_custom_call.1} parent=1 // loop_body
      %s22 = ssub.s32 %s17, 1
      %s23 = ssub.s32 %s17, 2
      %s30 = sadd.s32 1, %s25
      %p31 = scmp.ge.s32.totalorder %s30, 1
      %s32 = scalar_select %p31, 0, %s30
      %s33 = sadd.s32 1, %s24
      %s34 = scalar_select %p31, %s33, %s24
      %p35 = scmp.ge.s32.totalorder %s34, 2
      %s36 = scalar_select %p35, 0, %s34
      %s37 = ssub.s32 %s24, %s36
      %p38 = scmp.eq.s32.totalorder %s37, 0
      %s40 = sadd.s32 %s39, 1
      %s41 = scalar_select %p38, %s39, %s40
      %p44 = pneg %p38
      %p45 = scmp.eq.s32.totalorder %s17, 1
      %p46 = por %p44, %p45
      %p47 = scmp.ne.s32.totalorder %s39, %s42
      %p48 = scmp.eq.s32.totalorder %s17, 0
      %p49 = por %p47, %p48
      %p50 = scmp.ne.s32.totalorder %s39, %s42
      %p51 = scmp.eq.s32.totalorder %s22, 1
      %p52 = por %p50, %p51
      %p53 = scmp.ne.s32.totalorder %s42, %s43
      %p54 = scmp.eq.s32.totalorder %s22, 0
      %p55 = por %p53, %p54
      %p56 = scmp.ne.s32.totalorder %s42, %s43
      %p57 = scmp.eq.s32.totalorder %s23, 1
      %p58 = por %p56, %p57
      %p60 = scmp.ne.s32.totalorder %s43, %s59
      %p61 = scmp.eq.s32.totalorder %s23, 0
      %p62 = por %p60, %p61
      %s64 = sadd.s32 %s63, 1
      %p67 = scmp.eq.s32.totalorder %s17, 1
      %p68 = scmp.ne.s32.totalorder %s63, %s65
      %p69 = scmp.eq.s32.totalorder %s17, 0
      %p70 = por %p68, %p69
      %p71 = scmp.ne.s32.totalorder %s63, %s65
      %p72 = scmp.eq.s32.totalorder %s22, 1
      %p73 = por %p71, %p72
      %p74 = scmp.ne.s32.totalorder %s65, %s66
      %p75 = scmp.eq.s32.totalorder %s22, 0
      %p76 = por %p74, %p75
      %p77 = scmp.ne.s32.totalorder %s65, %s66
      %p78 = scmp.eq.s32.totalorder %s23, 1
      %p79 = por %p77, %p78
      %p81 = scmp.ne.s32.totalorder %s66, %s80
      %p82 = scmp.eq.s32.totalorder %s23, 0
      %p83 = por %p81, %p82
      %s85 = sadd.s32 %s84, 1
      %p88 = scmp.eq.s32.totalorder %s17, 1
      %p89 = scmp.ne.s32.totalorder %s84, %s86
      %p90 = scmp.eq.s32.totalorder %s17, 0
      %p91 = por %p89, %p90
      %p92 = scmp.ne.s32.totalorder %s84, %s86
      %p93 = scmp.eq.s32.totalorder %s22, 1
      %p94 = por %p92, %p93
      %p95 = scmp.ne.s32.totalorder %s86, %s87
      %p96 = scmp.eq.s32.totalorder %s22, 0
      %p97 = por %p95, %p96
      %p98 = scmp.ne.s32.totalorder %s86, %s87
      %p99 = scmp.eq.s32.totalorder %s23, 1
      %p100 = por %p98, %p99
      %p102 = scmp.ne.s32.totalorder %s87, %s101
      %p103 = scmp.eq.s32.totalorder %s23, 0
      %p104 = por %p102, %p103
      %s106 = sadd.s32 %s105, 1
      %p109 = scmp.eq.s32.totalorder %s17, 1
      %p110 = scmp.ne.s32.totalorder %s105, %s107
      %p111 = scmp.eq.s32.totalorder %s17, 0
      %p112 = por %p110, %p111
      %p113 = scmp.ne.s32.totalorder %s105, %s107
      %p114 = scmp.eq.s32.totalorder %s22, 1
      %p115 = por %p113, %p114
      %p116 = scmp.ne.s32.totalorder %s107, %s108
      %p117 = scmp.eq.s32.totalorder %s22, 0
      %p118 = por %p116, %p117
      %p119 = scmp.ne.s32.totalorder %s107, %s108
      %p120 = scmp.eq.s32.totalorder %s23, 1
      %p121 = por %p119, %p120
      %p123 = scmp.ne.s32.totalorder %s108, %s122
      %p124 = scmp.eq.s32.totalorder %s23, 0
      %p125 = por %p123, %p124
      %s126 = ssub.s32 %s24, %s36
      %s127 = ssub.s32 %s25, %s32
      %s128 = sor.u32 %s126, %s127
      %p129 = scmp.eq.s32.totalorder %s128, 0
      %s131 = sadd.s32 %s130, 1
      %s132 = scalar_select %p129, %s130, %s131
      %p135 = pneg %p129
      %p136 = scmp.eq.s32.totalorder %s17, 1
      %p137 = por %p135, %p136
      %p138 = scmp.ne.s32.totalorder %s130, %s133
      %p139 = scmp.eq.s32.totalorder %s17, 0
      %p140 = por %p138, %p139
      %p141 = scmp.ne.s32.totalorder %s130, %s133
      %p142 = scmp.eq.s32.totalorder %s22, 1
      %p143 = por %p141, %p142
      %p144 = scmp.ne.s32.totalorder %s133, %s134
      %p145 = scmp.eq.s32.totalorder %s22, 0
      %p146 = por %p144, %p145
      %p147 = scmp.ne.s32.totalorder %s133, %s134
      %p148 = scmp.eq.s32.totalorder %s23, 1
      %p149 = por %p147, %p148
      %p151 = scmp.ne.s32.totalorder %s134, %s150
      %p152 = scmp.eq.s32.totalorder %s23, 0
      %p153 = por %p151, %p152
      %p154 = scmp.le.s32.totalorder 1, %s17
      %p155 = scmp.lt.s32.totalorder %s17, 3
      %p156 = pnand %p154, %p155
      %p157 = pneg %p156
      // Predicated region
      $region9: #{tpu_custom_call.1} parent=5 // pred_check
        _
      $region10: #{tpu_custom_call.1} parent=5 // pred_check_branch
        %159 = sbr.rel (%p156) target = $region12
      $region11: #{tpu_custom_call.1} parent=5 // pred_region
        %s160 = ssub.s32 %s17, 1
        // Predicated region
        $region13: #{tpu_custom_call.1} parent=11 // pred_check
          %p161 = pneg %p76
        $region14: #{tpu_custom_call.1} parent=11 // pred_check_branch
          %163 = sbr.rel (%p161) target = $region16
        $region15: #{tpu_custom_call.1} parent=11 // pred_region
          %165 = vsyncadd [#allocation7], 0
          %s167 = sshll.u32 %s1, 4
          %s168 = int_to_ptr.hbm [resolvable:$true] %s167
          %s169 = sshll.u32 [#allocation6], 4
          %s170 = int_to_ptr.vmem [resolvable:$true] %s169
          %172 = dma.hbm_to_vmem [thread:$0]  %s168, 192, %s170, [#allocation7]
        $region16: #{tpu_custom_call.1} parent=11 // pred_fallthru
          _
        // Predicated region
        $region17: #{tpu_custom_call.1} parent=11 // pred_check
          %p173 = pneg %p97
        $region18: #{tpu_custom_call.1} parent=11 // pred_check_branch
          %175 = sbr.rel (%p173) target = $region20
        $region19: #{tpu_custom_call.1} parent=11 // pred_region
          _
        $region20: #{tpu_custom_call.1} parent=11 // pred_fallthru
          _
        // Predicated region
        $region21: #{tpu_custom_call.1} parent=11 // pred_check
          %p176 = pneg %p118
        $region22: #{tpu_custom_call.1} parent=11 // pred_check_branch
          %178 = sbr.rel (%p176) target = $region24
        $region23: #{tpu_custom_call.1} parent=11 // pred_region
          _
        $region24: #{tpu_custom_call.1} parent=11 // pred_fallthru
          _
      $region12: #{tpu_custom_call.1} parent=5 // pred_fallthru
        _
      %p179 = scmp.lt.s32.totalorder %s17, 2
      // Predicated region
      $region25: #{tpu_custom_call.1} parent=5 // pred_check
        %p180 = pneg %p179
      $region26: #{tpu_custom_call.1} parent=5 // pred_check_branch
        %182 = sbr.rel (%p180) target = $region28
      $region27: #{tpu_custom_call.1} parent=5 // pred_region
        // Predicated region
        $region29: #{tpu_custom_call.1} parent=27 // pred_check
          %p183 = pneg %p49
        $region30: #{tpu_custom_call.1} parent=27 // pred_check_branch
          %185 = sbr.rel (%p183) target = $region32
        $region31: #{tpu_custom_call.1} parent=27 // pred_region
          %s186 = sand.u32 %s39, 1
          %s187 = scalar_lea.sflag [#allocation4], %s186
          %s188 = sand.u32 %s39, 1
          %s189 = smul.addr %s188, 8
          %s190 = scalar_lea.vmem [#allocation3], %s189
          %192 = vsyncadd %s187, 0
          %s193 = smul.addr %s24, 2
          %s194 = smul.addr %s193, 4
          %s195 = scalar_lea.hbm %s0, %s194
          %s197 = sshll.u32 %s195, 4
          %s198 = int_to_ptr.hbm [resolvable:$true] %s197
          %s199 = sshll.u32 %s190, 4
          %s200 = int_to_ptr.vmem [resolvable:$true] %s199
          %202 = dma.hbm_to_vmem [thread:$0]  %s198, 128, %s200, %s187
        $region32: #{tpu_custom_call.1} parent=27 // pred_fallthru
          _
      $region28: #{tpu_custom_call.1} parent=5 // pred_fallthru
        _
      %p203 = scmp.le.s32.totalorder 1, %s17
      %p204 = scmp.lt.s32.totalorder %s17, 3
      %p205 = pnand %p203, %p204
      %p206 = pneg %p205
      // Predicated region
      $region33: #{tpu_custom_call.1} parent=5 // pred_check
        _
      $region34: #{tpu_custom_call.1} parent=5 // pred_check_branch
        %208 = sbr.rel (%p205) target = $region36
      $region35: #{tpu_custom_call.1} parent=5 // pred_region
        %s209 = ssub.s32 %s17, 1
        %s210 = sand.u32 %s42, 1
        %s211 = scalar_lea.sflag [#allocation4], %s210
        %s212 = sand.u32 %s42, 1
        %s213 = smul.addr %s212, 8
        %s214 = scalar_lea.vmem [#allocation3], %s213
        // Predicated region
        $region37: #{tpu_custom_call.1} parent=35 // pred_check
          %p215 = pneg %p55
        $region38: #{tpu_custom_call.1} parent=35 // pred_check_branch
          %217 = sbr.rel (%p215) target = $region40
        $region39: #{tpu_custom_call.1} parent=35 // pred_region
          %219 = dma.done %s211, 128
        $region40: #{tpu_custom_call.1} parent=35 // pred_fallthru
          _
        // Predicated region
        $region41: #{tpu_custom_call.1} parent=35 // pred_check
          %p220 = pneg %p76
        $region42: #{tpu_custom_call.1} parent=35 // pred_check_branch
          %222 = sbr.rel (%p220) target = $region44
        $region43: #{tpu_custom_call.1} parent=35 // pred_region
          %224 = dma.done [#allocation7], 192
        $region44: #{tpu_custom_call.1} parent=35 // pred_fallthru
          _
        %s225 = sand.u32 %s42, 1
        %s226 = scalar_lea.sflag [#allocation4], %s225
        %s227 = sand.u32 %s42, 1
        %s228 = smul.addr %s227, 8
        %s229 = scalar_lea.vmem [#allocation3], %s228
        %p230 = pneg %p55
        %p231 = pneg %p52
        %p232 = pneg %p76
        %p233 = pneg %p73
        %p234 = pneg %p97
        %p235 = pneg %p94
        %p236 = pneg %p118
        %p237 = pneg %p115
        %p238 = pneg %p146
        %p239 = pneg %p143
        %s240 = sand.u32 %s133, 1
        %s241 = scalar_lea.sflag [#allocation5], %s240
        %s242 = sand.u32 %s133, 1
        %s243 = smul.addr %s242, 8
        %s244 = scalar_lea.vmem [#allocation8], %s243
        %s245 = smul.u32 2, %s27
        %p247 = scmp.eq.s32.totalorder %s27, 0
        // Predicated region
        $region45: #{tpu_custom_call.1} parent=35 // pred_check
          %p248 = pneg %p247
        $region46: #{tpu_custom_call.1} parent=35 // pred_check_branch
          %250 = sbr.rel (%p248) target = $region48
        $region47: #{tpu_custom_call.1} parent=35 // pred_region
          %v251 = vld [vmem:[%s214] sm:$0xff]
          %253 = vst [vmem:[#allocation1] ss:$2 sm:$0xff] %v251
          %v254 = vld.sshfl [vmem:[#allocation1] sm:$0xff pattern:$0x75316420]
          %v255 = vld.sshfl [vmem:[#allocation1 + $0x8] sm:$0xff pattern:$0x75316420]
          %v258 = vpack.c.bf16 %v254, %v254
          %v259 = vpack.c.bf16 %v255, %v255
          %v260 = vld [vmem:[#allocation6] sm:$0xff]
          %v261 = vld [vmem:[#allocation6 + $0x8] sm:$0xf]
          %v262 = vlaneseq
          %v263 = vand.u32 %v262, 127
          %v264 = vadd.s32 %v263, 128
          %v265 = vadd.s32 %v263, 256
          %vm266 = vcmp.lt.s32.totalorder %v263, 128
          %vm267 = vcmp.lt.s32.totalorder %v264, 128
          %vm268 = vcmp.lt.s32.totalorder %v265, 128
          %v269 = vmul.f32 %v260, 0.17677669
          %v270 = vmul.f32 %v261, 0.17677669
          %v271 = vsel %vm266, 1, 0
          %v272 = vsel %vm267, 1, 0
          %v273 = vsel %vm268, 1, 0
          %vm274 = vcmp.eq.s32.totalorder %v271, 1
          %vm275 = vcmp.eq.s32.totalorder %v272, 1
          %vm276 = vcmp.eq.s32.totalorder %v273, 1
          %279 = vst [vmem:[#allocation1] ss:$2 sm:$0xff] %v269
          %s280 = scalar_lea.vmem [#allocation1], 16
          %281 = vst [vmem:[%s280] ss:$2 sm:$0xff] %v270
          %v282 = vld.sshfl [vmem:[#allocation1] sm:$0xff pattern:$0x75316420]
          %v283 = vld.sshfl [vmem:[#allocation1 + $0x8] sm:$0xff pattern:$0x75316420]
          %v284 = vld.sshfl [vmem:[#allocation1 + $0x10] sm:$0xff pattern:$0x75316420]
          %290 = vst [vmem:[#allocation1] ss:$2 sm:$0xff] %v260
          %s291 = scalar_lea.vmem [#allocation1], 16
          %292 = vst [vmem:[%s291] ss:$2 sm:$0xff] %v261
          %v293 = vld.sshfl [vmem:[#allocation1] sm:$0xff pattern:$0x75316420]
          %v294 = vld.sshfl [vmem:[#allocation1 + $0x8] sm:$0xff pattern:$0x75316420]
          %v295 = vld.sshfl [vmem:[#allocation1 + $0x10] sm:$0xff pattern:$0x75316420]
          %v299 = vsel %vm274, %v282, %v293
          %v300 = vsel %vm275, %v283, %v294
          %v301 = vsel %vm276, %v284, %v295
          %v302 = vpack.c.bf16 %v299, %v299
          %v303 = vpack.c.bf16 %v300, %v300
          %v304 = vpack.c.bf16 %v301, %v301
          %305 = vxpose.binary.xlu0.c.b16.start [1/16] %v259, %v258, 128
          %306 = vxpose.binary.xlu0.c.b16.cont [2/16] 0, 0, 128
          %307 = vxpose.binary.xlu0.c.b16.cont [3/16] 0, 0, 128
          %308 = vxpose.binary.xlu0.c.b16.cont [4/16] 0, 0, 128
          %309 = vxpose.binary.xlu0.c.b16.cont [5/16] 0, 0, 128
          %310 = vxpose.binary.xlu0.c.b16.cont [6/16] 0, 0, 128
          %311 = vxpose.binary.xlu0.c.b16.cont [7/16] 0, 0, 128
          %312 = vxpose.binary.xlu0.c.b16.end [8/16] 0, 0, 128
          %v313 = vpop.trf.xlu0
          %v314 = vpop.trf.xlu0
          %v315 = vpop.trf.xlu0
          %v316 = vpop.trf.xlu0
          %v317 = vpop.trf.xlu0
          %v318 = vpop.trf.xlu0
          %v319 = vpop.trf.xlu0
          %v320 = vpop.trf.xlu0
          %v321 = vpop.trf.xlu0
          %v322 = vpop.trf.xlu0
          %v323 = vpop.trf.xlu0
          %v324 = vpop.trf.xlu0
          %v325 = vpop.trf.xlu0
          %v326 = vpop.trf.xlu0
          %v327 = vpop.trf.xlu0
          %v328 = vpop.trf.xlu0
          %vm329 = vcmask 31744
          %v331 = vsel %vm329, %v313, 0
          %v334 = vsel %vm329, %v315, 0
          %v337 = vsel %vm329, %v317, 0
          %v340 = vsel %vm329, %v319, 0
          %v343 = vsel %vm329, %v321, 0
          %v346 = vsel %vm329, %v323, 0
          %v349 = vsel %vm329, %v325, 0
          %v352 = vsel %vm329, %v327, 0
          %v355 = vsel %vm329, %v314, 0
          %v358 = vsel %vm329, %v316, 0
          %v361 = vsel %vm329, %v318, 0
          %v364 = vsel %vm329, %v320, 0
          %v367 = vsel %vm329, %v322, 0
          %v370 = vsel %vm329, %v324, 0
          %v373 = vsel %vm329, %v326, 0
          %v376 = vsel %vm329, %v328, 0
          %vm378 = vcmask 1041408
          %v380 = vsel %vm378, %v302, 0
          %v383 = vsel %vm378, %v303, 0
          %v386 = vsel %vm378, %v304, 0
          %388 = vmatpush.bf16.msra.mxu0 0
          %389 = vmatpush.bf16.msra.mxu0 0
          %390 = vmatpush.bf16.msra.mxu0 0
          %391 = vmatpush.bf16.msra.mxu0 0
          %392 = vmatpush.bf16.msra.mxu0 0
          %393 = vmatpush.bf16.msra.mxu0 0
          %394 = vmatpush.bf16.msra.mxu0 0
          %395 = vmatpush.bf16.msra.mxu0 %v380
          %396 = vmatmul.bf16.gmra.mxu0 %v331
          %v397 = vpop.f32.mrf.mxu0
          %v398 = vadd.f32 0.0, %v397
          %v399 = vpop.f32.mrf.mxu0
          %v400 = vadd.f32 0.0, %v399
          %401 = vmatmul.bf16.gmra.mxu0 %v334
          %v402 = vpop.f32.mrf.mxu0
          %v403 = vadd.f32 0.0, %v402
          %v404 = vpop.f32.mrf.mxu0
          %v405 = vadd.f32 0.0, %v404
          %406 = vmatmul.bf16.gmra.mxu0 %v337
          %v407 = vpop.f32.mrf.mxu0
          %v408 = vadd.f32 0.0, %v407
          %v409 = vpop.f32.mrf.mxu0
          %v410 = vadd.f32 0.0, %v409
          %411 = vmatmul.bf16.gmra.mxu0 %v340
          %v412 = vpop.f32.mrf.mxu0
          %v413 = vadd.f32 0.0, %v412
          %v414 = vpop.f32.mrf.mxu0
          %v415 = vadd.f32 0.0, %v414
          %416 = vmatmul.bf16.gmra.mxu0 %v343
          %v417 = vpop.f32.mrf.mxu0
          %v418 = vadd.f32 0.0, %v417
          %v419 = vpop.f32.mrf.mxu0
          %v420 = vadd.f32 0.0, %v419
          %421 = vmatmul.bf16.gmra.mxu0 %v346
          %v422 = vpop.f32.mrf.mxu0
          %v423 = vadd.f32 0.0, %v422
          %v424 = vpop.f32.mrf.mxu0
          %v425 = vadd.f32 0.0, %v424
          %426 = vmatmul.bf16.gmra.mxu0 %v349
          %v427 = vpop.f32.mrf.mxu0
          %v428 = vadd.f32 0.0, %v427
          %v429 = vpop.f32.mrf.mxu0
          %v430 = vadd.f32 0.0, %v429
          %431 = vmatmul.bf16.gmra.mxu0 %v352
          %v432 = vpop.f32.mrf.mxu0
          %v433 = vadd.f32 0.0, %v432
          %v434 = vpop.f32.mrf.mxu0
          %v435 = vadd.f32 0.0, %v434
          %436 = vmatmul.bf16.gmra.mxu0 %v355
          %v437 = vpop.f32.mrf.mxu0
          %v438 = vadd.f32 0.0, %v437
          %v439 = vpop.f32.mrf.mxu0
          %v440 = vadd.f32 0.0, %v439
          %441 = vmatmul.bf16.gmra.mxu0 %v358
          %v442 = vpop.f32.mrf.mxu0
          %v443 = vadd.f32 0.0, %v442
          %v444 = vpop.f32.mrf.mxu0
          %v445 = vadd.f32 0.0, %v444
          %446 = vmatmul.bf16.gmra.mxu0 %v361
          %v447 = vpop.f32.mrf.mxu0
          %v448 = vadd.f32 0.0, %v447
          %v449 = vpop.f32.mrf.mxu0
          %v450 = vadd.f32 0.0, %v449
          %451 = vmatmul.bf16.gmra.mxu0 %v364
          %v452 = vpop.f32.mrf.mxu0
          %v453 = vadd.f32 0.0, %v452
          %v454 = vpop.f32.mrf.mxu0
          %v455 = vadd.f32 0.0, %v454
          %456 = vmatmul.bf16.gmra.mxu0 %v367
          %v457 = vpop.f32.mrf.mxu0
          %v458 = vadd.f32 0.0, %v457
          %v459 = vpop.f32.mrf.mxu0
          %v460 = vadd.f32 0.0, %v459
          %461 = vmatmul.bf16.gmra.mxu0 %v370
          %v462 = vpop.f32.mrf.mxu0
          %v463 = vadd.f32 0.0, %v462
          %v464 = vpop.f32.mrf.mxu0
          %v465 = vadd.f32 0.0, %v464
          %466 = vmatmul.bf16.gmra.mxu0 %v373
          %v467 = vpop.f32.mrf.mxu0
          %v468 = vadd.f32 0.0, %v467
          %v469 = vpop.f32.mrf.mxu0
          %v470 = vadd.f32 0.0, %v469
          %471 = vmatmul.bf16.gmra.mxu0 %v376
          %v472 = vpop.f32.mrf.mxu0
          %v473 = vadd.f32 0.0, %v472
          %v474 = vpop.f32.mrf.mxu0
          %v475 = vadd.f32 0.0, %v474
          %476 = vdwg.mxu0
          %477 = vmatpush.bf16.msra.mxu0 0
          %478 = vmatpush.bf16.msra.mxu0 0
          %479 = vmatpush.bf16.msra.mxu0 0
          %480 = vmatpush.bf16.msra.mxu0 0
          %481 = vmatpush.bf16.msra.mxu0 0
          %482 = vmatpush.bf16.msra.mxu0 0
          %483 = vmatpush.bf16.msra.mxu0 0
          %484 = vmatpush.bf16.msra.mxu0 %v383
          %485 = vmatmul.bf16.gmra.mxu0 %v331
          %v486 = vpop.f32.mrf.mxu0
          %v487 = vadd.f32 0.0, %v486
          %v488 = vpop.f32.mrf.mxu0
          %v489 = vadd.f32 0.0, %v488
          %490 = vmatmul.bf16.gmra.mxu0 %v334
          %v491 = vpop.f32.mrf.mxu0
          %v492 = vadd.f32 0.0, %v491
          %v493 = vpop.f32.mrf.mxu0
          %v494 = vadd.f32 0.0, %v493
          %495 = vmatmul.bf16.gmra.mxu0 %v337
          %v496 = vpop.f32.mrf.mxu0
          %v497 = vadd.f32 0.0, %v496
          %v498 = vpop.f32.mrf.mxu0
          %v499 = vadd.f32 0.0, %v498
          %500 = vmatmul.bf16.gmra.mxu0 %v340
          %v501 = vpop.f32.mrf.mxu0
          %v502 = vadd.f32 0.0, %v501
          %v503 = vpop.f32.mrf.mxu0
          %v504 = vadd.f32 0.0, %v503
          %505 = vmatmul.bf16.gmra.mxu0 %v343
          %v506 = vpop.f32.mrf.mxu0
          %v507 = vadd.f32 0.0, %v506
          %v508 = vpop.f32.mrf.mxu0
          %v509 = vadd.f32 0.0, %v508
          %510 = vmatmul.bf16.gmra.mxu0 %v346
          %v511 = vpop.f32.mrf.mxu0
          %v512 = vadd.f32 0.0, %v511
          %v513 = vpop.f32.mrf.mxu0
          %v514 = vadd.f32 0.0, %v513
          %515 = vmatmul.bf16.gmra.mxu0 %v349
          %v516 = vpop.f32.mrf.mxu0
          %v517 = vadd.f32 0.0, %v516
          %v518 = vpop.f32.mrf.mxu0
          %v519 = vadd.f32 0.0, %v518
          %520 = vmatmul.bf16.gmra.mxu0 %v352
          %v521 = vpop.f32.mrf.mxu0
          %v522 = vadd.f32 0.0, %v521
          %v523 = vpop.f32.mrf.mxu0
          %v524 = vadd.f32 0.0, %v523
          %525 = vmatmul.bf16.gmra.mxu0 %v355
          %v526 = vpop.f32.mrf.mxu0
          %v527 = vadd.f32 0.0, %v526
          %v528 = vpop.f32.mrf.mxu0
          %v529 = vadd.f32 0.0, %v528
          %530 = vmatmul.bf16.gmra.mxu0 %v358
          %v531 = vpop.f32.mrf.mxu0
          %v532 = vadd.f32 0.0, %v531
          %v533 = vpop.f32.mrf.mxu0
          %v534 = vadd.f32 0.0, %v533
          %535 = vmatmul.bf16.gmra.mxu0 %v361
          %v536 = vpop.f32.mrf.mxu0
          %v537 = vadd.f32 0.0, %v536
          %v538 = vpop.f32.mrf.mxu0
          %v539 = vadd.f32 0.0, %v538
          %540 = vmatmul.bf16.gmra.mxu0 %v364
          %v541 = vpop.f32.mrf.mxu0
          %v542 = vadd.f32 0.0, %v541
          %v543 = vpop.f32.mrf.mxu0
          %v544 = vadd.f32 0.0, %v543
          %545 = vmatmul.bf16.gmra.mxu0 %v367
          %v546 = vpop.f32.mrf.mxu0
          %v547 = vadd.f32 0.0, %v546
          %v548 = vpop.f32.mrf.mxu0
          %v549 = vadd.f32 0.0, %v548
          %550 = vmatmul.bf16.gmra.mxu0 %v370
          %v551 = vpop.f32.mrf.mxu0
          %v552 = vadd.f32 0.0, %v551
          %v553 = vpop.f32.mrf.mxu0
          %v554 = vadd.f32 0.0, %v553
          %555 = vmatmul.bf16.gmra.mxu0 %v373
          %v556 = vpop.f32.mrf.mxu0
          %v557 = vadd.f32 0.0, %v556
          %v558 = vpop.f32.mrf.mxu0
          %v559 = vadd.f32 0.0, %v558
          %560 = vmatmul.bf16.gmra.mxu0 %v376
          %v561 = vpop.f32.mrf.mxu0
          %v562 = vadd.f32 0.0, %v561
          %v563 = vpop.f32.mrf.mxu0
          %v564 = vadd.f32 0.0, %v563
          %565 = vdwg.mxu0
          %566 = vmatpush.bf16.msra.mxu0 0
          %567 = vmatpush.bf16.msra.mxu0 0
          %568 = vmatpush.bf16.msra.mxu0 0
          %569 = vmatpush.bf16.msra.mxu0 0
          %570 = vmatpush.bf16.msra.mxu0 0
          %571 = vmatpush.bf16.msra.mxu0 0
          %572 = vmatpush.bf16.msra.mxu0 0
          %573 = vmatpush.bf16.msra.mxu0 %v386
          %574 = vmatmul.bf16.gmra.mxu0 %v331
          %v575 = vpop.f32.mrf.mxu0
          %v576 = vadd.f32 0.0, %v575
          %v577 = vpop.f32.mrf.mxu0
          %v578 = vadd.f32 0.0, %v577
          %579 = vmatmul.bf16.gmra.mxu0 %v334
          %v580 = vpop.f32.mrf.mxu0
          %v581 = vadd.f32 0.0, %v580
          %v582 = vpop.f32.mrf.mxu0
          %v583 = vadd.f32 0.0, %v582
          %584 = vmatmul.bf16.gmra.mxu0 %v337
          %v585 = vpop.f32.mrf.mxu0
          %v586 = vadd.f32 0.0, %v585
          %v587 = vpop.f32.mrf.mxu0
          %v588 = vadd.f32 0.0, %v587
          %589 = vmatmul.bf16.gmra.mxu0 %v340
          %v590 = vpop.f32.mrf.mxu0
          %v591 = vadd.f32 0.0, %v590
          %v592 = vpop.f32.mrf.mxu0
          %v593 = vadd.f32 0.0, %v592
          %594 = vmatmul.bf16.gmra.mxu0 %v343
          %v595 = vpop.f32.mrf.mxu0
          %v596 = vadd.f32 0.0, %v595
          %v597 = vpop.f32.mrf.mxu0
          %v598 = vadd.f32 0.0, %v597
          %599 = vmatmul.bf16.gmra.mxu0 %v346
          %v600 = vpop.f32.mrf.mxu0
          %v601 = vadd.f32 0.0, %v600
          %v602 = vpop.f32.mrf.mxu0
          %v603 = vadd.f32 0.0, %v602
          %604 = vmatmul.bf16.gmra.mxu0 %v349
          %v605 = vpop.f32.mrf.mxu0
          %v606 = vadd.f32 0.0, %v605
          %v607 = vpop.f32.mrf.mxu0
          %v608 = vadd.f32 0.0, %v607
          %609 = vmatmul.bf16.gmra.mxu0 %v352
          %v610 = vpop.f32.mrf.mxu0
          %v611 = vadd.f32 0.0, %v610
          %v612 = vpop.f32.mrf.mxu0
          %v613 = vadd.f32 0.0, %v612
          %614 = vmatmul.bf16.gmra.mxu0 %v355
          %v615 = vpop.f32.mrf.mxu0
          %v616 = vadd.f32 0.0, %v615
          %v617 = vpop.f32.mrf.mxu0
          %v618 = vadd.f32 0.0, %v617
          %619 = vmatmul.bf16.gmra.mxu0 %v358
          %v620 = vpop.f32.mrf.mxu0
          %v621 = vadd.f32 0.0, %v620
          %v622 = vpop.f32.mrf.mxu0
          %v623 = vadd.f32 0.0, %v622
          %624 = vmatmul.bf16.gmra.mxu0 %v361
          %v625 = vpop.f32.mrf.mxu0
          %v626 = vadd.f32 0.0, %v625
          %v627 = vpop.f32.mrf.mxu0
          %v628 = vadd.f32 0.0, %v627
          %629 = vmatmul.bf16.gmra.mxu0 %v364
          %v630 = vpop.f32.mrf.mxu0
          %v631 = vadd.f32 0.0, %v630
          %v632 = vpop.f32.mrf.mxu0
          %v633 = vadd.f32 0.0, %v632
          %634 = vmatmul.bf16.gmra.mxu0 %v367
          %v635 = vpop.f32.mrf.mxu0
          %v636 = vadd.f32 0.0, %v635
          %v637 = vpop.f32.mrf.mxu0
          %v638 = vadd.f32 0.0, %v637
          %639 = vmatmul.bf16.gmra.mxu0 %v370
          %v640 = vpop.f32.mrf.mxu0
          %v641 = vadd.f32 0.0, %v640
          %v642 = vpop.f32.mrf.mxu0
          %v643 = vadd.f32 0.0, %v642
          %644 = vmatmul.bf16.gmra.mxu0 %v373
          %v645 = vpop.f32.mrf.mxu0
          %v646 = vadd.f32 0.0, %v645
          %v647 = vpop.f32.mrf.mxu0
          %v648 = vadd.f32 0.0, %v647
          %649 = vmatmul.bf16.gmra.mxu0 %v376
          %v650 = vpop.f32.mrf.mxu0
          %v651 = vadd.f32 0.0, %v650
          %v652 = vpop.f32.mrf.mxu0
          %v653 = vadd.f32 0.0, %v652
          %654 = vdwg.mxu0
          %v655 = vpack.c.bf16 %v487, %v398
          %v656 = vpack.c.bf16 %v576, %v576
          %v657 = vpack.c.bf16 %v489, %v400
          %v658 = vpack.c.bf16 %v578, %v578
          %v659 = vpack.c.bf16 %v492, %v403
          %v660 = vpack.c.bf16 %v581, %v581
          %v661 = vpack.c.bf16 %v494, %v405
          %v662 = vpack.c.bf16 %v583, %v583
          %v663 = vpack.c.bf16 %v497, %v408
          %v664 = vpack.c.bf16 %v586, %v586
          %v665 = vpack.c.bf16 %v499, %v410
          %v666 = vpack.c.bf16 %v588, %v588
          %v667 = vpack.c.bf16 %v502, %v413
          %v668 = vpack.c.bf16 %v591, %v591
          %v669 = vpack.c.bf16 %v504, %v415
          %v670 = vpack.c.bf16 %v593, %v593
          %v671 = vpack.c.bf16 %v507, %v418
          %v672 = vpack.c.bf16 %v596, %v596
          %v673 = vpack.c.bf16 %v509, %v420
          %v674 = vpack.c.bf16 %v598, %v598
          %v675 = vpack.c.bf16 %v512, %v423
          %v676 = vpack.c.bf16 %v601, %v601
          %v677 = vpack.c.bf16 %v514, %v425
          %v678 = vpack.c.bf16 %v603, %v603
          %v679 = vpack.c.bf16 %v517, %v428
          %v680 = vpack.c.bf16 %v606, %v606
          %v681 = vpack.c.bf16 %v519, %v430
          %v682 = vpack.c.bf16 %v608, %v608
          %v683 = vpack.c.bf16 %v522, %v433
          %v684 = vpack.c.bf16 %v611, %v611
          %v685 = vpack.c.bf16 %v524, %v435
          %v686 = vpack.c.bf16 %v613, %v613
          %v687 = vpack.c.bf16 %v527, %v438
          %v688 = vpack.c.bf16 %v616, %v616
          %v689 = vpack.c.bf16 %v529, %v440
          %v690 = vpack.c.bf16 %v618, %v618
          %v691 = vpack.c.bf16 %v532, %v443
          %v692 = vpack.c.bf16 %v621, %v621
          %v693 = vpack.c.bf16 %v534, %v445
          %v694 = vpack.c.bf16 %v623, %v623
          %v695 = vpack.c.bf16 %v537, %v448
          %v696 = vpack.c.bf16 %v626, %v626
          %v697 = vpack.c.bf16 %v539, %v450
          %v698 = vpack.c.bf16 %v628, %v628
          %v699 = vpack.c.bf16 %v542, %v453
          %v700 = vpack.c.bf16 %v631, %v631
          %v701 = vpack.c.bf16 %v544, %v455
          %v702 = vpack.c.bf16 %v633, %v633
          %v703 = vpack.c.bf16 %v547, %v458
          %v704 = vpack.c.bf16 %v636, %v636
          %v705 = vpack.c.bf16 %v549, %v460
          %v706 = vpack.c.bf16 %v638, %v638
          %v707 = vpack.c.bf16 %v552, %v463
          %v708 = vpack.c.bf16 %v641, %v641
          %v709 = vpack.c.bf16 %v554, %v465
          %v710 = vpack.c.bf16 %v643, %v643
          %v711 = vpack.c.bf16 %v557, %v468
          %v712 = vpack.c.bf16 %v646, %v646
          %v713 = vpack.c.bf16 %v559, %v470
          %v714 = vpack.c.bf16 %v648, %v648
          %v715 = vpack.c.bf16 %v562, %v473
          %v716 = vpack.c.bf16 %v651, %v651
          %v717 = vpack.c.bf16 %v564, %v475
          %v718 = vpack.c.bf16 %v653, %v653
          %719 = vst [vmem:[#allocation2] sm:$0xff] %v655
          %720 = vst [vmem:[#allocation2 + $0x8] sm:$0xf] %v656
          %721 = vst [vmem:[#allocation2 + $0xc] sm:$0xff] %v657
          %722 = vst [vmem:[#allocation2 + $0x14] sm:$0xf] %v658
          %723 = vst [vmem:[#allocation2 + $0x18] sm:$0xff] %v659
          %724 = vst [vmem:[#allocation2 + $0x20] sm:$0xf] %v660
          %725 = vst [vmem:[#allocation2 + $0x24] sm:$0xff] %v661
          %726 = vst [vmem:[#allocation2 + $0x2c] sm:$0xf] %v662
          %727 = vst [vmem:[#allocation2 + $0x30] sm:$0xff] %v663
          %728 = vst [vmem:[#allocation2 + $0x38] sm:$0xf] %v664
          %729 = vst [vmem:[#allocation2 + $0x3c] sm:$0xff] %v665
          %730 = vst [vmem:[#allocation2 + $0x44] sm:$0xf] %v666
          %731 = vst [vmem:[#allocation2 + $0x48] sm:$0xff] %v667
          %732 = vst [vmem:[#allocation2 + $0x50] sm:$0xf] %v668
          %733 = vst [vmem:[#allocation2 + $0x54] sm:$0xff] %v669
          %734 = vst [vmem:[#allocation2 + $0x5c] sm:$0xf] %v670
          %735 = vst [vmem:[#allocation2 + $0x60] sm:$0xff] %v671
          %736 = vst [vmem:[#allocation2 + $0x68] sm:$0xf] %v672
          %737 = vst [vmem:[#allocation2 + $0x6c] sm:$0xff] %v673
          %738 = vst [vmem:[#allocation2 + $0x74] sm:$0xf] %v674
          %739 = vst [vmem:[#allocation2 + $0x78] sm:$0xff] %v675
          %740 = vst [vmem:[#allocation2 + $0x80] sm:$0xf] %v676
          %741 = vst [vmem:[#allocation2 + $0x84] sm:$0xff] %v677
          %742 = vst [vmem:[#allocation2 + $0x8c] sm:$0xf] %v678
          %743 = vst [vmem:[#allocation2 + $0x90] sm:$0xff] %v679
          %744 = vst [vmem:[#allocation2 + $0x98] sm:$0xf] %v680
          %745 = vst [vmem:[#allocation2 + $0x9c] sm:$0xff] %v681
          %746 = vst [vmem:[#allocation2 + $0xa4] sm:$0xf] %v682
          %747 = vst [vmem:[#allocation2 + $0xa8] sm:$0xff] %v683
          %748 = vst [vmem:[#allocation2 + $0xb0] sm:$0xf] %v684
          %749 = vst [vmem:[#allocation2 + $0xb4] sm:$0xff] %v685
          %750 = vst [vmem:[#allocation2 + $0xbc] sm:$0xf] %v686
          %751 = vst [vmem:[#allocation2 + $0xc0] sm:$0xff] %v687
          %752 = vst [vmem:[#allocation2 + $0xc8] sm:$0xf] %v688
          %753 = vst [vmem:[#allocation2 + $0xcc] sm:$0xff] %v689
          %754 = vst [vmem:[#allocation2 + $0xd4] sm:$0xf] %v690
          %755 = vst [vmem:[#allocation2 + $0xd8] sm:$0xff] %v691
          %756 = vst [vmem:[#allocation2 + $0xe0] sm:$0xf] %v692
          %757 = vst [vmem:[#allocation2 + $0xe4] sm:$0xff] %v693
          %758 = vst [vmem:[#allocation2 + $0xec] sm:$0xf] %v694
          %759 = vst [vmem:[#allocation2 + $0xf0] sm:$0xff] %v695
          %760 = vst [vmem:[#allocation2 + $0xf8] sm:$0xf] %v696
          %761 = vst [vmem:[#allocation2 + $0xfc] sm:$0xff] %v697
          %762 = vst [vmem:[#allocation2 + $0x104] sm:$0xf] %v698
          %763 = vst [vmem:[#allocation2 + $0x108] sm:$0xff] %v699
          %764 = vst [vmem:[#allocation2 + $0x110] sm:$0xf] %v700
          %765 = vst [vmem:[#allocation2 + $0x114] sm:$0xff] %v701
          %766 = vst [vmem:[#allocation2 + $0x11c] sm:$0xf] %v702
          %767 = vst [vmem:[#allocation2 + $0x120] sm:$0xff] %v703
          %768 = vst [vmem:[#allocation2 + $0x128] sm:$0xf] %v704
          %769 = vst [vmem:[#allocation2 + $0x12c] sm:$0xff] %v705
          %770 = vst [vmem:[#allocation2 + $0x134] sm:$0xf] %v706
          %771 = vst [vmem:[#allocation2 + $0x138] sm:$0xff] %v707
          %772 = vst [vmem:[#allocation2 + $0x140] sm:$0xf] %v708
          %773 = vst [vmem:[#allocation2 + $0x144] sm:$0xff] %v709
          %774 = vst [vmem:[#allocation2 + $0x14c] sm:$0xf] %v710
          %775 = vst [vmem:[#allocation2 + $0x150] sm:$0xff] %v711
          %776 = vst [vmem:[#allocation2 + $0x158] sm:$0xf] %v712
          %777 = vst [vmem:[#allocation2 + $0x15c] sm:$0xff] %v713
          %778 = vst [vmem:[#allocation2 + $0x164] sm:$0xf] %v714
          %779 = vst [vmem:[#allocation2 + $0x168] sm:$0xff] %v715
          %780 = vst [vmem:[#allocation2 + $0x170] sm:$0xf] %v716
          %781 = vst [vmem:[#allocation2 + $0x174] sm:$0xff] %v717
          %782 = vst [vmem:[#allocation2 + $0x17c] sm:$0xf] %v718
        $region48: #{tpu_custom_call.1} parent=35 // pred_fallthru
          _
        %s783 = smul.u32 %s27, 256
        %s784 = sshra.s32 %s783, 3
        %s785 = sand.u32 %s783, 7
        %s786 = smul.u32 %s784, 3
        %s787 = smul.addr %s786, 4
        %s788 = scalar_lea.vmem [#allocation2], %s787
        %v789 = vld [vmem:[%s788] sm:$0xf]
        %v790 = vld [vmem:[%s788 + $0xc] sm:$0xf]
        %v791 = vld [vmem:[%s788 + $0x18] sm:$0xf]
        %v792 = vld [vmem:[%s788 + $0x24] sm:$0xf]
        %v793 = vld [vmem:[%s788 + $0x30] sm:$0xf]
        %v794 = vld [vmem:[%s788 + $0x3c] sm:$0xf]
        %v795 = vld [vmem:[%s788 + $0x48] sm:$0xf]
        %v796 = vld [vmem:[%s788 + $0x54] sm:$0xf]
        %v797 = vld [vmem:[%s788 + $0x60] sm:$0xf]
        %v798 = vld [vmem:[%s788 + $0x6c] sm:$0xf]
        %v799 = vld [vmem:[%s788 + $0x78] sm:$0xf]
        %v800 = vld [vmem:[%s788 + $0x84] sm:$0xf]
        %v801 = vld [vmem:[%s788 + $0x90] sm:$0xf]
        %v802 = vld [vmem:[%s788 + $0x9c] sm:$0xf]
        %v803 = vld [vmem:[%s788 + $0xa8] sm:$0xf]
        %v804 = vld [vmem:[%s788 + $0xb4] sm:$0xf]
        %v805 = vld [vmem:[%s788 + $0xc0] sm:$0xf]
        %v806 = vld [vmem:[%s788 + $0xcc] sm:$0xf]
        %v807 = vld [vmem:[%s788 + $0xd8] sm:$0xf]
        %v808 = vld [vmem:[%s788 + $0xe4] sm:$0xf]
        %v809 = vld [vmem:[%s788 + $0xf0] sm:$0xf]
        %v810 = vld [vmem:[%s788 + $0xfc] sm:$0xf]
        %v811 = vld [vmem:[%s788 + $0x108] sm:$0xf]
        %v812 = vld [vmem:[%s788 + $0x114] sm:$0xf]
        %v813 = vld [vmem:[%s788 + $0x120] sm:$0xf]
        %v814 = vld [vmem:[%s788 + $0x12c] sm:$0xf]
        %v815 = vld [vmem:[%s788 + $0x138] sm:$0xf]
        %v816 = vld [vmem:[%s788 + $0x144] sm:$0xf]
        %v817 = vld [vmem:[%s788 + $0x150] sm:$0xf]
        %v818 = vld [vmem:[%s788 + $0x15c] sm:$0xf]
        %v819 = vld [vmem:[%s788 + $0x168] sm:$0xf]
        %v820 = vld [vmem:[%s788 + $0x174] sm:$0xf]
        %v821 = vld [vmem:[#allocation2 + $0x4] sm:$0xf]
        %v822 = vld [vmem:[#allocation2 + $0x10] sm:$0xf]
        %v823 = vld [vmem:[#allocation2 + $0x1c] sm:$0xf]
        %v824 = vld [vmem:[#allocation2 + $0x28] sm:$0xf]
        %v825 = vld [vmem:[#allocation2 + $0x34] sm:$0xf]
        %v826 = vld [vmem:[#allocation2 + $0x40] sm:$0xf]
        %v827 = vld [vmem:[#allocation2 + $0x4c] sm:$0xf]
        %v828 = vld [vmem:[#allocation2 + $0x58] sm:$0xf]
        %v829 = vld [vmem:[#allocation2 + $0x64] sm:$0xf]
        %v830 = vld [vmem:[#allocation2 + $0x70] sm:$0xf]
        %v831 = vld [vmem:[#allocation2 + $0x7c] sm:$0xf]
        %v832 = vld [vmem:[#allocation2 + $0x88] sm:$0xf]
        %v833 = vld [vmem:[#allocation2 + $0x94] sm:$0xf]
        %v834 = vld [vmem:[#allocation2 + $0xa0] sm:$0xf]
        %v835 = vld [vmem:[#allocation2 + $0xac] sm:$0xf]
        %v836 = vld [vmem:[#allocation2 + $0xb8] sm:$0xf]
        %v837 = vld [vmem:[#allocation2 + $0xc4] sm:$0xf]
        %v838 = vld [vmem:[#allocation2 + $0xd0] sm:$0xf]
        %v839 = vld [vmem:[#allocation2 + $0xdc] sm:$0xf]
        %v840 = vld [vmem:[#allocation2 + $0xe8] sm:$0xf]
        %v841 = vld [vmem:[#allocation2 + $0xf4] sm:$0xf]
        %v842 = vld [vmem:[#allocation2 + $0x100] sm:$0xf]
        %v843 = vld [vmem:[#allocation2 + $0x10c] sm:$0xf]
        %v844 = vld [vmem:[#allocation2 + $0x118] sm:$0xf]
        %v845 = vld [vmem:[#allocation2 + $0x124] sm:$0xf]
        %v846 = vld [vmem:[#allocation2 + $0x130] sm:$0xf]
        %v847 = vld [vmem:[#allocation2 + $0x13c] sm:$0xf]
        %v848 = vld [vmem:[#allocation2 + $0x148] sm:$0xf]
        %v849 = vld [vmem:[#allocation2 + $0x154] sm:$0xf]
        %v850 = vld [vmem:[#allocation2 + $0x160] sm:$0xf]
        %v851 = vld [vmem:[#allocation2 + $0x16c] sm:$0xf]
        %v852 = vld [vmem:[#allocation2 + $0x178] sm:$0xf]
        %v853 = vld [vmem:[#allocation2 + $0x8] sm:$0xf]
        %v854 = vld [vmem:[#allocation2 + $0x14] sm:$0xf]
        %v855 = vld [vmem:[#allocation2 + $0x20] sm:$0xf]
        %v856 = vld [vmem:[#allocation2 + $0x2c] sm:$0xf]
        %v857 = vld [vmem:[#allocation2 + $0x38] sm:$0xf]
        %v858 = vld [vmem:[#allocation2 + $0x44] sm:$0xf]
        %v859 = vld [vmem:[#allocation2 + $0x50] sm:$0xf]
        %v860 = vld [vmem:[#allocation2 + $0x5c] sm:$0xf]
        %v861 = vld [vmem:[#allocation2 + $0x68] sm:$0xf]
        %v862 = vld [vmem:[#allocation2 + $0x74] sm:$0xf]
        %v863 = vld [vmem:[#allocation2 + $0x80] sm:$0xf]
        %v864 = vld [vmem:[#allocation2 + $0x8c] sm:$0xf]
        %v865 = vld [vmem:[#allocation2 + $0x98] sm:$0xf]
        %v866 = vld [vmem:[#allocation2 + $0xa4] sm:$0xf]
        %v867 = vld [vmem:[#allocation2 + $0xb0] sm:$0xf]
        %v868 = vld [vmem:[#allocation2 + $0xbc] sm:$0xf]
        %v869 = vld [vmem:[#allocation2 + $0xc8] sm:$0xf]
        %v870 = vld [vmem:[#allocation2 + $0xd4] sm:$0xf]
        %v871 = vld [vmem:[#allocation2 + $0xe0] sm:$0xf]
        %v872 = vld [vmem:[#allocation2 + $0xec] sm:$0xf]
        %v873 = vld [vmem:[#allocation2 + $0xf8] sm:$0xf]
        %v874 = vld [vmem:[#allocation2 + $0x104] sm:$0xf]
        %v875 = vld [vmem:[#allocation2 + $0x110] sm:$0xf]
        %v876 = vld [vmem:[#allocation2 + $0x11c] sm:$0xf]
        %v877 = vld [vmem:[#allocation2 + $0x128] sm:$0xf]
        %v878 = vld [vmem:[#allocation2 + $0x134] sm:$0xf]
        %v879 = vld [vmem:[#allocation2 + $0x140] sm:$0xf]
        %v880 = vld [vmem:[#allocation2 + $0x14c] sm:$0xf]
        %v881 = vld [vmem:[#allocation2 + $0x158] sm:$0xf]
        %v882 = vld [vmem:[#allocation2 + $0x164] sm:$0xf]
        %v883 = vld [vmem:[#allocation2 + $0x170] sm:$0xf]
        %v884 = vld [vmem:[#allocation2 + $0x17c] sm:$0xf]
        %v917 = vunpack.c.l.b16 %v789
        %v918 = vunpack.c.l.b16 %v790
        %v919 = vunpack.c.l.b16 %v791
        %v920 = vunpack.c.l.b16 %v792
        %v921 = vunpack.c.l.b16 %v793
        %v922 = vunpack.c.l.b16 %v794
        %v923 = vunpack.c.l.b16 %v795
        %v924 = vunpack.c.l.b16 %v796
        %v925 = vunpack.c.l.b16 %v797
        %v926 = vunpack.c.l.b16 %v798
        %v927 = vunpack.c.l.b16 %v799
        %v928 = vunpack.c.l.b16 %v800
        %v929 = vunpack.c.l.b16 %v801
        %v930 = vunpack.c.l.b16 %v802
        %v931 = vunpack.c.l.b16 %v803
        %v932 = vunpack.c.l.b16 %v804
        %v933 = vunpack.c.l.b16 %v805
        %v934 = vunpack.c.l.b16 %v806
        %v935 = vunpack.c.l.b16 %v807
        %v936 = vunpack.c.l.b16 %v808
        %v937 = vunpack.c.l.b16 %v809
        %v938 = vunpack.c.l.b16 %v810
        %v939 = vunpack.c.l.b16 %v811
        %v940 = vunpack.c.l.b16 %v812
        %v941 = vunpack.c.l.b16 %v813
        %v942 = vunpack.c.l.b16 %v814
        %v943 = vunpack.c.l.b16 %v815
        %v944 = vunpack.c.l.b16 %v816
        %v945 = vunpack.c.l.b16 %v817
        %v946 = vunpack.c.l.b16 %v818
        %v947 = vunpack.c.l.b16 %v819
        %v948 = vunpack.c.l.b16 %v820
        %v949 = vpack.c.b16 %v918, %v917
        %v950 = vpack.c.b16 %v920, %v919
        %v951 = vpack.c.b16 %v922, %v921
        %v952 = vpack.c.b16 %v924, %v923
        %v953 = vpack.c.b16 %v926, %v925
        %v954 = vpack.c.b16 %v928, %v927
        %v955 = vpack.c.b16 %v930, %v929
        %v956 = vpack.c.b16 %v932, %v931
        %v957 = vpack.c.b16 %v934, %v933
        %v958 = vpack.c.b16 %v936, %v935
        %v959 = vpack.c.b16 %v938, %v937
        %v960 = vpack.c.b16 %v940, %v939
        %v961 = vpack.c.b16 %v942, %v941
        %v962 = vpack.c.b16 %v944, %v943
        %v963 = vpack.c.b16 %v946, %v945
        %v964 = vpack.c.b16 %v948, %v947
        %v997 = vunpack.c.l.b16 %v821
        %v998 = vunpack.c.l.b16 %v822
        %v999 = vunpack.c.l.b16 %v823
        %v1000 = vunpack.c.l.b16 %v824
        %v1001 = vunpack.c.l.b16 %v825
        %v1002 = vunpack.c.l.b16 %v826
        %v1003 = vunpack.c.l.b16 %v827
        %v1004 = vunpack.c.l.b16 %v828
        %v1005 = vunpack.c.l.b16 %v829
        %v1006 = vunpack.c.l.b16 %v830
        %v1007 = vunpack.c.l.b16 %v831
        %v1008 = vunpack.c.l.b16 %v832
        %v1009 = vunpack.c.l.b16 %v833
        %v1010 = vunpack.c.l.b16 %v834
        %v1011 = vunpack.c.l.b16 %v835
        %v1012 = vunpack.c.l.b16 %v836
        %v1013 = vunpack.c.l.b16 %v837
        %v1014 = vunpack.c.l.b16 %v838
        %v1015 = vunpack.c.l.b16 %v839
        %v1016 = vunpack.c.l.b16 %v840
        %v1017 = vunpack.c.l.b16 %v841
        %v1018 = vunpack.c.l.b16 %v842
        %v1019 = vunpack.c.l.b16 %v843
        %v1020 = vunpack.c.l.b16 %v844
        %v1021 = vunpack.c.l.b16 %v845
        %v1022 = vunpack.c.l.b16 %v846
        %v1023 = vunpack.c.l.b16 %v847
        %v1024 = vunpack.c.l.b16 %v848
        %v1025 = vunpack.c.l.b16 %v849
        %v1026 = vunpack.c.l.b16 %v850
        %v1027 = vunpack.c.l.b16 %v851
        %v1028 = vunpack.c.l.b16 %v852
        %v1029 = vpack.c.b16 %v998, %v997
        %v1030 = vpack.c.b16 %v1000, %v999
        %v1031 = vpack.c.b16 %v1002, %v1001
        %v1032 = vpack.c.b16 %v1004, %v1003
        %v1033 = vpack.c.b16 %v1006, %v1005
        %v1034 = vpack.c.b16 %v1008, %v1007
        %v1035 = vpack.c.b16 %v1010, %v1009
        %v1036 = vpack.c.b16 %v1012, %v1011
        %v1037 = vpack.c.b16 %v1014, %v1013
        %v1038 = vpack.c.b16 %v1016, %v1015
        %v1039 = vpack.c.b16 %v1018, %v1017
        %v1040 = vpack.c.b16 %v1020, %v1019
        %v1041 = vpack.c.b16 %v1022, %v1021
        %v1042 = vpack.c.b16 %v1024, %v1023
        %v1043 = vpack.c.b16 %v1026, %v1025
        %v1044 = vpack.c.b16 %v1028, %v1027
        %vm1045 = vcmask 261120
        %v1047 = vsel %vm1045, %v949, 0
        %v1050 = vsel %vm1045, %v950, 0
        %v1053 = vsel %vm1045, %v951, 0
        %v1056 = vsel %vm1045, %v952, 0
        %v1059 = vsel %vm1045, %v953, 0
        %v1062 = vsel %vm1045, %v954, 0
        %v1065 = vsel %vm1045, %v955, 0
        %v1068 = vsel %vm1045, %v956, 0
        %v1071 = vsel %vm1045, %v957, 0
        %v1074 = vsel %vm1045, %v958, 0
        %v1077 = vsel %vm1045, %v959, 0
        %v1080 = vsel %vm1045, %v960, 0
        %v1083 = vsel %vm1045, %v961, 0
        %v1086 = vsel %vm1045, %v962, 0
        %v1089 = vsel %vm1045, %v963, 0
        %v1092 = vsel %vm1045, %v964, 0
        %v1095 = vsel %vm1045, %v1029, 0
        %v1098 = vsel %vm1045, %v1030, 0
        %v1101 = vsel %vm1045, %v1031, 0
        %v1104 = vsel %vm1045, %v1032, 0
        %v1107 = vsel %vm1045, %v1033, 0
        %v1110 = vsel %vm1045, %v1034, 0
        %v1113 = vsel %vm1045, %v1035, 0
        %v1116 = vsel %vm1045, %v1036, 0
        %v1119 = vsel %vm1045, %v1037, 0
        %v1122 = vsel %vm1045, %v1038, 0
        %v1125 = vsel %vm1045, %v1039, 0
        %v1128 = vsel %vm1045, %v1040, 0
        %v1131 = vsel %vm1045, %v1041, 0
        %v1134 = vsel %vm1045, %v1042, 0
        %v1137 = vsel %vm1045, %v1043, 0
        %v1140 = vsel %vm1045, %v1044, 0
        %1142 = vmatpush.bf16.xpose.msra.mxu0 %v1116
        %1143 = vmatpush.bf16.xpose.msra.mxu0 %v1113
        %1144 = vmatpush.bf16.xpose.msra.mxu0 %v1110
        %1145 = vmatpush.bf16.xpose.msra.mxu0 %v1107
        %1146 = vmatpush.bf16.xpose.msra.mxu0 %v1104
        %1147 = vmatpush.bf16.xpose.msra.mxu0 %v1101
        %1148 = vmatpush.bf16.xpose.msra.mxu0 %v1098
        %1149 = vmatpush.bf16.xpose.msra.mxu0 %v1095
        %1150 = vmatmul.bf16.gmra.mxu0 %v1047
        %v1151 = vpop.f32.mrf.mxu0
        %v1152 = vadd.f32 0.0, %v1151
        %v1153 = vpop.f32.mrf.mxu0
        %v1154 = vadd.f32 0.0, %v1153
        %1155 = vmatmul.bf16.gmra.mxu0 %v1050
        %v1156 = vpop.f32.mrf.mxu0
        %v1157 = vadd.f32 0.0, %v1156
        %v1158 = vpop.f32.mrf.mxu0
        %v1159 = vadd.f32 0.0, %v1158
        %1160 = vmatmul.bf16.gmra.mxu0 %v1053
        %v1161 = vpop.f32.mrf.mxu0
        %v1162 = vadd.f32 0.0, %v1161
        %v1163 = vpop.f32.mrf.mxu0
        %v1164 = vadd.f32 0.0, %v1163
        %1165 = vmatmul.bf16.gmra.mxu0 %v1056
        %v1166 = vpop.f32.mrf.mxu0
        %v1167 = vadd.f32 0.0, %v1166
        %v1168 = vpop.f32.mrf.mxu0
        %v1169 = vadd.f32 0.0, %v1168
        %1170 = vmatmul.bf16.gmra.mxu0 %v1059
        %v1171 = vpop.f32.mrf.mxu0
        %v1172 = vadd.f32 0.0, %v1171
        %v1173 = vpop.f32.mrf.mxu0
        %v1174 = vadd.f32 0.0, %v1173
        %1175 = vmatmul.bf16.gmra.mxu0 %v1062
        %v1176 = vpop.f32.mrf.mxu0
        %v1177 = vadd.f32 0.0, %v1176
        %v1178 = vpop.f32.mrf.mxu0
        %v1179 = vadd.f32 0.0, %v1178
        %1180 = vmatmul.bf16.gmra.mxu0 %v1065
        %v1181 = vpop.f32.mrf.mxu0
        %v1182 = vadd.f32 0.0, %v1181
        %v1183 = vpop.f32.mrf.mxu0
        %v1184 = vadd.f32 0.0, %v1183
        %1185 = vmatmul.bf16.gmra.mxu0 %v1068
        %v1186 = vpop.f32.mrf.mxu0
        %v1187 = vadd.f32 0.0, %v1186
        %v1188 = vpop.f32.mrf.mxu0
        %v1189 = vadd.f32 0.0, %v1188
        %1190 = vmatmul.bf16.gmra.mxu0 %v1071
        %v1191 = vpop.f32.mrf.mxu0
        %v1192 = vadd.f32 0.0, %v1191
        %v1193 = vpop.f32.mrf.mxu0
        %v1194 = vadd.f32 0.0, %v1193
        %1195 = vmatmul.bf16.gmra.mxu0 %v1074
        %v1196 = vpop.f32.mrf.mxu0
        %v1197 = vadd.f32 0.0, %v1196
        %v1198 = vpop.f32.mrf.mxu0
        %v1199 = vadd.f32 0.0, %v1198
        %1200 = vmatmul.bf16.gmra.mxu0 %v1077
        %v1201 = vpop.f32.mrf.mxu0
        %v1202 = vadd.f32 0.0, %v1201
        %v1203 = vpop.f32.mrf.mxu0
        %v1204 = vadd.f32 0.0, %v1203
        %1205 = vmatmul.bf16.gmra.mxu0 %v1080
        %v1206 = vpop.f32.mrf.mxu0
        %v1207 = vadd.f32 0.0, %v1206
        %v1208 = vpop.f32.mrf.mxu0
        %v1209 = vadd.f32 0.0, %v1208
        %1210 = vmatmul.bf16.gmra.mxu0 %v1083
        %v1211 = vpop.f32.mrf.mxu0
        %v1212 = vadd.f32 0.0, %v1211
        %v1213 = vpop.f32.mrf.mxu0
        %v1214 = vadd.f32 0.0, %v1213
        %1215 = vmatmul.bf16.gmra.mxu0 %v1086
        %v1216 = vpop.f32.mrf.mxu0
        %v1217 = vadd.f32 0.0, %v1216
        %v1218 = vpop.f32.mrf.mxu0
        %v1219 = vadd.f32 0.0, %v1218
        %1220 = vmatmul.bf16.gmra.mxu0 %v1089
        %v1221 = vpop.f32.mrf.mxu0
        %v1222 = vadd.f32 0.0, %v1221
        %v1223 = vpop.f32.mrf.mxu0
        %v1224 = vadd.f32 0.0, %v1223
        %1225 = vmatmul.bf16.gmra.mxu0 %v1092
        %v1226 = vpop.f32.mrf.mxu0
        %v1227 = vadd.f32 0.0, %v1226
        %v1228 = vpop.f32.mrf.mxu0
        %v1229 = vadd.f32 0.0, %v1228
        %1230 = vdwg.mxu0
        %1231 = vmatpush.bf16.xpose.msra.mxu0 %v1140
        %1232 = vmatpush.bf16.xpose.msra.mxu0 %v1137
        %1233 = vmatpush.bf16.xpose.msra.mxu0 %v1134
        %1234 = vmatpush.bf16.xpose.msra.mxu0 %v1131
        %1235 = vmatpush.bf16.xpose.msra.mxu0 %v1128
        %1236 = vmatpush.bf16.xpose.msra.mxu0 %v1125
        %1237 = vmatpush.bf16.xpose.msra.mxu0 %v1122
        %1238 = vmatpush.bf16.xpose.msra.mxu0 %v1119
        %1239 = vmatmul.bf16.gmra.mxu0 %v1047
        %v1240 = vpop.f32.mrf.mxu0
        %v1241 = vadd.f32 0.0, %v1240
        %v1242 = vpop.f32.mrf.mxu0
        %v1243 = vadd.f32 0.0, %v1242
        %1244 = vmatmul.bf16.gmra.mxu0 %v1050
        %v1245 = vpop.f32.mrf.mxu0
        %v1246 = vadd.f32 0.0, %v1245
        %v1247 = vpop.f32.mrf.mxu0
        %v1248 = vadd.f32 0.0, %v1247
        %1249 = vmatmul.bf16.gmra.mxu0 %v1053
        %v1250 = vpop.f32.mrf.mxu0
        %v1251 = vadd.f32 0.0, %v1250
        %v1252 = vpop.f32.mrf.mxu0
        %v1253 = vadd.f32 0.0, %v1252
        %1254 = vmatmul.bf16.gmra.mxu0 %v1056
        %v1255 = vpop.f32.mrf.mxu0
        %v1256 = vadd.f32 0.0, %v1255
        %v1257 = vpop.f32.mrf.mxu0
        %v1258 = vadd.f32 0.0, %v1257
        %1259 = vmatmul.bf16.gmra.mxu0 %v1059
        %v1260 = vpop.f32.mrf.mxu0
        %v1261 = vadd.f32 0.0, %v1260
        %v1262 = vpop.f32.mrf.mxu0
        %v1263 = vadd.f32 0.0, %v1262
        %1264 = vmatmul.bf16.gmra.mxu0 %v1062
        %v1265 = vpop.f32.mrf.mxu0
        %v1266 = vadd.f32 0.0, %v1265
        %v1267 = vpop.f32.mrf.mxu0
        %v1268 = vadd.f32 0.0, %v1267
        %1269 = vmatmul.bf16.gmra.mxu0 %v1065
        %v1270 = vpop.f32.mrf.mxu0
        %v1271 = vadd.f32 0.0, %v1270
        %v1272 = vpop.f32.mrf.mxu0
        %v1273 = vadd.f32 0.0, %v1272
        %1274 = vmatmul.bf16.gmra.mxu0 %v1068
        %v1275 = vpop.f32.mrf.mxu0
        %v1276 = vadd.f32 0.0, %v1275
        %v1277 = vpop.f32.mrf.mxu0
        %v1278 = vadd.f32 0.0, %v1277
        %1279 = vmatmul.bf16.gmra.mxu0 %v1071
        %v1280 = vpop.f32.mrf.mxu0
        %v1281 = vadd.f32 0.0, %v1280
        %v1282 = vpop.f32.mrf.mxu0
        %v1283 = vadd.f32 0.0, %v1282
        %1284 = vmatmul.bf16.gmra.mxu0 %v1074
        %v1285 = vpop.f32.mrf.mxu0
        %v1286 = vadd.f32 0.0, %v1285
        %v1287 = vpop.f32.mrf.mxu0
        %v1288 = vadd.f32 0.0, %v1287
        %1289 = vmatmul.bf16.gmra.mxu0 %v1077
        %v1290 = vpop.f32.mrf.mxu0
        %v1291 = vadd.f32 0.0, %v1290
        %v1292 = vpop.f32.mrf.mxu0
        %v1293 = vadd.f32 0.0, %v1292
        %1294 = vmatmul.bf16.gmra.mxu0 %v1080
        %v1295 = vpop.f32.mrf.mxu0
        %v1296 = vadd.f32 0.0, %v1295
        %v1297 = vpop.f32.mrf.mxu0
        %v1298 = vadd.f32 0.0, %v1297
        %1299 = vmatmul.bf16.gmra.mxu0 %v1083
        %v1300 = vpop.f32.mrf.mxu0
        %v1301 = vadd.f32 0.0, %v1300
        %v1302 = vpop.f32.mrf.mxu0
        %v1303 = vadd.f32 0.0, %v1302
        %1304 = vmatmul.bf16.gmra.mxu0 %v1086
        %v1305 = vpop.f32.mrf.mxu0
        %v1306 = vadd.f32 0.0, %v1305
        %v1307 = vpop.f32.mrf.mxu0
        %v1308 = vadd.f32 0.0, %v1307
        %1309 = vmatmul.bf16.gmra.mxu0 %v1089
        %v1310 = vpop.f32.mrf.mxu0
        %v1311 = vadd.f32 0.0, %v1310
        %v1312 = vpop.f32.mrf.mxu0
        %v1313 = vadd.f32 0.0, %v1312
        %1314 = vmatmul.bf16.gmra.mxu0 %v1092
        %v1315 = vpop.f32.mrf.mxu0
        %v1316 = vadd.f32 0.0, %v1315
        %v1317 = vpop.f32.mrf.mxu0
        %v1318 = vadd.f32 0.0, %v1317
        %1319 = vdwg.mxu0
        %v1320 = vmax.f32 %v1152, %v1241
        %1321 = vmax.xlane.f32.xlu0 %v1320
        %v1322 = vpop.xlane.xlu0 %1321
        %v1323 = vmax.f32 %v1154, %v1243
        %1324 = vmax.xlane.f32.xlu0 %v1323
        %v1325 = vpop.xlane.xlu0 %1324
        %v1326 = vmax.f32 %v1157, %v1246
        %1327 = vmax.xlane.f32.xlu0 %v1326
        %v1328 = vpop.xlane.xlu0 %1327
        %v1329 = vmax.f32 %v1159, %v1248
        %1330 = vmax.xlane.f32.xlu0 %v1329
        %v1331 = vpop.xlane.xlu0 %1330
        %v1332 = vmax.f32 %v1162, %v1251
        %1333 = vmax.xlane.f32.xlu0 %v1332
        %v1334 = vpop.xlane.xlu0 %1333
        %v1335 = vmax.f32 %v1164, %v1253
        %1336 = vmax.xlane.f32.xlu0 %v1335
        %v1337 = vpop.xlane.xlu0 %1336
        %v1338 = vmax.f32 %v1167, %v1256
        %1339 = vmax.xlane.f32.xlu0 %v1338
        %v1340 = vpop.xlane.xlu0 %1339
        %v1341 = vmax.f32 %v1169, %v1258
        %1342 = vmax.xlane.f32.xlu0 %v1341
        %v1343 = vpop.xlane.xlu0 %1342
        %v1344 = vmax.f32 %v1172, %v1261
        %1345 = vmax.xlane.f32.xlu0 %v1344
        %v1346 = vpop.xlane.xlu0 %1345
        %v1347 = vmax.f32 %v1174, %v1263
        %1348 = vmax.xlane.f32.xlu0 %v1347
        %v1349 = vpop.xlane.xlu0 %1348
        %v1350 = vmax.f32 %v1177, %v1266
        %1351 = vmax.xlane.f32.xlu0 %v1350
        %v1352 = vpop.xlane.xlu0 %1351
        %v1353 = vmax.f32 %v1179, %v1268
        %1354 = vmax.xlane.f32.xlu0 %v1353
        %v1355 = vpop.xlane.xlu0 %1354
        %v1356 = vmax.f32 %v1182, %v1271
        %1357 = vmax.xlane.f32.xlu0 %v1356
        %v1358 = vpop.xlane.xlu0 %1357
        %v1359 = vmax.f32 %v1184, %v1273
        %1360 = vmax.xlane.f32.xlu0 %v1359
        %v1361 = vpop.xlane.xlu0 %1360
        %v1362 = vmax.f32 %v1187, %v1276
        %1363 = vmax.xlane.f32.xlu0 %v1362
        %v1364 = vpop.xlane.xlu0 %1363
        %v1365 = vmax.f32 %v1189, %v1278
        %1366 = vmax.xlane.f32.xlu0 %v1365
        %v1367 = vpop.xlane.xlu0 %1366
        %v1368 = vmax.f32 %v1192, %v1281
        %1369 = vmax.xlane.f32.xlu0 %v1368
        %v1370 = vpop.xlane.xlu0 %1369
        %v1371 = vmax.f32 %v1194, %v1283
        %1372 = vmax.xlane.f32.xlu0 %v1371
        %v1373 = vpop.xlane.xlu0 %1372
        %v1374 = vmax.f32 %v1197, %v1286
        %1375 = vmax.xlane.f32.xlu0 %v1374
        %v1376 = vpop.xlane.xlu0 %1375
        %v1377 = vmax.f32 %v1199, %v1288
        %1378 = vmax.xlane.f32.xlu0 %v1377
        %v1379 = vpop.xlane.xlu0 %1378
        %v1380 = vmax.f32 %v1202, %v1291
        %1381 = vmax.xlane.f32.xlu0 %v1380
        %v1382 = vpop.xlane.xlu0 %1381
        %v1383 = vmax.f32 %v1204, %v1293
        %1384 = vmax.xlane.f32.xlu0 %v1383
        %v1385 = vpop.xlane.xlu0 %1384
        %v1386 = vmax.f32 %v1207, %v1296
        %1387 = vmax.xlane.f32.xlu0 %v1386
        %v1388 = vpop.xlane.xlu0 %1387
        %v1389 = vmax.f32 %v1209, %v1298
        %1390 = vmax.xlane.f32.xlu0 %v1389
        %v1391 = vpop.xlane.xlu0 %1390
        %v1392 = vmax.f32 %v1212, %v1301
        %1393 = vmax.xlane.f32.xlu0 %v1392
        %v1394 = vpop.xlane.xlu0 %1393
        %v1395 = vmax.f32 %v1214, %v1303
        %1396 = vmax.xlane.f32.xlu0 %v1395
        %v1397 = vpop.xlane.xlu0 %1396
        %v1398 = vmax.f32 %v1217, %v1306
        %1399 = vmax.xlane.f32.xlu0 %v1398
        %v1400 = vpop.xlane.xlu0 %1399
        %v1401 = vmax.f32 %v1219, %v1308
        %1402 = vmax.xlane.f32.xlu0 %v1401
        %v1403 = vpop.xlane.xlu0 %1402
        %v1404 = vmax.f32 %v1222, %v1311
        %1405 = vmax.xlane.f32.xlu0 %v1404
        %v1406 = vpop.xlane.xlu0 %1405
        %v1407 = vmax.f32 %v1224, %v1313
        %1408 = vmax.xlane.f32.xlu0 %v1407
        %v1409 = vpop.xlane.xlu0 %1408
        %v1410 = vmax.f32 %v1227, %v1316
        %1411 = vmax.xlane.f32.xlu0 %v1410
        %v1412 = vpop.xlane.xlu0 %1411
        %v1413 = vmax.f32 %v1229, %v1318
        %1414 = vmax.xlane.f32.xlu0 %v1413
        %v1415 = vpop.xlane.xlu0 %1414
        %v1416 = vsub.f32 %v1152, %v1322
        %v1417 = vsub.f32 %v1241, %v1322
        %v1418 = vsub.f32 %v1154, %v1325
        %v1419 = vsub.f32 %v1243, %v1325
        %v1420 = vsub.f32 %v1157, %v1328
        %v1421 = vsub.f32 %v1246, %v1328
        %v1422 = vsub.f32 %v1159, %v1331
        %v1423 = vsub.f32 %v1248, %v1331
        %v1424 = vsub.f32 %v1162, %v1334
        %v1425 = vsub.f32 %v1251, %v1334
        %v1426 = vsub.f32 %v1164, %v1337
        %v1427 = vsub.f32 %v1253, %v1337
        %v1428 = vsub.f32 %v1167, %v1340
        %v1429 = vsub.f32 %v1256, %v1340
        %v1430 = vsub.f32 %v1169, %v1343
        %v1431 = vsub.f32 %v1258, %v1343
        %v1432 = vsub.f32 %v1172, %v1346
        %v1433 = vsub.f32 %v1261, %v1346
        %v1434 = vsub.f32 %v1174, %v1349
        %v1435 = vsub.f32 %v1263, %v1349
        %v1436 = vsub.f32 %v1177, %v1352
        %v1437 = vsub.f32 %v1266, %v1352
        %v1438 = vsub.f32 %v1179, %v1355
        %v1439 = vsub.f32 %v1268, %v1355
        %v1440 = vsub.f32 %v1182, %v1358
        %v1441 = vsub.f32 %v1271, %v1358
        %v1442 = vsub.f32 %v1184, %v1361
        %v1443 = vsub.f32 %v1273, %v1361
        %v1444 = vsub.f32 %v1187, %v1364
        %v1445 = vsub.f32 %v1276, %v1364
        %v1446 = vsub.f32 %v1189, %v1367
        %v1447 = vsub.f32 %v1278, %v1367
        %v1448 = vsub.f32 %v1192, %v1370
        %v1449 = vsub.f32 %v1281, %v1370
        %v1450 = vsub.f32 %v1194, %v1373
        %v1451 = vsub.f32 %v1283, %v1373
        %v1452 = vsub.f32 %v1197, %v1376
        %v1453 = vsub.f32 %v1286, %v1376
        %v1454 = vsub.f32 %v1199, %v1379
        %v1455 = vsub.f32 %v1288, %v1379
        %v1456 = vsub.f32 %v1202, %v1382
        %v1457 = vsub.f32 %v1291, %v1382
        %v1458 = vsub.f32 %v1204, %v1385
        %v1459 = vsub.f32 %v1293, %v1385
        %v1460 = vsub.f32 %v1207, %v1388
        %v1461 = vsub.f32 %v1296, %v1388
        %v1462 = vsub.f32 %v1209, %v1391
        %v1463 = vsub.f32 %v1298, %v1391
        %v1464 = vsub.f32 %v1212, %v1394
        %v1465 = vsub.f32 %v1301, %v1394
        %v1466 = vsub.f32 %v1214, %v1397
        %v1467 = vsub.f32 %v1303, %v1397
        %v1468 = vsub.f32 %v1217, %v1400
        %v1469 = vsub.f32 %v1306, %v1400
        %v1470 = vsub.f32 %v1219, %v1403
        %v1471 = vsub.f32 %v1308, %v1403
        %v1472 = vsub.f32 %v1222, %v1406
        %v1473 = vsub.f32 %v1311, %v1406
        %v1474 = vsub.f32 %v1224, %v1409
        %v1475 = vsub.f32 %v1313, %v1409
        %v1476 = vsub.f32 %v1227, %v1412
        %v1477 = vsub.f32 %v1316, %v1412
        %v1478 = vsub.f32 %v1229, %v1415
        %v1479 = vsub.f32 %v1318, %v1415
        %v1480 = vmul.f32 %v1416, 1.442695
        %v1481 = vpow.pop %v1480
        %v1482 = vmul.f32 %v1417, 1.442695
        %v1483 = vpow.pop %v1482
        %v1484 = vmul.f32 %v1418, 1.442695
        %v1485 = vpow.pop %v1484
        %v1486 = vmul.f32 %v1419, 1.442695
        %v1487 = vpow.pop %v1486
        %v1488 = vmul.f32 %v1420, 1.442695
        %v1489 = vpow.pop %v1488
        %v1490 = vmul.f32 %v1421, 1.442695
        %v1491 = vpow.pop %v1490
        %v1492 = vmul.f32 %v1422, 1.442695
        %v1493 = vpow.pop %v1492
        %v1494 = vmul.f32 %v1423, 1.442695
        %v1495 = vpow.pop %v1494
        %v1496 = vmul.f32 %v1424, 1.442695
        %v1497 = vpow.pop %v1496
        %v1498 = vmul.f32 %v1425, 1.442695
        %v1499 = vpow.pop %v1498
        %v1500 = vmul.f32 %v1426, 1.442695
        %v1501 = vpow.pop %v1500
        %v1502 = vmul.f32 %v1427, 1.442695
        %v1503 = vpow.pop %v1502
        %v1504 = vmul.f32 %v1428, 1.442695
        %v1505 = vpow.pop %v1504
        %v1506 = vmul.f32 %v1429, 1.442695
        %v1507 = vpow.pop %v1506
        %v1508 = vmul.f32 %v1430, 1.442695
        %v1509 = vpow.pop %v1508
        %v1510 = vmul.f32 %v1431, 1.442695
        %v1511 = vpow.pop %v1510
        %v1512 = vmul.f32 %v1432, 1.442695
        %v1513 = vpow.pop %v1512
        %v1514 = vmul.f32 %v1433, 1.442695
        %v1515 = vpow.pop %v1514
        %v1516 = vmul.f32 %v1434, 1.442695
        %v1517 = vpow.pop %v1516
        %v1518 = vmul.f32 %v1435, 1.442695
        %v1519 = vpow.pop %v1518
        %v1520 = vmul.f32 %v1436, 1.442695
        %v1521 = vpow.pop %v1520
        %v1522 = vmul.f32 %v1437, 1.442695
        %v1523 = vpow.pop %v1522
        %v1524 = vmul.f32 %v1438, 1.442695
        %v1525 = vpow.pop %v1524
        %v1526 = vmul.f32 %v1439, 1.442695
        %v1527 = vpow.pop %v1526
        %v1528 = vmul.f32 %v1440, 1.442695
        %v1529 = vpow.pop %v1528
        %v1530 = vmul.f32 %v1441, 1.442695
        %v1531 = vpow.pop %v1530
        %v1532 = vmul.f32 %v1442, 1.442695
        %v1533 = vpow.pop %v1532
        %v1534 = vmul.f32 %v1443, 1.442695
        %v1535 = vpow.pop %v1534
        %v1536 = vmul.f32 %v1444, 1.442695
        %v1537 = vpow.pop %v1536
        %v1538 = vmul.f32 %v1445, 1.442695
        %v1539 = vpow.pop %v1538
        %v1540 = vmul.f32 %v1446, 1.442695
        %v1541 = vpow.pop %v1540
        %v1542 = vmul.f32 %v1447, 1.442695
        %v1543 = vpow.pop %v1542
        %v1544 = vmul.f32 %v1448, 1.442695
        %v1545 = vpow.pop %v1544
        %v1546 = vmul.f32 %v1449, 1.442695
        %v1547 = vpow.pop %v1546
        %v1548 = vmul.f32 %v1450, 1.442695
        %v1549 = vpow.pop %v1548
        %v1550 = vmul.f32 %v1451, 1.442695
        %v1551 = vpow.pop %v1550
        %v1552 = vmul.f32 %v1452, 1.442695
        %v1553 = vpow.pop %v1552
        %v1554 = vmul.f32 %v1453, 1.442695
        %v1555 = vpow.pop %v1554
        %v1556 = vmul.f32 %v1454, 1.442695
        %v1557 = vpow.pop %v1556
        %v1558 = vmul.f32 %v1455, 1.442695
        %v1559 = vpow.pop %v1558
        %v1560 = vmul.f32 %v1456, 1.442695
        %v1561 = vpow.pop %v1560
        %v1562 = vmul.f32 %v1457, 1.442695
        %v1563 = vpow.pop %v1562
        %v1564 = vmul.f32 %v1458, 1.442695
        %v1565 = vpow.pop %v1564
        %v1566 = vmul.f32 %v1459, 1.442695
        %v1567 = vpow.pop %v1566
        %v1568 = vmul.f32 %v1460, 1.442695
        %v1569 = vpow.pop %v1568
        %v1570 = vmul.f32 %v1461, 1.442695
        %v1571 = vpow.pop %v1570
        %v1572 = vmul.f32 %v1462, 1.442695
        %v1573 = vpow.pop %v1572
        %v1574 = vmul.f32 %v1463, 1.442695
        %v1575 = vpow.pop %v1574
        %v1576 = vmul.f32 %v1464, 1.442695
        %v1577 = vpow.pop %v1576
        %v1578 = vmul.f32 %v1465, 1.442695
        %v1579 = vpow.pop %v1578
        %v1580 = vmul.f32 %v1466, 1.442695
        %v1581 = vpow.pop %v1580
        %v1582 = vmul.f32 %v1467, 1.442695
        %v1583 = vpow.pop %v1582
        %v1584 = vmul.f32 %v1468, 1.442695
        %v1585 = vpow.pop %v1584
        %v1586 = vmul.f32 %v1469, 1.442695
        %v1587 = vpow.pop %v1586
        %v1588 = vmul.f32 %v1470, 1.442695
        %v1589 = vpow.pop %v1588
        %v1590 = vmul.f32 %v1471, 1.442695
        %v1591 = vpow.pop %v1590
        %v1592 = vmul.f32 %v1472, 1.442695
        %v1593 = vpow.pop %v1592
        %v1594 = vmul.f32 %v1473, 1.442695
        %v1595 = vpow.pop %v1594
        %v1596 = vmul.f32 %v1474, 1.442695
        %v1597 = vpow.pop %v1596
        %v1598 = vmul.f32 %v1475, 1.442695
        %v1599 = vpow.pop %v1598
        %v1600 = vmul.f32 %v1476, 1.442695
        %v1601 = vpow.pop %v1600
        %v1602 = vmul.f32 %v1477, 1.442695
        %v1603 = vpow.pop %v1602
        %v1604 = vmul.f32 %v1478, 1.442695
        %v1605 = vpow.pop %v1604
        %v1606 = vmul.f32 %v1479, 1.442695
        %v1607 = vpow.pop %v1606
        %v1608 = vadd.f32 %v1481, %v1483
        %1609 = vadd.xlane.f32.xlu0 %v1608
        %v1610 = vpop.xlane.xlu0 %1609
        %v1611 = vadd.f32 %v1485, %v1487
        %1612 = vadd.xlane.f32.xlu0 %v1611
        %v1613 = vpop.xlane.xlu0 %1612
        %v1614 = vadd.f32 %v1489, %v1491
        %1615 = vadd.xlane.f32.xlu0 %v1614
        %v1616 = vpop.xlane.xlu0 %1615
        %v1617 = vadd.f32 %v1493, %v1495
        %1618 = vadd.xlane.f32.xlu0 %v1617
        %v1619 = vpop.xlane.xlu0 %1618
        %v1620 = vadd.f32 %v1497, %v1499
        %1621 = vadd.xlane.f32.xlu0 %v1620
        %v1622 = vpop.xlane.xlu0 %1621
        %v1623 = vadd.f32 %v1501, %v1503
        %1624 = vadd.xlane.f32.xlu0 %v1623
        %v1625 = vpop.xlane.xlu0 %1624
        %v1626 = vadd.f32 %v1505, %v1507
        %1627 = vadd.xlane.f32.xlu0 %v1626
        %v1628 = vpop.xlane.xlu0 %1627
        %v1629 = vadd.f32 %v1509, %v1511
        %1630 = vadd.xlane.f32.xlu0 %v1629
        %v1631 = vpop.xlane.xlu0 %1630
        %v1632 = vadd.f32 %v1513, %v1515
        %1633 = vadd.xlane.f32.xlu0 %v1632
        %v1634 = vpop.xlane.xlu0 %1633
        %v1635 = vadd.f32 %v1517, %v1519
        %1636 = vadd.xlane.f32.xlu0 %v1635
        %v1637 = vpop.xlane.xlu0 %1636
        %v1638 = vadd.f32 %v1521, %v1523
        %1639 = vadd.xlane.f32.xlu0 %v1638
        %v1640 = vpop.xlane.xlu0 %1639
        %v1641 = vadd.f32 %v1525, %v1527
        %1642 = vadd.xlane.f32.xlu0 %v1641
        %v1643 = vpop.xlane.xlu0 %1642
        %v1644 = vadd.f32 %v1529, %v1531
        %1645 = vadd.xlane.f32.xlu0 %v1644
        %v1646 = vpop.xlane.xlu0 %1645
        %v1647 = vadd.f32 %v1533, %v1535
        %1648 = vadd.xlane.f32.xlu0 %v1647
        %v1649 = vpop.xlane.xlu0 %1648
        %v1650 = vadd.f32 %v1537, %v1539
        %1651 = vadd.xlane.f32.xlu0 %v1650
        %v1652 = vpop.xlane.xlu0 %1651
        %v1653 = vadd.f32 %v1541, %v1543
        %1654 = vadd.xlane.f32.xlu0 %v1653
        %v1655 = vpop.xlane.xlu0 %1654
        %v1656 = vadd.f32 %v1545, %v1547
        %1657 = vadd.xlane.f32.xlu0 %v1656
        %v1658 = vpop.xlane.xlu0 %1657
        %v1659 = vadd.f32 %v1549, %v1551
        %1660 = vadd.xlane.f32.xlu0 %v1659
        %v1661 = vpop.xlane.xlu0 %1660
        %v1662 = vadd.f32 %v1553, %v1555
        %1663 = vadd.xlane.f32.xlu0 %v1662
        %v1664 = vpop.xlane.xlu0 %1663
        %v1665 = vadd.f32 %v1557, %v1559
        %1666 = vadd.xlane.f32.xlu0 %v1665
        %v1667 = vpop.xlane.xlu0 %1666
        %v1668 = vadd.f32 %v1561, %v1563
        %1669 = vadd.xlane.f32.xlu0 %v1668
        %v1670 = vpop.xlane.xlu0 %1669
        %v1671 = vadd.f32 %v1565, %v1567
        %1672 = vadd.xlane.f32.xlu0 %v1671
        %v1673 = vpop.xlane.xlu0 %1672
        %v1674 = vadd.f32 %v1569, %v1571
        %1675 = vadd.xlane.f32.xlu0 %v1674
        %v1676 = vpop.xlane.xlu0 %1675
        %v1677 = vadd.f32 %v1573, %v1575
        %1678 = vadd.xlane.f32.xlu0 %v1677
        %v1679 = vpop.xlane.xlu0 %1678
        %v1680 = vadd.f32 %v1577, %v1579
        %1681 = vadd.xlane.f32.xlu0 %v1680
        %v1682 = vpop.xlane.xlu0 %1681
        %v1683 = vadd.f32 %v1581, %v1583
        %1684 = vadd.xlane.f32.xlu0 %v1683
        %v1685 = vpop.xlane.xlu0 %1684
        %v1686 = vadd.f32 %v1585, %v1587
        %1687 = vadd.xlane.f32.xlu0 %v1686
        %v1688 = vpop.xlane.xlu0 %1687
        %v1689 = vadd.f32 %v1589, %v1591
        %1690 = vadd.xlane.f32.xlu0 %v1689
        %v1691 = vpop.xlane.xlu0 %1690
        %v1692 = vadd.f32 %v1593, %v1595
        %1693 = vadd.xlane.f32.xlu0 %v1692
        %v1694 = vpop.xlane.xlu0 %1693
        %v1695 = vadd.f32 %v1597, %v1599
        %1696 = vadd.xlane.f32.xlu0 %v1695
        %v1697 = vpop.xlane.xlu0 %1696
        %v1698 = vadd.f32 %v1601, %v1603
        %1699 = vadd.xlane.f32.xlu0 %v1698
        %v1700 = vpop.xlane.xlu0 %1699
        %v1701 = vadd.f32 %v1605, %v1607
        %1702 = vadd.xlane.f32.xlu0 %v1701
        %v1703 = vpop.xlane.xlu0 %1702
        %v1704 = vpack.c.bf16 %v1485, %v1481
        %v1705 = vpack.c.bf16 %v1487, %v1483
        %v1706 = vpack.c.bf16 %v1493, %v1489
        %v1707 = vpack.c.bf16 %v1495, %v1491
        %v1708 = vpack.c.bf16 %v1501, %v1497
        %v1709 = vpack.c.bf16 %v1503, %v1499
        %v1710 = vpack.c.bf16 %v1509, %v1505
        %v1711 = vpack.c.bf16 %v1511, %v1507
        %v1712 = vpack.c.bf16 %v1517, %v1513
        %v1713 = vpack.c.bf16 %v1519, %v1515
        %v1714 = vpack.c.bf16 %v1525, %v1521
        %v1715 = vpack.c.bf16 %v1527, %v1523
        %v1716 = vpack.c.bf16 %v1533, %v1529
        %v1717 = vpack.c.bf16 %v1535, %v1531
        %v1718 = vpack.c.bf16 %v1541, %v1537
        %v1719 = vpack.c.bf16 %v1543, %v1539
        %v1720 = vpack.c.bf16 %v1549, %v1545
        %v1721 = vpack.c.bf16 %v1551, %v1547
        %v1722 = vpack.c.bf16 %v1557, %v1553
        %v1723 = vpack.c.bf16 %v1559, %v1555
        %v1724 = vpack.c.bf16 %v1565, %v1561
        %v1725 = vpack.c.bf16 %v1567, %v1563
        %v1726 = vpack.c.bf16 %v1573, %v1569
        %v1727 = vpack.c.bf16 %v1575, %v1571
        %v1728 = vpack.c.bf16 %v1581, %v1577
        %v1729 = vpack.c.bf16 %v1583, %v1579
        %v1730 = vpack.c.bf16 %v1589, %v1585
        %v1731 = vpack.c.bf16 %v1591, %v1587
        %v1732 = vpack.c.bf16 %v1597, %v1593
        %v1733 = vpack.c.bf16 %v1599, %v1595
        %v1734 = vpack.c.bf16 %v1605, %v1601
        %v1735 = vpack.c.bf16 %v1607, %v1603
        %v1768 = vunpack.c.l.b16 %v853
        %v1769 = vunpack.c.l.b16 %v854
        %v1770 = vunpack.c.l.b16 %v855
        %v1771 = vunpack.c.l.b16 %v856
        %v1772 = vunpack.c.l.b16 %v857
        %v1773 = vunpack.c.l.b16 %v858
        %v1774 = vunpack.c.l.b16 %v859
        %v1775 = vunpack.c.l.b16 %v860
        %v1776 = vunpack.c.l.b16 %v861
        %v1777 = vunpack.c.l.b16 %v862
        %v1778 = vunpack.c.l.b16 %v863
        %v1779 = vunpack.c.l.b16 %v864
        %v1780 = vunpack.c.l.b16 %v865
        %v1781 = vunpack.c.l.b16 %v866
        %v1782 = vunpack.c.l.b16 %v867
        %v1783 = vunpack.c.l.b16 %v868
        %v1784 = vunpack.c.l.b16 %v869
        %v1785 = vunpack.c.l.b16 %v870
        %v1786 = vunpack.c.l.b16 %v871
        %v1787 = vunpack.c.l.b16 %v872
        %v1788 = vunpack.c.l.b16 %v873
        %v1789 = vunpack.c.l.b16 %v874
        %v1790 = vunpack.c.l.b16 %v875
        %v1791 = vunpack.c.l.b16 %v876
        %v1792 = vunpack.c.l.b16 %v877
        %v1793 = vunpack.c.l.b16 %v878
        %v1794 = vunpack.c.l.b16 %v879
        %v1795 = vunpack.c.l.b16 %v880
        %v1796 = vunpack.c.l.b16 %v881
        %v1797 = vunpack.c.l.b16 %v882
        %v1798 = vunpack.c.l.b16 %v883
        %v1799 = vunpack.c.l.b16 %v884
        %v1800 = vpack.c.b16 %v1769, %v1768
        %v1801 = vpack.c.b16 %v1771, %v1770
        %v1802 = vpack.c.b16 %v1773, %v1772
        %v1803 = vpack.c.b16 %v1775, %v1774
        %v1804 = vpack.c.b16 %v1777, %v1776
        %v1805 = vpack.c.b16 %v1779, %v1778
        %v1806 = vpack.c.b16 %v1781, %v1780
        %v1807 = vpack.c.b16 %v1783, %v1782
        %v1808 = vpack.c.b16 %v1785, %v1784
        %v1809 = vpack.c.b16 %v1787, %v1786
        %v1810 = vpack.c.b16 %v1789, %v1788
        %v1811 = vpack.c.b16 %v1791, %v1790
        %v1812 = vpack.c.b16 %v1793, %v1792
        %v1813 = vpack.c.b16 %v1795, %v1794
        %v1814 = vpack.c.b16 %v1797, %v1796
        %v1815 = vpack.c.b16 %v1799, %v1798
        %1832 = vmatpush.bf16.msra.mxu0 %v1807
        %1833 = vmatpush.bf16.msra.mxu0 %v1806
        %1834 = vmatpush.bf16.msra.mxu0 %v1805
        %1835 = vmatpush.bf16.msra.mxu0 %v1804
        %1836 = vmatpush.bf16.msra.mxu0 %v1803
        %1837 = vmatpush.bf16.msra.mxu0 %v1802
        %1838 = vmatpush.bf16.msra.mxu0 %v1801
        %1839 = vmatpush.bf16.msra.mxu0 %v1800
        %1840 = vmatmul.bf16.gmra.mxu0 %v1704
        %v1841 = vpop.f32.mrf.mxu0
        %v1842 = vadd.f32 0.0, %v1841
        %v1843 = vpop.f32.mrf.mxu0
        %v1844 = vadd.f32 0.0, %v1843
        %1845 = vmatmul.bf16.gmra.mxu0 %v1706
        %v1846 = vpop.f32.mrf.mxu0
        %v1847 = vadd.f32 0.0, %v1846
        %v1848 = vpop.f32.mrf.mxu0
        %v1849 = vadd.f32 0.0, %v1848
        %1850 = vmatmul.bf16.gmra.mxu0 %v1708
        %v1851 = vpop.f32.mrf.mxu0
        %v1852 = vadd.f32 0.0, %v1851
        %v1853 = vpop.f32.mrf.mxu0
        %v1854 = vadd.f32 0.0, %v1853
        %1855 = vmatmul.bf16.gmra.mxu0 %v1710
        %v1856 = vpop.f32.mrf.mxu0
        %v1857 = vadd.f32 0.0, %v1856
        %v1858 = vpop.f32.mrf.mxu0
        %v1859 = vadd.f32 0.0, %v1858
        %1860 = vmatmul.bf16.gmra.mxu0 %v1712
        %v1861 = vpop.f32.mrf.mxu0
        %v1862 = vadd.f32 0.0, %v1861
        %v1863 = vpop.f32.mrf.mxu0
        %v1864 = vadd.f32 0.0, %v1863
        %1865 = vmatmul.bf16.gmra.mxu0 %v1714
        %v1866 = vpop.f32.mrf.mxu0
        %v1867 = vadd.f32 0.0, %v1866
        %v1868 = vpop.f32.mrf.mxu0
        %v1869 = vadd.f32 0.0, %v1868
        %1870 = vmatmul.bf16.gmra.mxu0 %v1716
        %v1871 = vpop.f32.mrf.mxu0
        %v1872 = vadd.f32 0.0, %v1871
        %v1873 = vpop.f32.mrf.mxu0
        %v1874 = vadd.f32 0.0, %v1873
        %1875 = vmatmul.bf16.gmra.mxu0 %v1718
        %v1876 = vpop.f32.mrf.mxu0
        %v1877 = vadd.f32 0.0, %v1876
        %v1878 = vpop.f32.mrf.mxu0
        %v1879 = vadd.f32 0.0, %v1878
        %1880 = vmatmul.bf16.gmra.mxu0 %v1720
        %v1881 = vpop.f32.mrf.mxu0
        %v1882 = vadd.f32 0.0, %v1881
        %v1883 = vpop.f32.mrf.mxu0
        %v1884 = vadd.f32 0.0, %v1883
        %1885 = vmatmul.bf16.gmra.mxu0 %v1722
        %v1886 = vpop.f32.mrf.mxu0
        %v1887 = vadd.f32 0.0, %v1886
        %v1888 = vpop.f32.mrf.mxu0
        %v1889 = vadd.f32 0.0, %v1888
        %1890 = vmatmul.bf16.gmra.mxu0 %v1724
        %v1891 = vpop.f32.mrf.mxu0
        %v1892 = vadd.f32 0.0, %v1891
        %v1893 = vpop.f32.mrf.mxu0
        %v1894 = vadd.f32 0.0, %v1893
        %1895 = vmatmul.bf16.gmra.mxu0 %v1726
        %v1896 = vpop.f32.mrf.mxu0
        %v1897 = vadd.f32 0.0, %v1896
        %v1898 = vpop.f32.mrf.mxu0
        %v1899 = vadd.f32 0.0, %v1898
        %1900 = vmatmul.bf16.gmra.mxu0 %v1728
        %v1901 = vpop.f32.mrf.mxu0
        %v1902 = vadd.f32 0.0, %v1901
        %v1903 = vpop.f32.mrf.mxu0
        %v1904 = vadd.f32 0.0, %v1903
        %1905 = vmatmul.bf16.gmra.mxu0 %v1730
        %v1906 = vpop.f32.mrf.mxu0
        %v1907 = vadd.f32 0.0, %v1906
        %v1908 = vpop.f32.mrf.mxu0
        %v1909 = vadd.f32 0.0, %v1908
        %1910 = vmatmul.bf16.gmra.mxu0 %v1732
        %v1911 = vpop.f32.mrf.mxu0
        %v1912 = vadd.f32 0.0, %v1911
        %v1913 = vpop.f32.mrf.mxu0
        %v1914 = vadd.f32 0.0, %v1913
        %1915 = vmatmul.bf16.gmra.mxu0 %v1734
        %v1916 = vpop.f32.mrf.mxu0
        %v1917 = vadd.f32 0.0, %v1916
        %v1918 = vpop.f32.mrf.mxu0
        %v1919 = vadd.f32 0.0, %v1918
        %1920 = vdwg.mxu0
        %1921 = vmatpush.bf16.msra.mxu0 %v1815
        %1922 = vmatpush.bf16.msra.mxu0 %v1814
        %1923 = vmatpush.bf16.msra.mxu0 %v1813
        %1924 = vmatpush.bf16.msra.mxu0 %v1812
        %1925 = vmatpush.bf16.msra.mxu0 %v1811
        %1926 = vmatpush.bf16.msra.mxu0 %v1810
        %1927 = vmatpush.bf16.msra.mxu0 %v1809
        %1928 = vmatpush.bf16.msra.mxu0 %v1808
        %1929 = vmatmul.bf16.gmra.mxu0 %v1705
        %v1930 = vpop.f32.mrf.mxu0
        %v1931 = vadd.f32 %v1842, %v1930
        %v1932 = vpop.f32.mrf.mxu0
        %v1933 = vadd.f32 %v1844, %v1932
        %1934 = vmatmul.bf16.gmra.mxu0 %v1707
        %v1935 = vpop.f32.mrf.mxu0
        %v1936 = vadd.f32 %v1847, %v1935
        %v1937 = vpop.f32.mrf.mxu0
        %v1938 = vadd.f32 %v1849, %v1937
        %1939 = vmatmul.bf16.gmra.mxu0 %v1709
        %v1940 = vpop.f32.mrf.mxu0
        %v1941 = vadd.f32 %v1852, %v1940
        %v1942 = vpop.f32.mrf.mxu0
        %v1943 = vadd.f32 %v1854, %v1942
        %1944 = vmatmul.bf16.gmra.mxu0 %v1711
        %v1945 = vpop.f32.mrf.mxu0
        %v1946 = vadd.f32 %v1857, %v1945
        %v1947 = vpop.f32.mrf.mxu0
        %v1948 = vadd.f32 %v1859, %v1947
        %1949 = vmatmul.bf16.gmra.mxu0 %v1713
        %v1950 = vpop.f32.mrf.mxu0
        %v1951 = vadd.f32 %v1862, %v1950
        %v1952 = vpop.f32.mrf.mxu0
        %v1953 = vadd.f32 %v1864, %v1952
        %1954 = vmatmul.bf16.gmra.mxu0 %v1715
        %v1955 = vpop.f32.mrf.mxu0
        %v1956 = vadd.f32 %v1867, %v1955
        %v1957 = vpop.f32.mrf.mxu0
        %v1958 = vadd.f32 %v1869, %v1957
        %1959 = vmatmul.bf16.gmra.mxu0 %v1717
        %v1960 = vpop.f32.mrf.mxu0
        %v1961 = vadd.f32 %v1872, %v1960
        %v1962 = vpop.f32.mrf.mxu0
        %v1963 = vadd.f32 %v1874, %v1962
        %1964 = vmatmul.bf16.gmra.mxu0 %v1719
        %v1965 = vpop.f32.mrf.mxu0
        %v1966 = vadd.f32 %v1877, %v1965
        %v1967 = vpop.f32.mrf.mxu0
        %v1968 = vadd.f32 %v1879, %v1967
        %1969 = vmatmul.bf16.gmra.mxu0 %v1721
        %v1970 = vpop.f32.mrf.mxu0
        %v1971 = vadd.f32 %v1882, %v1970
        %v1972 = vpop.f32.mrf.mxu0
        %v1973 = vadd.f32 %v1884, %v1972
        %1974 = vmatmul.bf16.gmra.mxu0 %v1723
        %v1975 = vpop.f32.mrf.mxu0
        %v1976 = vadd.f32 %v1887, %v1975
        %v1977 = vpop.f32.mrf.mxu0
        %v1978 = vadd.f32 %v1889, %v1977
        %1979 = vmatmul.bf16.gmra.mxu0 %v1725
        %v1980 = vpop.f32.mrf.mxu0
        %v1981 = vadd.f32 %v1892, %v1980
        %v1982 = vpop.f32.mrf.mxu0
        %v1983 = vadd.f32 %v1894, %v1982
        %1984 = vmatmul.bf16.gmra.mxu0 %v1727
        %v1985 = vpop.f32.mrf.mxu0
        %v1986 = vadd.f32 %v1897, %v1985
        %v1987 = vpop.f32.mrf.mxu0
        %v1988 = vadd.f32 %v1899, %v1987
        %1989 = vmatmul.bf16.gmra.mxu0 %v1729
        %v1990 = vpop.f32.mrf.mxu0
        %v1991 = vadd.f32 %v1902, %v1990
        %v1992 = vpop.f32.mrf.mxu0
        %v1993 = vadd.f32 %v1904, %v1992
        %1994 = vmatmul.bf16.gmra.mxu0 %v1731
        %v1995 = vpop.f32.mrf.mxu0
        %v1996 = vadd.f32 %v1907, %v1995
        %v1997 = vpop.f32.mrf.mxu0
        %v1998 = vadd.f32 %v1909, %v1997
        %1999 = vmatmul.bf16.gmra.mxu0 %v1733
        %v2000 = vpop.f32.mrf.mxu0
        %v2001 = vadd.f32 %v1912, %v2000
        %v2002 = vpop.f32.mrf.mxu0
        %v2003 = vadd.f32 %v1914, %v2002
        %2004 = vmatmul.bf16.gmra.mxu0 %v1735
        %v2005 = vpop.f32.mrf.mxu0
        %v2006 = vadd.f32 %v1917, %v2005
        %v2007 = vpop.f32.mrf.mxu0
        %v2008 = vadd.f32 %v1919, %v2007
        %2009 = vdwg.mxu0
        %v2010 = vrcp.pop %v1610
        %v2011 = vrcp.pop %v1613
        %v2012 = vrcp.pop %v1616
        %v2013 = vrcp.pop %v1619
        %v2014 = vrcp.pop %v1622
        %v2015 = vrcp.pop %v1625
        %v2016 = vrcp.pop %v1628
        %v2017 = vrcp.pop %v1631
        %v2018 = vrcp.pop %v1634
        %v2019 = vrcp.pop %v1637
        %v2020 = vrcp.pop %v1640
        %v2021 = vrcp.pop %v1643
        %v2022 = vrcp.pop %v1646
        %v2023 = vrcp.pop %v1649
        %v2024 = vrcp.pop %v1652
        %v2025 = vrcp.pop %v1655
        %v2026 = vrcp.pop %v1658
        %v2027 = vrcp.pop %v1661
        %v2028 = vrcp.pop %v1664
        %v2029 = vrcp.pop %v1667
        %v2030 = vrcp.pop %v1670
        %v2031 = vrcp.pop %v1673
        %v2032 = vrcp.pop %v1676
        %v2033 = vrcp.pop %v1679
        %v2034 = vrcp.pop %v1682
        %v2035 = vrcp.pop %v1685
        %v2036 = vrcp.pop %v1688
        %v2037 = vrcp.pop %v1691
        %v2038 = vrcp.pop %v1694
        %v2039 = vrcp.pop %v1697
        %v2040 = vrcp.pop %v1700
        %v2041 = vrcp.pop %v1703
        %v2042 = vmul.f32 %v1931, %v2010
        %v2043 = vmul.f32 %v1933, %v2011
        %v2044 = vmul.f32 %v1936, %v2012
        %v2045 = vmul.f32 %v1938, %v2013
        %v2046 = vmul.f32 %v1941, %v2014
        %v2047 = vmul.f32 %v1943, %v2015
        %v2048 = vmul.f32 %v1946, %v2016
        %v2049 = vmul.f32 %v1948, %v2017
        %v2050 = vmul.f32 %v1951, %v2018
        %v2051 = vmul.f32 %v1953, %v2019
        %v2052 = vmul.f32 %v1956, %v2020
        %v2053 = vmul.f32 %v1958, %v2021
        %v2054 = vmul.f32 %v1961, %v2022
        %v2055 = vmul.f32 %v1963, %v2023
        %v2056 = vmul.f32 %v1966, %v2024
        %v2057 = vmul.f32 %v1968, %v2025
        %v2058 = vmul.f32 %v1971, %v2026
        %v2059 = vmul.f32 %v1973, %v2027
        %v2060 = vmul.f32 %v1976, %v2028
        %v2061 = vmul.f32 %v1978, %v2029
        %v2062 = vmul.f32 %v1981, %v2030
        %v2063 = vmul.f32 %v1983, %v2031
        %v2064 = vmul.f32 %v1986, %v2032
        %v2065 = vmul.f32 %v1988, %v2033
        %v2066 = vmul.f32 %v1991, %v2034
        %v2067 = vmul.f32 %v1993, %v2035
        %v2068 = vmul.f32 %v1996, %v2036
        %v2069 = vmul.f32 %v1998, %v2037
        %v2070 = vmul.f32 %v2001, %v2038
        %v2071 = vmul.f32 %v2003, %v2039
        %v2072 = vmul.f32 %v2006, %v2040
        %v2073 = vmul.f32 %v2008, %v2041
        %v2074 = vpack.c.bf16 %v2042, %v2042
        %v2075 = vpack.c.bf16 %v2043, %v2043
        %v2076 = vpack.c.bf16 %v2044, %v2044
        %v2077 = vpack.c.bf16 %v2045, %v2045
        %v2078 = vpack.c.bf16 %v2046, %v2046
        %v2079 = vpack.c.bf16 %v2047, %v2047
        %v2080 = vpack.c.bf16 %v2048, %v2048
        %v2081 = vpack.c.bf16 %v2049, %v2049
        %v2082 = vpack.c.bf16 %v2050, %v2050
        %v2083 = vpack.c.bf16 %v2051, %v2051
        %v2084 = vpack.c.bf16 %v2052, %v2052
        %v2085 = vpack.c.bf16 %v2053, %v2053
        %v2086 = vpack.c.bf16 %v2054, %v2054
        %v2087 = vpack.c.bf16 %v2055, %v2055
        %v2088 = vpack.c.bf16 %v2056, %v2056
        %v2089 = vpack.c.bf16 %v2057, %v2057
        %v2090 = vpack.c.bf16 %v2058, %v2058
        %v2091 = vpack.c.bf16 %v2059, %v2059
        %v2092 = vpack.c.bf16 %v2060, %v2060
        %v2093 = vpack.c.bf16 %v2061, %v2061
        %v2094 = vpack.c.bf16 %v2062, %v2062
        %v2095 = vpack.c.bf16 %v2063, %v2063
        %v2096 = vpack.c.bf16 %v2064, %v2064
        %v2097 = vpack.c.bf16 %v2065, %v2065
        %v2098 = vpack.c.bf16 %v2066, %v2066
        %v2099 = vpack.c.bf16 %v2067, %v2067
        %v2100 = vpack.c.bf16 %v2068, %v2068
        %v2101 = vpack.c.bf16 %v2069, %v2069
        %v2102 = vpack.c.bf16 %v2070, %v2070
        %v2103 = vpack.c.bf16 %v2071, %v2071
        %v2104 = vpack.c.bf16 %v2072, %v2072
        %v2105 = vpack.c.bf16 %v2073, %v2073
        %2106 = vrot.lane.b32.xlu0 %v949, 96
        %v2107 = vpop.permute.xlu0 %2106
        %2108 = vrot.lane.b32.xlu0 %v950, 96
        %v2109 = vpop.permute.xlu0 %2108
        %2110 = vrot.lane.b32.xlu0 %v951, 96
        %v2111 = vpop.permute.xlu0 %2110
        %2112 = vrot.lane.b32.xlu0 %v952, 96
        %v2113 = vpop.permute.xlu0 %2112
        %2114 = vrot.lane.b32.xlu0 %v953, 96
        %v2115 = vpop.permute.xlu0 %2114
        %2116 = vrot.lane.b32.xlu0 %v954, 96
        %v2117 = vpop.permute.xlu0 %2116
        %2118 = vrot.lane.b32.xlu0 %v955, 96
        %v2119 = vpop.permute.xlu0 %2118
        %2120 = vrot.lane.b32.xlu0 %v956, 96
        %v2121 = vpop.permute.xlu0 %2120
        %2122 = vrot.lane.b32.xlu0 %v957, 96
        %v2123 = vpop.permute.xlu0 %2122
        %2124 = vrot.lane.b32.xlu0 %v958, 96
        %v2125 = vpop.permute.xlu0 %2124
        %2126 = vrot.lane.b32.xlu0 %v959, 96
        %v2127 = vpop.permute.xlu0 %2126
        %2128 = vrot.lane.b32.xlu0 %v960, 96
        %v2129 = vpop.permute.xlu0 %2128
        %2130 = vrot.lane.b32.xlu0 %v961, 96
        %v2131 = vpop.permute.xlu0 %2130
        %2132 = vrot.lane.b32.xlu0 %v962, 96
        %v2133 = vpop.permute.xlu0 %2132
        %2134 = vrot.lane.b32.xlu0 %v963, 96
        %v2135 = vpop.permute.xlu0 %2134
        %2136 = vrot.lane.b32.xlu0 %v964, 96
        %v2137 = vpop.permute.xlu0 %2136
        %2138 = vrot.lane.b32.xlu0 %v1029, 96
        %v2139 = vpop.permute.xlu0 %2138
        %2140 = vrot.lane.b32.xlu0 %v1030, 96
        %v2141 = vpop.permute.xlu0 %2140
        %2142 = vrot.lane.b32.xlu0 %v1031, 96
        %v2143 = vpop.permute.xlu0 %2142
        %2144 = vrot.lane.b32.xlu0 %v1032, 96
        %v2145 = vpop.permute.xlu0 %2144
        %2146 = vrot.lane.b32.xlu0 %v1033, 96
        %v2147 = vpop.permute.xlu0 %2146
        %2148 = vrot.lane.b32.xlu0 %v1034, 96
        %v2149 = vpop.permute.xlu0 %2148
        %2150 = vrot.lane.b32.xlu0 %v1035, 96
        %v2151 = vpop.permute.xlu0 %2150
        %2152 = vrot.lane.b32.xlu0 %v1036, 96
        %v2153 = vpop.permute.xlu0 %2152
        %2154 = vrot.lane.b32.xlu0 %v1037, 96
        %v2155 = vpop.permute.xlu0 %2154
        %2156 = vrot.lane.b32.xlu0 %v1038, 96
        %v2157 = vpop.permute.xlu0 %2156
        %2158 = vrot.lane.b32.xlu0 %v1039, 96
        %v2159 = vpop.permute.xlu0 %2158
        %2160 = vrot.lane.b32.xlu0 %v1040, 96
        %v2161 = vpop.permute.xlu0 %2160
        %2162 = vrot.lane.b32.xlu0 %v1041, 96
        %v2163 = vpop.permute.xlu0 %2162
        %2164 = vrot.lane.b32.xlu0 %v1042, 96
        %v2165 = vpop.permute.xlu0 %2164
        %2166 = vrot.lane.b32.xlu0 %v1043, 96
        %v2167 = vpop.permute.xlu0 %2166
        %2168 = vrot.lane.b32.xlu0 %v1044, 96
        %v2169 = vpop.permute.xlu0 %2168
        %v2171 = vsel %vm1045, %v2107, 0
        %v2174 = vsel %vm1045, %v2109, 0
        %v2177 = vsel %vm1045, %v2111, 0
        %v2180 = vsel %vm1045, %v2113, 0
        %v2183 = vsel %vm1045, %v2115, 0
        %v2186 = vsel %vm1045, %v2117, 0
        %v2189 = vsel %vm1045, %v2119, 0
        %v2192 = vsel %vm1045, %v2121, 0
        %v2195 = vsel %vm1045, %v2123, 0
        %v2198 = vsel %vm1045, %v2125, 0
        %v2201 = vsel %vm1045, %v2127, 0
        %v2204 = vsel %vm1045, %v2129, 0
        %v2207 = vsel %vm1045, %v2131, 0
        %v2210 = vsel %vm1045, %v2133, 0
        %v2213 = vsel %vm1045, %v2135, 0
        %v2216 = vsel %vm1045, %v2137, 0
        %v2219 = vsel %vm1045, %v2139, 0
        %v2222 = vsel %vm1045, %v2141, 0
        %v2225 = vsel %vm1045, %v2143, 0
        %v2228 = vsel %vm1045, %v2145, 0
        %v2231 = vsel %vm1045, %v2147, 0
        %v2234 = vsel %vm1045, %v2149, 0
        %v2237 = vsel %vm1045, %v2151, 0
        %v2240 = vsel %vm1045, %v2153, 0
        %v2243 = vsel %vm1045, %v2155, 0
        %v2246 = vsel %vm1045, %v2157, 0
        %v2249 = vsel %vm1045, %v2159, 0
        %v2252 = vsel %vm1045, %v2161, 0
        %v2255 = vsel %vm1045, %v2163, 0
        %v2258 = vsel %vm1045, %v2165, 0
        %v2261 = vsel %vm1045, %v2167, 0
        %v2264 = vsel %vm1045, %v2169, 0
        %2266 = vmatpush.bf16.xpose.msra.mxu0 %v2240
        %2267 = vmatpush.bf16.xpose.msra.mxu0 %v2237
        %2268 = vmatpush.bf16.xpose.msra.mxu0 %v2234
        %2269 = vmatpush.bf16.xpose.msra.mxu0 %v2231
        %2270 = vmatpush.bf16.xpose.msra.mxu0 %v2228
        %2271 = vmatpush.bf16.xpose.msra.mxu0 %v2225
        %2272 = vmatpush.bf16.xpose.msra.mxu0 %v2222
        %2273 = vmatpush.bf16.xpose.msra.mxu0 %v2219
        %2274 = vmatmul.bf16.gmra.mxu0 %v2171
        %v2275 = vpop.f32.mrf.mxu0
        %v2276 = vadd.f32 0.0, %v2275
        %v2277 = vpop.f32.mrf.mxu0
        %v2278 = vadd.f32 0.0, %v2277
        %2279 = vmatmul.bf16.gmra.mxu0 %v2174
        %v2280 = vpop.f32.mrf.mxu0
        %v2281 = vadd.f32 0.0, %v2280
        %v2282 = vpop.f32.mrf.mxu0
        %v2283 = vadd.f32 0.0, %v2282
        %2284 = vmatmul.bf16.gmra.mxu0 %v2177
        %v2285 = vpop.f32.mrf.mxu0
        %v2286 = vadd.f32 0.0, %v2285
        %v2287 = vpop.f32.mrf.mxu0
        %v2288 = vadd.f32 0.0, %v2287
        %2289 = vmatmul.bf16.gmra.mxu0 %v2180
        %v2290 = vpop.f32.mrf.mxu0
        %v2291 = vadd.f32 0.0, %v2290
        %v2292 = vpop.f32.mrf.mxu0
        %v2293 = vadd.f32 0.0, %v2292
        %2294 = vmatmul.bf16.gmra.mxu0 %v2183
        %v2295 = vpop.f32.mrf.mxu0
        %v2296 = vadd.f32 0.0, %v2295
        %v2297 = vpop.f32.mrf.mxu0
        %v2298 = vadd.f32 0.0, %v2297
        %2299 = vmatmul.bf16.gmra.mxu0 %v2186
        %v2300 = vpop.f32.mrf.mxu0
        %v2301 = vadd.f32 0.0, %v2300
        %v2302 = vpop.f32.mrf.mxu0
        %v2303 = vadd.f32 0.0, %v2302
        %2304 = vmatmul.bf16.gmra.mxu0 %v2189
        %v2305 = vpop.f32.mrf.mxu0
        %v2306 = vadd.f32 0.0, %v2305
        %v2307 = vpop.f32.mrf.mxu0
        %v2308 = vadd.f32 0.0, %v2307
        %2309 = vmatmul.bf16.gmra.mxu0 %v2192
        %v2310 = vpop.f32.mrf.mxu0
        %v2311 = vadd.f32 0.0, %v2310
        %v2312 = vpop.f32.mrf.mxu0
        %v2313 = vadd.f32 0.0, %v2312
        %2314 = vmatmul.bf16.gmra.mxu0 %v2195
        %v2315 = vpop.f32.mrf.mxu0
        %v2316 = vadd.f32 0.0, %v2315
        %v2317 = vpop.f32.mrf.mxu0
        %v2318 = vadd.f32 0.0, %v2317
        %2319 = vmatmul.bf16.gmra.mxu0 %v2198
        %v2320 = vpop.f32.mrf.mxu0
        %v2321 = vadd.f32 0.0, %v2320
        %v2322 = vpop.f32.mrf.mxu0
        %v2323 = vadd.f32 0.0, %v2322
        %2324 = vmatmul.bf16.gmra.mxu0 %v2201
        %v2325 = vpop.f32.mrf.mxu0
        %v2326 = vadd.f32 0.0, %v2325
        %v2327 = vpop.f32.mrf.mxu0
        %v2328 = vadd.f32 0.0, %v2327
        %2329 = vmatmul.bf16.gmra.mxu0 %v2204
        %v2330 = vpop.f32.mrf.mxu0
        %v2331 = vadd.f32 0.0, %v2330
        %v2332 = vpop.f32.mrf.mxu0
        %v2333 = vadd.f32 0.0, %v2332
        %2334 = vmatmul.bf16.gmra.mxu0 %v2207
        %v2335 = vpop.f32.mrf.mxu0
        %v2336 = vadd.f32 0.0, %v2335
        %v2337 = vpop.f32.mrf.mxu0
        %v2338 = vadd.f32 0.0, %v2337
        %2339 = vmatmul.bf16.gmra.mxu0 %v2210
        %v2340 = vpop.f32.mrf.mxu0
        %v2341 = vadd.f32 0.0, %v2340
        %v2342 = vpop.f32.mrf.mxu0
        %v2343 = vadd.f32 0.0, %v2342
        %2344 = vmatmul.bf16.gmra.mxu0 %v2213
        %v2345 = vpop.f32.mrf.mxu0
        %v2346 = vadd.f32 0.0, %v2345
        %v2347 = vpop.f32.mrf.mxu0
        %v2348 = vadd.f32 0.0, %v2347
        %2349 = vmatmul.bf16.gmra.mxu0 %v2216
        %v2350 = vpop.f32.mrf.mxu0
        %v2351 = vadd.f32 0.0, %v2350
        %v2352 = vpop.f32.mrf.mxu0
        %v2353 = vadd.f32 0.0, %v2352
        %2354 = vdwg.mxu0
        %2355 = vmatpush.bf16.xpose.msra.mxu0 %v2264
        %2356 = vmatpush.bf16.xpose.msra.mxu0 %v2261
        %2357 = vmatpush.bf16.xpose.msra.mxu0 %v2258
        %2358 = vmatpush.bf16.xpose.msra.mxu0 %v2255
        %2359 = vmatpush.bf16.xpose.msra.mxu0 %v2252
        %2360 = vmatpush.bf16.xpose.msra.mxu0 %v2249
        %2361 = vmatpush.bf16.xpose.msra.mxu0 %v2246
        %2362 = vmatpush.bf16.xpose.msra.mxu0 %v2243
        %2363 = vmatmul.bf16.gmra.mxu0 %v2171
        %v2364 = vpop.f32.mrf.mxu0
        %v2365 = vadd.f32 0.0, %v2364
        %v2366 = vpop.f32.mrf.mxu0
        %v2367 = vadd.f32 0.0, %v2366
        %2368 = vmatmul.bf16.gmra.mxu0 %v2174
        %v2369 = vpop.f32.mrf.mxu0
        %v2370 = vadd.f32 0.0, %v2369
        %v2371 = vpop.f32.mrf.mxu0
        %v2372 = vadd.f32 0.0, %v2371
        %2373 = vmatmul.bf16.gmra.mxu0 %v2177
        %v2374 = vpop.f32.mrf.mxu0
        %v2375 = vadd.f32 0.0, %v2374
        %v2376 = vpop.f32.mrf.mxu0
        %v2377 = vadd.f32 0.0, %v2376
        %2378 = vmatmul.bf16.gmra.mxu0 %v2180
        %v2379 = vpop.f32.mrf.mxu0
        %v2380 = vadd.f32 0.0, %v2379
        %v2381 = vpop.f32.mrf.mxu0
        %v2382 = vadd.f32 0.0, %v2381
        %2383 = vmatmul.bf16.gmra.mxu0 %v2183
        %v2384 = vpop.f32.mrf.mxu0
        %v2385 = vadd.f32 0.0, %v2384
        %v2386 = vpop.f32.mrf.mxu0
        %v2387 = vadd.f32 0.0, %v2386
        %2388 = vmatmul.bf16.gmra.mxu0 %v2186
        %v2389 = vpop.f32.mrf.mxu0
        %v2390 = vadd.f32 0.0, %v2389
        %v2391 = vpop.f32.mrf.mxu0
        %v2392 = vadd.f32 0.0, %v2391
        %2393 = vmatmul.bf16.gmra.mxu0 %v2189
        %v2394 = vpop.f32.mrf.mxu0
        %v2395 = vadd.f32 0.0, %v2394
        %v2396 = vpop.f32.mrf.mxu0
        %v2397 = vadd.f32 0.0, %v2396
        %2398 = vmatmul.bf16.gmra.mxu0 %v2192
        %v2399 = vpop.f32.mrf.mxu0
        %v2400 = vadd.f32 0.0, %v2399
        %v2401 = vpop.f32.mrf.mxu0
        %v2402 = vadd.f32 0.0, %v2401
        %2403 = vmatmul.bf16.gmra.mxu0 %v2195
        %v2404 = vpop.f32.mrf.mxu0
        %v2405 = vadd.f32 0.0, %v2404
        %v2406 = vpop.f32.mrf.mxu0
        %v2407 = vadd.f32 0.0, %v2406
        %2408 = vmatmul.bf16.gmra.mxu0 %v2198
        %v2409 = vpop.f32.mrf.mxu0
        %v2410 = vadd.f32 0.0, %v2409
        %v2411 = vpop.f32.mrf.mxu0
        %v2412 = vadd.f32 0.0, %v2411
        %2413 = vmatmul.bf16.gmra.mxu0 %v2201
        %v2414 = vpop.f32.mrf.mxu0
        %v2415 = vadd.f32 0.0, %v2414
        %v2416 = vpop.f32.mrf.mxu0
        %v2417 = vadd.f32 0.0, %v2416
        %2418 = vmatmul.bf16.gmra.mxu0 %v2204
        %v2419 = vpop.f32.mrf.mxu0
        %v2420 = vadd.f32 0.0, %v2419
        %v2421 = vpop.f32.mrf.mxu0
        %v2422 = vadd.f32 0.0, %v2421
        %2423 = vmatmul.bf16.gmra.mxu0 %v2207
        %v2424 = vpop.f32.mrf.mxu0
        %v2425 = vadd.f32 0.0, %v2424
        %v2426 = vpop.f32.mrf.mxu0
        %v2427 = vadd.f32 0.0, %v2426
        %2428 = vmatmul.bf16.gmra.mxu0 %v2210
        %v2429 = vpop.f32.mrf.mxu0
        %v2430 = vadd.f32 0.0, %v2429
        %v2431 = vpop.f32.mrf.mxu0
        %v2432 = vadd.f32 0.0, %v2431
        %2433 = vmatmul.bf16.gmra.mxu0 %v2213
        %v2434 = vpop.f32.mrf.mxu0
        %v2435 = vadd.f32 0.0, %v2434
        %v2436 = vpop.f32.mrf.mxu0
        %v2437 = vadd.f32 0.0, %v2436
        %2438 = vmatmul.bf16.gmra.mxu0 %v2216
        %v2439 = vpop.f32.mrf.mxu0
        %v2440 = vadd.f32 0.0, %v2439
        %v2441 = vpop.f32.mrf.mxu0
        %v2442 = vadd.f32 0.0, %v2441
        %2443 = vdwg.mxu0
        %v2444 = vmax.f32 %v2276, %v2365
        %2445 = vmax.xlane.f32.xlu0 %v2444
        %v2446 = vpop.xlane.xlu0 %2445
        %v2447 = vmax.f32 %v2278, %v2367
        %2448 = vmax.xlane.f32.xlu0 %v2447
        %v2449 = vpop.xlane.xlu0 %2448
        %v2450 = vmax.f32 %v2281, %v2370
        %2451 = vmax.xlane.f32.xlu0 %v2450
        %v2452 = vpop.xlane.xlu0 %2451
        %v2453 = vmax.f32 %v2283, %v2372
        %2454 = vmax.xlane.f32.xlu0 %v2453
        %v2455 = vpop.xlane.xlu0 %2454
        %v2456 = vmax.f32 %v2286, %v2375
        %2457 = vmax.xlane.f32.xlu0 %v2456
        %v2458 = vpop.xlane.xlu0 %2457
        %v2459 = vmax.f32 %v2288, %v2377
        %2460 = vmax.xlane.f32.xlu0 %v2459
        %v2461 = vpop.xlane.xlu0 %2460
        %v2462 = vmax.f32 %v2291, %v2380
        %2463 = vmax.xlane.f32.xlu0 %v2462
        %v2464 = vpop.xlane.xlu0 %2463
        %v2465 = vmax.f32 %v2293, %v2382
        %2466 = vmax.xlane.f32.xlu0 %v2465
        %v2467 = vpop.xlane.xlu0 %2466
        %v2468 = vmax.f32 %v2296, %v2385
        %2469 = vmax.xlane.f32.xlu0 %v2468
        %v2470 = vpop.xlane.xlu0 %2469
        %v2471 = vmax.f32 %v2298, %v2387
        %2472 = vmax.xlane.f32.xlu0 %v2471
        %v2473 = vpop.xlane.xlu0 %2472
        %v2474 = vmax.f32 %v2301, %v2390
        %2475 = vmax.xlane.f32.xlu0 %v2474
        %v2476 = vpop.xlane.xlu0 %2475
        %v2477 = vmax.f32 %v2303, %v2392
        %2478 = vmax.xlane.f32.xlu0 %v2477
        %v2479 = vpop.xlane.xlu0 %2478
        %v2480 = vmax.f32 %v2306, %v2395
        %2481 = vmax.xlane.f32.xlu0 %v2480
        %v2482 = vpop.xlane.xlu0 %2481
        %v2483 = vmax.f32 %v2308, %v2397
        %2484 = vmax.xlane.f32.xlu0 %v2483
        %v2485 = vpop.xlane.xlu0 %2484
        %v2486 = vmax.f32 %v2311, %v2400
        %2487 = vmax.xlane.f32.xlu0 %v2486
        %v2488 = vpop.xlane.xlu0 %2487
        %v2489 = vmax.f32 %v2313, %v2402
        %2490 = vmax.xlane.f32.xlu0 %v2489
        %v2491 = vpop.xlane.xlu0 %2490
        %v2492 = vmax.f32 %v2316, %v2405
        %2493 = vmax.xlane.f32.xlu0 %v2492
        %v2494 = vpop.xlane.xlu0 %2493
        %v2495 = vmax.f32 %v2318, %v2407
        %2496 = vmax.xlane.f32.xlu0 %v2495
        %v2497 = vpop.xlane.xlu0 %2496
        %v2498 = vmax.f32 %v2321, %v2410
        %2499 = vmax.xlane.f32.xlu0 %v2498
        %v2500 = vpop.xlane.xlu0 %2499
        %v2501 = vmax.f32 %v2323, %v2412
        %2502 = vmax.xlane.f32.xlu0 %v2501
        %v2503 = vpop.xlane.xlu0 %2502
        %v2504 = vmax.f32 %v2326, %v2415
        %2505 = vmax.xlane.f32.xlu0 %v2504
        %v2506 = vpop.xlane.xlu0 %2505
        %v2507 = vmax.f32 %v2328, %v2417
        %2508 = vmax.xlane.f32.xlu0 %v2507
        %v2509 = vpop.xlane.xlu0 %2508
        %v2510 = vmax.f32 %v2331, %v2420
        %2511 = vmax.xlane.f32.xlu0 %v2510
        %v2512 = vpop.xlane.xlu0 %2511
        %v2513 = vmax.f32 %v2333, %v2422
        %2514 = vmax.xlane.f32.xlu0 %v2513
        %v2515 = vpop.xlane.xlu0 %2514
        %v2516 = vmax.f32 %v2336, %v2425
        %2517 = vmax.xlane.f32.xlu0 %v2516
        %v2518 = vpop.xlane.xlu0 %2517
        %v2519 = vmax.f32 %v2338, %v2427
        %2520 = vmax.xlane.f32.xlu0 %v2519
        %v2521 = vpop.xlane.xlu0 %2520
        %v2522 = vmax.f32 %v2341, %v2430
        %2523 = vmax.xlane.f32.xlu0 %v2522
        %v2524 = vpop.xlane.xlu0 %2523
        %v2525 = vmax.f32 %v2343, %v2432
        %2526 = vmax.xlane.f32.xlu0 %v2525
        %v2527 = vpop.xlane.xlu0 %2526
        %v2528 = vmax.f32 %v2346, %v2435
        %2529 = vmax.xlane.f32.xlu0 %v2528
        %v2530 = vpop.xlane.xlu0 %2529
        %v2531 = vmax.f32 %v2348, %v2437
        %2532 = vmax.xlane.f32.xlu0 %v2531
        %v2533 = vpop.xlane.xlu0 %2532
        %v2534 = vmax.f32 %v2351, %v2440
        %2535 = vmax.xlane.f32.xlu0 %v2534
        %v2536 = vpop.xlane.xlu0 %2535
        %v2537 = vmax.f32 %v2353, %v2442
        %2538 = vmax.xlane.f32.xlu0 %v2537
        %v2539 = vpop.xlane.xlu0 %2538
        %v2540 = vsub.f32 %v2276, %v2446
        %v2541 = vsub.f32 %v2365, %v2446
        %v2542 = vsub.f32 %v2278, %v2449
        %v2543 = vsub.f32 %v2367, %v2449
        %v2544 = vsub.f32 %v2281, %v2452
        %v2545 = vsub.f32 %v2370, %v2452
        %v2546 = vsub.f32 %v2283, %v2455
        %v2547 = vsub.f32 %v2372, %v2455
        %v2548 = vsub.f32 %v2286, %v2458
        %v2549 = vsub.f32 %v2375, %v2458
        %v2550 = vsub.f32 %v2288, %v2461
        %v2551 = vsub.f32 %v2377, %v2461
        %v2552 = vsub.f32 %v2291, %v2464
        %v2553 = vsub.f32 %v2380, %v2464
        %v2554 = vsub.f32 %v2293, %v2467
        %v2555 = vsub.f32 %v2382, %v2467
        %v2556 = vsub.f32 %v2296, %v2470
        %v2557 = vsub.f32 %v2385, %v2470
        %v2558 = vsub.f32 %v2298, %v2473
        %v2559 = vsub.f32 %v2387, %v2473
        %v2560 = vsub.f32 %v2301, %v2476
        %v2561 = vsub.f32 %v2390, %v2476
        %v2562 = vsub.f32 %v2303, %v2479
        %v2563 = vsub.f32 %v2392, %v2479
        %v2564 = vsub.f32 %v2306, %v2482
        %v2565 = vsub.f32 %v2395, %v2482
        %v2566 = vsub.f32 %v2308, %v2485
        %v2567 = vsub.f32 %v2397, %v2485
        %v2568 = vsub.f32 %v2311, %v2488
        %v2569 = vsub.f32 %v2400, %v2488
        %v2570 = vsub.f32 %v2313, %v2491
        %v2571 = vsub.f32 %v2402, %v2491
        %v2572 = vsub.f32 %v2316, %v2494
        %v2573 = vsub.f32 %v2405, %v2494
        %v2574 = vsub.f32 %v2318, %v2497
        %v2575 = vsub.f32 %v2407, %v2497
        %v2576 = vsub.f32 %v2321, %v2500
        %v2577 = vsub.f32 %v2410, %v2500
        %v2578 = vsub.f32 %v2323, %v2503
        %v2579 = vsub.f32 %v2412, %v2503
        %v2580 = vsub.f32 %v2326, %v2506
        %v2581 = vsub.f32 %v2415, %v2506
        %v2582 = vsub.f32 %v2328, %v2509
        %v2583 = vsub.f32 %v2417, %v2509
        %v2584 = vsub.f32 %v2331, %v2512
        %v2585 = vsub.f32 %v2420, %v2512
        %v2586 = vsub.f32 %v2333, %v2515
        %v2587 = vsub.f32 %v2422, %v2515
        %v2588 = vsub.f32 %v2336, %v2518
        %v2589 = vsub.f32 %v2425, %v2518
        %v2590 = vsub.f32 %v2338, %v2521
        %v2591 = vsub.f32 %v2427, %v2521
        %v2592 = vsub.f32 %v2341, %v2524
        %v2593 = vsub.f32 %v2430, %v2524
        %v2594 = vsub.f32 %v2343, %v2527
        %v2595 = vsub.f32 %v2432, %v2527
        %v2596 = vsub.f32 %v2346, %v2530
        %v2597 = vsub.f32 %v2435, %v2530
        %v2598 = vsub.f32 %v2348, %v2533
        %v2599 = vsub.f32 %v2437, %v2533
        %v2600 = vsub.f32 %v2351, %v2536
        %v2601 = vsub.f32 %v2440, %v2536
        %v2602 = vsub.f32 %v2353, %v2539
        %v2603 = vsub.f32 %v2442, %v2539
        %v2604 = vmul.f32 %v2540, 1.442695
        %v2605 = vpow.pop %v2604
        %v2606 = vmul.f32 %v2541, 1.442695
        %v2607 = vpow.pop %v2606
        %v2608 = vmul.f32 %v2542, 1.442695
        %v2609 = vpow.pop %v2608
        %v2610 = vmul.f32 %v2543, 1.442695
        %v2611 = vpow.pop %v2610
        %v2612 = vmul.f32 %v2544, 1.442695
        %v2613 = vpow.pop %v2612
        %v2614 = vmul.f32 %v2545, 1.442695
        %v2615 = vpow.pop %v2614
        %v2616 = vmul.f32 %v2546, 1.442695
        %v2617 = vpow.pop %v2616
        %v2618 = vmul.f32 %v2547, 1.442695
        %v2619 = vpow.pop %v2618
        %v2620 = vmul.f32 %v2548, 1.442695
        %v2621 = vpow.pop %v2620
        %v2622 = vmul.f32 %v2549, 1.442695
        %v2623 = vpow.pop %v2622
        %v2624 = vmul.f32 %v2550, 1.442695
        %v2625 = vpow.pop %v2624
        %v2626 = vmul.f32 %v2551, 1.442695
        %v2627 = vpow.pop %v2626
        %v2628 = vmul.f32 %v2552, 1.442695
        %v2629 = vpow.pop %v2628
        %v2630 = vmul.f32 %v2553, 1.442695
        %v2631 = vpow.pop %v2630
        %v2632 = vmul.f32 %v2554, 1.442695
        %v2633 = vpow.pop %v2632
        %v2634 = vmul.f32 %v2555, 1.442695
        %v2635 = vpow.pop %v2634
        %v2636 = vmul.f32 %v2556, 1.442695
        %v2637 = vpow.pop %v2636
        %v2638 = vmul.f32 %v2557, 1.442695
        %v2639 = vpow.pop %v2638
        %v2640 = vmul.f32 %v2558, 1.442695
        %v2641 = vpow.pop %v2640
        %v2642 = vmul.f32 %v2559, 1.442695
        %v2643 = vpow.pop %v2642
        %v2644 = vmul.f32 %v2560, 1.442695
        %v2645 = vpow.pop %v2644
        %v2646 = vmul.f32 %v2561, 1.442695
        %v2647 = vpow.pop %v2646
        %v2648 = vmul.f32 %v2562, 1.442695
        %v2649 = vpow.pop %v2648
        %v2650 = vmul.f32 %v2563, 1.442695
        %v2651 = vpow.pop %v2650
        %v2652 = vmul.f32 %v2564, 1.442695
        %v2653 = vpow.pop %v2652
        %v2654 = vmul.f32 %v2565, 1.442695
        %v2655 = vpow.pop %v2654
        %v2656 = vmul.f32 %v2566, 1.442695
        %v2657 = vpow.pop %v2656
        %v2658 = vmul.f32 %v2567, 1.442695
        %v2659 = vpow.pop %v2658
        %v2660 = vmul.f32 %v2568, 1.442695
        %v2661 = vpow.pop %v2660
        %v2662 = vmul.f32 %v2569, 1.442695
        %v2663 = vpow.pop %v2662
        %v2664 = vmul.f32 %v2570, 1.442695
        %v2665 = vpow.pop %v2664
        %v2666 = vmul.f32 %v2571, 1.442695
        %v2667 = vpow.pop %v2666
        %v2668 = vmul.f32 %v2572, 1.442695
        %v2669 = vpow.pop %v2668
        %v2670 = vmul.f32 %v2573, 1.442695
        %v2671 = vpow.pop %v2670
        %v2672 = vmul.f32 %v2574, 1.442695
        %v2673 = vpow.pop %v2672
        %v2674 = vmul.f32 %v2575, 1.442695
        %v2675 = vpow.pop %v2674
        %v2676 = vmul.f32 %v2576, 1.442695
        %v2677 = vpow.pop %v2676
        %v2678 = vmul.f32 %v2577, 1.442695
        %v2679 = vpow.pop %v2678
        %v2680 = vmul.f32 %v2578, 1.442695
        %v2681 = vpow.pop %v2680
        %v2682 = vmul.f32 %v2579, 1.442695
        %v2683 = vpow.pop %v2682
        %v2684 = vmul.f32 %v2580, 1.442695
        %v2685 = vpow.pop %v2684
        %v2686 = vmul.f32 %v2581, 1.442695
        %v2687 = vpow.pop %v2686
        %v2688 = vmul.f32 %v2582, 1.442695
        %v2689 = vpow.pop %v2688
        %v2690 = vmul.f32 %v2583, 1.442695
        %v2691 = vpow.pop %v2690
        %v2692 = vmul.f32 %v2584, 1.442695
        %v2693 = vpow.pop %v2692
        %v2694 = vmul.f32 %v2585, 1.442695
        %v2695 = vpow.pop %v2694
        %v2696 = vmul.f32 %v2586, 1.442695
        %v2697 = vpow.pop %v2696
        %v2698 = vmul.f32 %v2587, 1.442695
        %v2699 = vpow.pop %v2698
        %v2700 = vmul.f32 %v2588, 1.442695
        %v2701 = vpow.pop %v2700
        %v2702 = vmul.f32 %v2589, 1.442695
        %v2703 = vpow.pop %v2702
        %v2704 = vmul.f32 %v2590, 1.442695
        %v2705 = vpow.pop %v2704
        %v2706 = vmul.f32 %v2591, 1.442695
        %v2707 = vpow.pop %v2706
        %v2708 = vmul.f32 %v2592, 1.442695
        %v2709 = vpow.pop %v2708
        %v2710 = vmul.f32 %v2593, 1.442695
        %v2711 = vpow.pop %v2710
        %v2712 = vmul.f32 %v2594, 1.442695
        %v2713 = vpow.pop %v2712
        %v2714 = vmul.f32 %v2595, 1.442695
        %v2715 = vpow.pop %v2714
        %v2716 = vmul.f32 %v2596, 1.442695
        %v2717 = vpow.pop %v2716
        %v2718 = vmul.f32 %v2597, 1.442695
        %v2719 = vpow.pop %v2718
        %v2720 = vmul.f32 %v2598, 1.442695
        %v2721 = vpow.pop %v2720
        %v2722 = vmul.f32 %v2599, 1.442695
        %v2723 = vpow.pop %v2722
        %v2724 = vmul.f32 %v2600, 1.442695
        %v2725 = vpow.pop %v2724
        %v2726 = vmul.f32 %v2601, 1.442695
        %v2727 = vpow.pop %v2726
        %v2728 = vmul.f32 %v2602, 1.442695
        %v2729 = vpow.pop %v2728
        %v2730 = vmul.f32 %v2603, 1.442695
        %v2731 = vpow.pop %v2730
        %v2732 = vadd.f32 %v2605, %v2607
        %2733 = vadd.xlane.f32.xlu0 %v2732
        %v2734 = vpop.xlane.xlu0 %2733
        %v2735 = vadd.f32 %v2609, %v2611
        %2736 = vadd.xlane.f32.xlu0 %v2735
        %v2737 = vpop.xlane.xlu0 %2736
        %v2738 = vadd.f32 %v2613, %v2615
        %2739 = vadd.xlane.f32.xlu0 %v2738
        %v2740 = vpop.xlane.xlu0 %2739
        %v2741 = vadd.f32 %v2617, %v2619
        %2742 = vadd.xlane.f32.xlu0 %v2741
        %v2743 = vpop.xlane.xlu0 %2742
        %v2744 = vadd.f32 %v2621, %v2623
        %2745 = vadd.xlane.f32.xlu0 %v2744
        %v2746 = vpop.xlane.xlu0 %2745
        %v2747 = vadd.f32 %v2625, %v2627
        %2748 = vadd.xlane.f32.xlu0 %v2747
        %v2749 = vpop.xlane.xlu0 %2748
        %v2750 = vadd.f32 %v2629, %v2631
        %2751 = vadd.xlane.f32.xlu0 %v2750
        %v2752 = vpop.xlane.xlu0 %2751
        %v2753 = vadd.f32 %v2633, %v2635
        %2754 = vadd.xlane.f32.xlu0 %v2753
        %v2755 = vpop.xlane.xlu0 %2754
        %v2756 = vadd.f32 %v2637, %v2639
        %2757 = vadd.xlane.f32.xlu0 %v2756
        %v2758 = vpop.xlane.xlu0 %2757
        %v2759 = vadd.f32 %v2641, %v2643
        %2760 = vadd.xlane.f32.xlu0 %v2759
        %v2761 = vpop.xlane.xlu0 %2760
        %v2762 = vadd.f32 %v2645, %v2647
        %2763 = vadd.xlane.f32.xlu0 %v2762
        %v2764 = vpop.xlane.xlu0 %2763
        %v2765 = vadd.f32 %v2649, %v2651
        %2766 = vadd.xlane.f32.xlu0 %v2765
        %v2767 = vpop.xlane.xlu0 %2766
        %v2768 = vadd.f32 %v2653, %v2655
        %2769 = vadd.xlane.f32.xlu0 %v2768
        %v2770 = vpop.xlane.xlu0 %2769
        %v2771 = vadd.f32 %v2657, %v2659
        %2772 = vadd.xlane.f32.xlu0 %v2771
        %v2773 = vpop.xlane.xlu0 %2772
        %v2774 = vadd.f32 %v2661, %v2663
        %2775 = vadd.xlane.f32.xlu0 %v2774
        %v2776 = vpop.xlane.xlu0 %2775
        %v2777 = vadd.f32 %v2665, %v2667
        %2778 = vadd.xlane.f32.xlu0 %v2777
        %v2779 = vpop.xlane.xlu0 %2778
        %v2780 = vadd.f32 %v2669, %v2671
        %2781 = vadd.xlane.f32.xlu0 %v2780
        %v2782 = vpop.xlane.xlu0 %2781
        %v2783 = vadd.f32 %v2673, %v2675
        %2784 = vadd.xlane.f32.xlu0 %v2783
        %v2785 = vpop.xlane.xlu0 %2784
        %v2786 = vadd.f32 %v2677, %v2679
        %2787 = vadd.xlane.f32.xlu0 %v2786
        %v2788 = vpop.xlane.xlu0 %2787
        %v2789 = vadd.f32 %v2681, %v2683
        %2790 = vadd.xlane.f32.xlu0 %v2789
        %v2791 = vpop.xlane.xlu0 %2790
        %v2792 = vadd.f32 %v2685, %v2687
        %2793 = vadd.xlane.f32.xlu0 %v2792
        %v2794 = vpop.xlane.xlu0 %2793
        %v2795 = vadd.f32 %v2689, %v2691
        %2796 = vadd.xlane.f32.xlu0 %v2795
        %v2797 = vpop.xlane.xlu0 %2796
        %v2798 = vadd.f32 %v2693, %v2695
        %2799 = vadd.xlane.f32.xlu0 %v2798
        %v2800 = vpop.xlane.xlu0 %2799
        %v2801 = vadd.f32 %v2697, %v2699
        %2802 = vadd.xlane.f32.xlu0 %v2801
        %v2803 = vpop.xlane.xlu0 %2802
        %v2804 = vadd.f32 %v2701, %v2703
        %2805 = vadd.xlane.f32.xlu0 %v2804
        %v2806 = vpop.xlane.xlu0 %2805
        %v2807 = vadd.f32 %v2705, %v2707
        %2808 = vadd.xlane.f32.xlu0 %v2807
        %v2809 = vpop.xlane.xlu0 %2808
        %v2810 = vadd.f32 %v2709, %v2711
        %2811 = vadd.xlane.f32.xlu0 %v2810
        %v2812 = vpop.xlane.xlu0 %2811
        %v2813 = vadd.f32 %v2713, %v2715
        %2814 = vadd.xlane.f32.xlu0 %v2813
        %v2815 = vpop.xlane.xlu0 %2814
        %v2816 = vadd.f32 %v2717, %v2719
        %2817 = vadd.xlane.f32.xlu0 %v2816
        %v2818 = vpop.xlane.xlu0 %2817
        %v2819 = vadd.f32 %v2721, %v2723
        %2820 = vadd.xlane.f32.xlu0 %v2819
        %v2821 = vpop.xlane.xlu0 %2820
        %v2822 = vadd.f32 %v2725, %v2727
        %2823 = vadd.xlane.f32.xlu0 %v2822
        %v2824 = vpop.xlane.xlu0 %2823
        %v2825 = vadd.f32 %v2729, %v2731
        %2826 = vadd.xlane.f32.xlu0 %v2825
        %v2827 = vpop.xlane.xlu0 %2826
        %v2828 = vpack.c.bf16 %v2609, %v2605
        %v2829 = vpack.c.bf16 %v2611, %v2607
        %v2830 = vpack.c.bf16 %v2617, %v2613
        %v2831 = vpack.c.bf16 %v2619, %v2615
        %v2832 = vpack.c.bf16 %v2625, %v2621
        %v2833 = vpack.c.bf16 %v2627, %v2623
        %v2834 = vpack.c.bf16 %v2633, %v2629
        %v2835 = vpack.c.bf16 %v2635, %v2631
        %v2836 = vpack.c.bf16 %v2641, %v2637
        %v2837 = vpack.c.bf16 %v2643, %v2639
        %v2838 = vpack.c.bf16 %v2649, %v2645
        %v2839 = vpack.c.bf16 %v2651, %v2647
        %v2840 = vpack.c.bf16 %v2657, %v2653
        %v2841 = vpack.c.bf16 %v2659, %v2655
        %v2842 = vpack.c.bf16 %v2665, %v2661
        %v2843 = vpack.c.bf16 %v2667, %v2663
        %v2844 = vpack.c.bf16 %v2673, %v2669
        %v2845 = vpack.c.bf16 %v2675, %v2671
        %v2846 = vpack.c.bf16 %v2681, %v2677
        %v2847 = vpack.c.bf16 %v2683, %v2679
        %v2848 = vpack.c.bf16 %v2689, %v2685
        %v2849 = vpack.c.bf16 %v2691, %v2687
        %v2850 = vpack.c.bf16 %v2697, %v2693
        %v2851 = vpack.c.bf16 %v2699, %v2695
        %v2852 = vpack.c.bf16 %v2705, %v2701
        %v2853 = vpack.c.bf16 %v2707, %v2703
        %v2854 = vpack.c.bf16 %v2713, %v2709
        %v2855 = vpack.c.bf16 %v2715, %v2711
        %v2856 = vpack.c.bf16 %v2721, %v2717
        %v2857 = vpack.c.bf16 %v2723, %v2719
        %v2858 = vpack.c.bf16 %v2729, %v2725
        %v2859 = vpack.c.bf16 %v2731, %v2727
        %2860 = vrot.lane.b32.xlu0 %v1800, 96
        %v2861 = vpop.permute.xlu0 %2860
        %2862 = vrot.lane.b32.xlu0 %v1801, 96
        %v2863 = vpop.permute.xlu0 %2862
        %2864 = vrot.lane.b32.xlu0 %v1802, 96
        %v2865 = vpop.permute.xlu0 %2864
        %2866 = vrot.lane.b32.xlu0 %v1803, 96
        %v2867 = vpop.permute.xlu0 %2866
        %2868 = vrot.lane.b32.xlu0 %v1804, 96
        %v2869 = vpop.permute.xlu0 %2868
        %2870 = vrot.lane.b32.xlu0 %v1805, 96
        %v2871 = vpop.permute.xlu0 %2870
        %2872 = vrot.lane.b32.xlu0 %v1806, 96
        %v2873 = vpop.permute.xlu0 %2872
        %2874 = vrot.lane.b32.xlu0 %v1807, 96
        %v2875 = vpop.permute.xlu0 %2874
        %2876 = vrot.lane.b32.xlu0 %v1808, 96
        %v2877 = vpop.permute.xlu0 %2876
        %2878 = vrot.lane.b32.xlu0 %v1809, 96
        %v2879 = vpop.permute.xlu0 %2878
        %2880 = vrot.lane.b32.xlu0 %v1810, 96
        %v2881 = vpop.permute.xlu0 %2880
        %2882 = vrot.lane.b32.xlu0 %v1811, 96
        %v2883 = vpop.permute.xlu0 %2882
        %2884 = vrot.lane.b32.xlu0 %v1812, 96
        %v2885 = vpop.permute.xlu0 %2884
        %2886 = vrot.lane.b32.xlu0 %v1813, 96
        %v2887 = vpop.permute.xlu0 %2886
        %2888 = vrot.lane.b32.xlu0 %v1814, 96
        %v2889 = vpop.permute.xlu0 %2888
        %2890 = vrot.lane.b32.xlu0 %v1815, 96
        %v2891 = vpop.permute.xlu0 %2890
        %2908 = vmatpush.bf16.msra.mxu0 %v2875
        %2909 = vmatpush.bf16.msra.mxu0 %v2873
        %2910 = vmatpush.bf16.msra.mxu0 %v2871
        %2911 = vmatpush.bf16.msra.mxu0 %v2869
        %2912 = vmatpush.bf16.msra.mxu0 %v2867
        %2913 = vmatpush.bf16.msra.mxu0 %v2865
        %2914 = vmatpush.bf16.msra.mxu0 %v2863
        %2915 = vmatpush.bf16.msra.mxu0 %v2861
        %2916 = vmatmul.bf16.gmra.mxu0 %v2828
        %v2917 = vpop.f32.mrf.mxu0
        %v2918 = vadd.f32 0.0, %v2917
        %v2919 = vpop.f32.mrf.mxu0
        %v2920 = vadd.f32 0.0, %v2919
        %2921 = vmatmul.bf16.gmra.mxu0 %v2830
        %v2922 = vpop.f32.mrf.mxu0
        %v2923 = vadd.f32 0.0, %v2922
        %v2924 = vpop.f32.mrf.mxu0
        %v2925 = vadd.f32 0.0, %v2924
        %2926 = vmatmul.bf16.gmra.mxu0 %v2832
        %v2927 = vpop.f32.mrf.mxu0
        %v2928 = vadd.f32 0.0, %v2927
        %v2929 = vpop.f32.mrf.mxu0
        %v2930 = vadd.f32 0.0, %v2929
        %2931 = vmatmul.bf16.gmra.mxu0 %v2834
        %v2932 = vpop.f32.mrf.mxu0
        %v2933 = vadd.f32 0.0, %v2932
        %v2934 = vpop.f32.mrf.mxu0
        %v2935 = vadd.f32 0.0, %v2934
        %2936 = vmatmul.bf16.gmra.mxu0 %v2836
        %v2937 = vpop.f32.mrf.mxu0
        %v2938 = vadd.f32 0.0, %v2937
        %v2939 = vpop.f32.mrf.mxu0
        %v2940 = vadd.f32 0.0, %v2939
        %2941 = vmatmul.bf16.gmra.mxu0 %v2838
        %v2942 = vpop.f32.mrf.mxu0
        %v2943 = vadd.f32 0.0, %v2942
        %v2944 = vpop.f32.mrf.mxu0
        %v2945 = vadd.f32 0.0, %v2944
        %2946 = vmatmul.bf16.gmra.mxu0 %v2840
        %v2947 = vpop.f32.mrf.mxu0
        %v2948 = vadd.f32 0.0, %v2947
        %v2949 = vpop.f32.mrf.mxu0
        %v2950 = vadd.f32 0.0, %v2949
        %2951 = vmatmul.bf16.gmra.mxu0 %v2842
        %v2952 = vpop.f32.mrf.mxu0
        %v2953 = vadd.f32 0.0, %v2952
        %v2954 = vpop.f32.mrf.mxu0
        %v2955 = vadd.f32 0.0, %v2954
        %2956 = vmatmul.bf16.gmra.mxu0 %v2844
        %v2957 = vpop.f32.mrf.mxu0
        %v2958 = vadd.f32 0.0, %v2957
        %v2959 = vpop.f32.mrf.mxu0
        %v2960 = vadd.f32 0.0, %v2959
        %2961 = vmatmul.bf16.gmra.mxu0 %v2846
        %v2962 = vpop.f32.mrf.mxu0
        %v2963 = vadd.f32 0.0, %v2962
        %v2964 = vpop.f32.mrf.mxu0
        %v2965 = vadd.f32 0.0, %v2964
        %2966 = vmatmul.bf16.gmra.mxu0 %v2848
        %v2967 = vpop.f32.mrf.mxu0
        %v2968 = vadd.f32 0.0, %v2967
        %v2969 = vpop.f32.mrf.mxu0
        %v2970 = vadd.f32 0.0, %v2969
        %2971 = vmatmul.bf16.gmra.mxu0 %v2850
        %v2972 = vpop.f32.mrf.mxu0
        %v2973 = vadd.f32 0.0, %v2972
        %v2974 = vpop.f32.mrf.mxu0
        %v2975 = vadd.f32 0.0, %v2974
        %2976 = vmatmul.bf16.gmra.mxu0 %v2852
        %v2977 = vpop.f32.mrf.mxu0
        %v2978 = vadd.f32 0.0, %v2977
        %v2979 = vpop.f32.mrf.mxu0
        %v2980 = vadd.f32 0.0, %v2979
        %2981 = vmatmul.bf16.gmra.mxu0 %v2854
        %v2982 = vpop.f32.mrf.mxu0
        %v2983 = vadd.f32 0.0, %v2982
        %v2984 = vpop.f32.mrf.mxu0
        %v2985 = vadd.f32 0.0, %v2984
        %2986 = vmatmul.bf16.gmra.mxu0 %v2856
        %v2987 = vpop.f32.mrf.mxu0
        %v2988 = vadd.f32 0.0, %v2987
        %v2989 = vpop.f32.mrf.mxu0
        %v2990 = vadd.f32 0.0, %v2989
        %2991 = vmatmul.bf16.gmra.mxu0 %v2858
        %v2992 = vpop.f32.mrf.mxu0
        %v2993 = vadd.f32 0.0, %v2992
        %v2994 = vpop.f32.mrf.mxu0
        %v2995 = vadd.f32 0.0, %v2994
        %2996 = vdwg.mxu0
        %2997 = vmatpush.bf16.msra.mxu0 %v2891
        %2998 = vmatpush.bf16.msra.mxu0 %v2889
        %2999 = vmatpush.bf16.msra.mxu0 %v2887
        %3000 = vmatpush.bf16.msra.mxu0 %v2885
        %3001 = vmatpush.bf16.msra.mxu0 %v2883
        %3002 = vmatpush.bf16.msra.mxu0 %v2881
        %3003 = vmatpush.bf16.msra.mxu0 %v2879
        %3004 = vmatpush.bf16.msra.mxu0 %v2877
        %3005 = vmatmul.bf16.gmra.mxu0 %v2829
        %v3006 = vpop.f32.mrf.mxu0
        %v3007 = vadd.f32 %v2918, %v3006
        %v3008 = vpop.f32.mrf.mxu0
        %v3009 = vadd.f32 %v2920, %v3008
        %3010 = vmatmul.bf16.gmra.mxu0 %v2831
        %v3011 = vpop.f32.mrf.mxu0
        %v3012 = vadd.f32 %v2923, %v3011
        %v3013 = vpop.f32.mrf.mxu0
        %v3014 = vadd.f32 %v2925, %v3013
        %3015 = vmatmul.bf16.gmra.mxu0 %v2833
        %v3016 = vpop.f32.mrf.mxu0
        %v3017 = vadd.f32 %v2928, %v3016
        %v3018 = vpop.f32.mrf.mxu0
        %v3019 = vadd.f32 %v2930, %v3018
        %3020 = vmatmul.bf16.gmra.mxu0 %v2835
        %v3021 = vpop.f32.mrf.mxu0
        %v3022 = vadd.f32 %v2933, %v3021
        %v3023 = vpop.f32.mrf.mxu0
        %v3024 = vadd.f32 %v2935, %v3023
        %3025 = vmatmul.bf16.gmra.mxu0 %v2837
        %v3026 = vpop.f32.mrf.mxu0
        %v3027 = vadd.f32 %v2938, %v3026
        %v3028 = vpop.f32.mrf.mxu0
        %v3029 = vadd.f32 %v2940, %v3028
        %3030 = vmatmul.bf16.gmra.mxu0 %v2839
        %v3031 = vpop.f32.mrf.mxu0
        %v3032 = vadd.f32 %v2943, %v3031
        %v3033 = vpop.f32.mrf.mxu0
        %v3034 = vadd.f32 %v2945, %v3033
        %3035 = vmatmul.bf16.gmra.mxu0 %v2841
        %v3036 = vpop.f32.mrf.mxu0
        %v3037 = vadd.f32 %v2948, %v3036
        %v3038 = vpop.f32.mrf.mxu0
        %v3039 = vadd.f32 %v2950, %v3038
        %3040 = vmatmul.bf16.gmra.mxu0 %v2843
        %v3041 = vpop.f32.mrf.mxu0
        %v3042 = vadd.f32 %v2953, %v3041
        %v3043 = vpop.f32.mrf.mxu0
        %v3044 = vadd.f32 %v2955, %v3043
        %3045 = vmatmul.bf16.gmra.mxu0 %v2845
        %v3046 = vpop.f32.mrf.mxu0
        %v3047 = vadd.f32 %v2958, %v3046
        %v3048 = vpop.f32.mrf.mxu0
        %v3049 = vadd.f32 %v2960, %v3048
        %3050 = vmatmul.bf16.gmra.mxu0 %v2847
        %v3051 = vpop.f32.mrf.mxu0
        %v3052 = vadd.f32 %v2963, %v3051
        %v3053 = vpop.f32.mrf.mxu0
        %v3054 = vadd.f32 %v2965, %v3053
        %3055 = vmatmul.bf16.gmra.mxu0 %v2849
        %v3056 = vpop.f32.mrf.mxu0
        %v3057 = vadd.f32 %v2968, %v3056
        %v3058 = vpop.f32.mrf.mxu0
        %v3059 = vadd.f32 %v2970, %v3058
        %3060 = vmatmul.bf16.gmra.mxu0 %v2851
        %v3061 = vpop.f32.mrf.mxu0
        %v3062 = vadd.f32 %v2973, %v3061
        %v3063 = vpop.f32.mrf.mxu0
        %v3064 = vadd.f32 %v2975, %v3063
        %3065 = vmatmul.bf16.gmra.mxu0 %v2853
        %v3066 = vpop.f32.mrf.mxu0
        %v3067 = vadd.f32 %v2978, %v3066
        %v3068 = vpop.f32.mrf.mxu0
        %v3069 = vadd.f32 %v2980, %v3068
        %3070 = vmatmul.bf16.gmra.mxu0 %v2855
        %v3071 = vpop.f32.mrf.mxu0
        %v3072 = vadd.f32 %v2983, %v3071
        %v3073 = vpop.f32.mrf.mxu0
        %v3074 = vadd.f32 %v2985, %v3073
        %3075 = vmatmul.bf16.gmra.mxu0 %v2857
        %v3076 = vpop.f32.mrf.mxu0
        %v3077 = vadd.f32 %v2988, %v3076
        %v3078 = vpop.f32.mrf.mxu0
        %v3079 = vadd.f32 %v2990, %v3078
        %3080 = vmatmul.bf16.gmra.mxu0 %v2859
        %v3081 = vpop.f32.mrf.mxu0
        %v3082 = vadd.f32 %v2993, %v3081
        %v3083 = vpop.f32.mrf.mxu0
        %v3084 = vadd.f32 %v2995, %v3083
        %3085 = vdwg.mxu0
        %v3086 = vrcp.pop %v2734
        %v3087 = vrcp.pop %v2737
        %v3088 = vrcp.pop %v2740
        %v3089 = vrcp.pop %v2743
        %v3090 = vrcp.pop %v2746
        %v3091 = vrcp.pop %v2749
        %v3092 = vrcp.pop %v2752
        %v3093 = vrcp.pop %v2755
        %v3094 = vrcp.pop %v2758
        %v3095 = vrcp.pop %v2761
        %v3096 = vrcp.pop %v2764
        %v3097 = vrcp.pop %v2767
        %v3098 = vrcp.pop %v2770
        %v3099 = vrcp.pop %v2773
        %v3100 = vrcp.pop %v2776
        %v3101 = vrcp.pop %v2779
        %v3102 = vrcp.pop %v2782
        %v3103 = vrcp.pop %v2785
        %v3104 = vrcp.pop %v2788
        %v3105 = vrcp.pop %v2791
        %v3106 = vrcp.pop %v2794
        %v3107 = vrcp.pop %v2797
        %v3108 = vrcp.pop %v2800
        %v3109 = vrcp.pop %v2803
        %v3110 = vrcp.pop %v2806
        %v3111 = vrcp.pop %v2809
        %v3112 = vrcp.pop %v2812
        %v3113 = vrcp.pop %v2815
        %v3114 = vrcp.pop %v2818
        %v3115 = vrcp.pop %v2821
        %v3116 = vrcp.pop %v2824
        %v3117 = vrcp.pop %v2827
        %v3118 = vmul.f32 %v3007, %v3086
        %v3119 = vmul.f32 %v3009, %v3087
        %v3120 = vmul.f32 %v3012, %v3088
        %v3121 = vmul.f32 %v3014, %v3089
        %v3122 = vmul.f32 %v3017, %v3090
        %v3123 = vmul.f32 %v3019, %v3091
        %v3124 = vmul.f32 %v3022, %v3092
        %v3125 = vmul.f32 %v3024, %v3093
        %v3126 = vmul.f32 %v3027, %v3094
        %v3127 = vmul.f32 %v3029, %v3095
        %v3128 = vmul.f32 %v3032, %v3096
        %v3129 = vmul.f32 %v3034, %v3097
        %v3130 = vmul.f32 %v3037, %v3098
        %v3131 = vmul.f32 %v3039, %v3099
        %v3132 = vmul.f32 %v3042, %v3100
        %v3133 = vmul.f32 %v3044, %v3101
        %v3134 = vmul.f32 %v3047, %v3102
        %v3135 = vmul.f32 %v3049, %v3103
        %v3136 = vmul.f32 %v3052, %v3104
        %v3137 = vmul.f32 %v3054, %v3105
        %v3138 = vmul.f32 %v3057, %v3106
        %v3139 = vmul.f32 %v3059, %v3107
        %v3140 = vmul.f32 %v3062, %v3108
        %v3141 = vmul.f32 %v3064, %v3109
        %v3142 = vmul.f32 %v3067, %v3110
        %v3143 = vmul.f32 %v3069, %v3111
        %v3144 = vmul.f32 %v3072, %v3112
        %v3145 = vmul.f32 %v3074, %v3113
        %v3146 = vmul.f32 %v3077, %v3114
        %v3147 = vmul.f32 %v3079, %v3115
        %v3148 = vmul.f32 %v3082, %v3116
        %v3149 = vmul.f32 %v3084, %v3117
        %v3150 = vpack.c.bf16 %v3118, %v3118
        %v3151 = vpack.c.bf16 %v3119, %v3119
        %v3152 = vpack.c.bf16 %v3120, %v3120
        %v3153 = vpack.c.bf16 %v3121, %v3121
        %v3154 = vpack.c.bf16 %v3122, %v3122
        %v3155 = vpack.c.bf16 %v3123, %v3123
        %v3156 = vpack.c.bf16 %v3124, %v3124
        %v3157 = vpack.c.bf16 %v3125, %v3125
        %v3158 = vpack.c.bf16 %v3126, %v3126
        %v3159 = vpack.c.bf16 %v3127, %v3127
        %v3160 = vpack.c.bf16 %v3128, %v3128
        %v3161 = vpack.c.bf16 %v3129, %v3129
        %v3162 = vpack.c.bf16 %v3130, %v3130
        %v3163 = vpack.c.bf16 %v3131, %v3131
        %v3164 = vpack.c.bf16 %v3132, %v3132
        %v3165 = vpack.c.bf16 %v3133, %v3133
        %v3166 = vpack.c.bf16 %v3134, %v3134
        %v3167 = vpack.c.bf16 %v3135, %v3135
        %v3168 = vpack.c.bf16 %v3136, %v3136
        %v3169 = vpack.c.bf16 %v3137, %v3137
        %v3170 = vpack.c.bf16 %v3138, %v3138
        %v3171 = vpack.c.bf16 %v3139, %v3139
        %v3172 = vpack.c.bf16 %v3140, %v3140
        %v3173 = vpack.c.bf16 %v3141, %v3141
        %v3174 = vpack.c.bf16 %v3142, %v3142
        %v3175 = vpack.c.bf16 %v3143, %v3143
        %v3176 = vpack.c.bf16 %v3144, %v3144
        %v3177 = vpack.c.bf16 %v3145, %v3145
        %v3178 = vpack.c.bf16 %v3146, %v3146
        %v3179 = vpack.c.bf16 %v3147, %v3147
        %v3180 = vpack.c.bf16 %v3148, %v3148
        %v3181 = vpack.c.bf16 %v3149, %v3149
        %3182 = vrot.lane.b32.xlu0 %v949, 64
        %v3183 = vpop.permute.xlu0 %3182
        %3184 = vrot.lane.b32.xlu0 %v950, 64
        %v3185 = vpop.permute.xlu0 %3184
        %3186 = vrot.lane.b32.xlu0 %v951, 64
        %v3187 = vpop.permute.xlu0 %3186
        %3188 = vrot.lane.b32.xlu0 %v952, 64
        %v3189 = vpop.permute.xlu0 %3188
        %3190 = vrot.lane.b32.xlu0 %v953, 64
        %v3191 = vpop.permute.xlu0 %3190
        %3192 = vrot.lane.b32.xlu0 %v954, 64
        %v3193 = vpop.permute.xlu0 %3192
        %3194 = vrot.lane.b32.xlu0 %v955, 64
        %v3195 = vpop.permute.xlu0 %3194
        %3196 = vrot.lane.b32.xlu0 %v956, 64
        %v3197 = vpop.permute.xlu0 %3196
        %3198 = vrot.lane.b32.xlu0 %v957, 64
        %v3199 = vpop.permute.xlu0 %3198
        %3200 = vrot.lane.b32.xlu0 %v958, 64
        %v3201 = vpop.permute.xlu0 %3200
        %3202 = vrot.lane.b32.xlu0 %v959, 64
        %v3203 = vpop.permute.xlu0 %3202
        %3204 = vrot.lane.b32.xlu0 %v960, 64
        %v3205 = vpop.permute.xlu0 %3204
        %3206 = vrot.lane.b32.xlu0 %v961, 64
        %v3207 = vpop.permute.xlu0 %3206
        %3208 = vrot.lane.b32.xlu0 %v962, 64
        %v3209 = vpop.permute.xlu0 %3208
        %3210 = vrot.lane.b32.xlu0 %v963, 64
        %v3211 = vpop.permute.xlu0 %3210
        %3212 = vrot.lane.b32.xlu0 %v964, 64
        %v3213 = vpop.permute.xlu0 %3212
        %3214 = vrot.lane.b32.xlu0 %v1029, 64
        %v3215 = vpop.permute.xlu0 %3214
        %3216 = vrot.lane.b32.xlu0 %v1030, 64
        %v3217 = vpop.permute.xlu0 %3216
        %3218 = vrot.lane.b32.xlu0 %v1031, 64
        %v3219 = vpop.permute.xlu0 %3218
        %3220 = vrot.lane.b32.xlu0 %v1032, 64
        %v3221 = vpop.permute.xlu0 %3220
        %3222 = vrot.lane.b32.xlu0 %v1033, 64
        %v3223 = vpop.permute.xlu0 %3222
        %3224 = vrot.lane.b32.xlu0 %v1034, 64
        %v3225 = vpop.permute.xlu0 %3224
        %3226 = vrot.lane.b32.xlu0 %v1035, 64
        %v3227 = vpop.permute.xlu0 %3226
        %3228 = vrot.lane.b32.xlu0 %v1036, 64
        %v3229 = vpop.permute.xlu0 %3228
        %3230 = vrot.lane.b32.xlu0 %v1037, 64
        %v3231 = vpop.permute.xlu0 %3230
        %3232 = vrot.lane.b32.xlu0 %v1038, 64
        %v3233 = vpop.permute.xlu0 %3232
        %3234 = vrot.lane.b32.xlu0 %v1039, 64
        %v3235 = vpop.permute.xlu0 %3234
        %3236 = vrot.lane.b32.xlu0 %v1040, 64
        %v3237 = vpop.permute.xlu0 %3236
        %3238 = vrot.lane.b32.xlu0 %v1041, 64
        %v3239 = vpop.permute.xlu0 %3238
        %3240 = vrot.lane.b32.xlu0 %v1042, 64
        %v3241 = vpop.permute.xlu0 %3240
        %3242 = vrot.lane.b32.xlu0 %v1043, 64
        %v3243 = vpop.permute.xlu0 %3242
        %3244 = vrot.lane.b32.xlu0 %v1044, 64
        %v3245 = vpop.permute.xlu0 %3244
        %v3247 = vsel %vm1045, %v3183, 0
        %v3250 = vsel %vm1045, %v3185, 0
        %v3253 = vsel %vm1045, %v3187, 0
        %v3256 = vsel %vm1045, %v3189, 0
        %v3259 = vsel %vm1045, %v3191, 0
        %v3262 = vsel %vm1045, %v3193, 0
        %v3265 = vsel %vm1045, %v3195, 0
        %v3268 = vsel %vm1045, %v3197, 0
        %v3271 = vsel %vm1045, %v3199, 0
        %v3274 = vsel %vm1045, %v3201, 0
        %v3277 = vsel %vm1045, %v3203, 0
        %v3280 = vsel %vm1045, %v3205, 0
        %v3283 = vsel %vm1045, %v3207, 0
        %v3286 = vsel %vm1045, %v3209, 0
        %v3289 = vsel %vm1045, %v3211, 0
        %v3292 = vsel %vm1045, %v3213, 0
        %v3295 = vsel %vm1045, %v3215, 0
        %v3298 = vsel %vm1045, %v3217, 0
        %v3301 = vsel %vm1045, %v3219, 0
        %v3304 = vsel %vm1045, %v3221, 0
        %v3307 = vsel %vm1045, %v3223, 0
        %v3310 = vsel %vm1045, %v3225, 0
        %v3313 = vsel %vm1045, %v3227, 0
        %v3316 = vsel %vm1045, %v3229, 0
        %v3319 = vsel %vm1045, %v3231, 0
        %v3322 = vsel %vm1045, %v3233, 0
        %v3325 = vsel %vm1045, %v3235, 0
        %v3328 = vsel %vm1045, %v3237, 0
        %v3331 = vsel %vm1045, %v3239, 0
        %v3334 = vsel %vm1045, %v3241, 0
        %v3337 = vsel %vm1045, %v3243, 0
        %v3340 = vsel %vm1045, %v3245, 0
        %3342 = vmatpush.bf16.xpose.msra.mxu0 %v3316
        %3343 = vmatpush.bf16.xpose.msra.mxu0 %v3313
        %3344 = vmatpush.bf16.xpose.msra.mxu0 %v3310
        %3345 = vmatpush.bf16.xpose.msra.mxu0 %v3307
        %3346 = vmatpush.bf16.xpose.msra.mxu0 %v3304
        %3347 = vmatpush.bf16.xpose.msra.mxu0 %v3301
        %3348 = vmatpush.bf16.xpose.msra.mxu0 %v3298
        %3349 = vmatpush.bf16.xpose.msra.mxu0 %v3295
        %3350 = vmatmul.bf16.gmra.mxu0 %v3247
        %v3351 = vpop.f32.mrf.mxu0
        %v3352 = vadd.f32 0.0, %v3351
        %v3353 = vpop.f32.mrf.mxu0
        %v3354 = vadd.f32 0.0, %v3353
        %3355 = vmatmul.bf16.gmra.mxu0 %v3250
        %v3356 = vpop.f32.mrf.mxu0
        %v3357 = vadd.f32 0.0, %v3356
        %v3358 = vpop.f32.mrf.mxu0
        %v3359 = vadd.f32 0.0, %v3358
        %3360 = vmatmul.bf16.gmra.mxu0 %v3253
        %v3361 = vpop.f32.mrf.mxu0
        %v3362 = vadd.f32 0.0, %v3361
        %v3363 = vpop.f32.mrf.mxu0
        %v3364 = vadd.f32 0.0, %v3363
        %3365 = vmatmul.bf16.gmra.mxu0 %v3256
        %v3366 = vpop.f32.mrf.mxu0
        %v3367 = vadd.f32 0.0, %v3366
        %v3368 = vpop.f32.mrf.mxu0
        %v3369 = vadd.f32 0.0, %v3368
        %3370 = vmatmul.bf16.gmra.mxu0 %v3259
        %v3371 = vpop.f32.mrf.mxu0
        %v3372 = vadd.f32 0.0, %v3371
        %v3373 = vpop.f32.mrf.mxu0
        %v3374 = vadd.f32 0.0, %v3373
        %3375 = vmatmul.bf16.gmra.mxu0 %v3262
        %v3376 = vpop.f32.mrf.mxu0
        %v3377 = vadd.f32 0.0, %v3376
        %v3378 = vpop.f32.mrf.mxu0
        %v3379 = vadd.f32 0.0, %v3378
        %3380 = vmatmul.bf16.gmra.mxu0 %v3265
        %v3381 = vpop.f32.mrf.mxu0
        %v3382 = vadd.f32 0.0, %v3381
        %v3383 = vpop.f32.mrf.mxu0
        %v3384 = vadd.f32 0.0, %v3383
        %3385 = vmatmul.bf16.gmra.mxu0 %v3268
        %v3386 = vpop.f32.mrf.mxu0
        %v3387 = vadd.f32 0.0, %v3386
        %v3388 = vpop.f32.mrf.mxu0
        %v3389 = vadd.f32 0.0, %v3388
        %3390 = vmatmul.bf16.gmra.mxu0 %v3271
        %v3391 = vpop.f32.mrf.mxu0
        %v3392 = vadd.f32 0.0, %v3391
        %v3393 = vpop.f32.mrf.mxu0
        %v3394 = vadd.f32 0.0, %v3393
        %3395 = vmatmul.bf16.gmra.mxu0 %v3274
        %v3396 = vpop.f32.mrf.mxu0
        %v3397 = vadd.f32 0.0, %v3396
        %v3398 = vpop.f32.mrf.mxu0
        %v3399 = vadd.f32 0.0, %v3398
        %3400 = vmatmul.bf16.gmra.mxu0 %v3277
        %v3401 = vpop.f32.mrf.mxu0
        %v3402 = vadd.f32 0.0, %v3401
        %v3403 = vpop.f32.mrf.mxu0
        %v3404 = vadd.f32 0.0, %v3403
        %3405 = vmatmul.bf16.gmra.mxu0 %v3280
        %v3406 = vpop.f32.mrf.mxu0
        %v3407 = vadd.f32 0.0, %v3406
        %v3408 = vpop.f32.mrf.mxu0
        %v3409 = vadd.f32 0.0, %v3408
        %3410 = vmatmul.bf16.gmra.mxu0 %v3283
        %v3411 = vpop.f32.mrf.mxu0
        %v3412 = vadd.f32 0.0, %v3411
        %v3413 = vpop.f32.mrf.mxu0
        %v3414 = vadd.f32 0.0, %v3413
        %3415 = vmatmul.bf16.gmra.mxu0 %v3286
        %v3416 = vpop.f32.mrf.mxu0
        %v3417 = vadd.f32 0.0, %v3416
        %v3418 = vpop.f32.mrf.mxu0
        %v3419 = vadd.f32 0.0, %v3418
        %3420 = vmatmul.bf16.gmra.mxu0 %v3289
        %v3421 = vpop.f32.mrf.mxu0
        %v3422 = vadd.f32 0.0, %v3421
        %v3423 = vpop.f32.mrf.mxu0
        %v3424 = vadd.f32 0.0, %v3423
        %3425 = vmatmul.bf16.gmra.mxu0 %v3292
        %v3426 = vpop.f32.mrf.mxu0
        %v3427 = vadd.f32 0.0, %v3426
        %v3428 = vpop.f32.mrf.mxu0
        %v3429 = vadd.f32 0.0, %v3428
        %3430 = vdwg.mxu0
        %3431 = vmatpush.bf16.xpose.msra.mxu0 %v3340
        %3432 = vmatpush.bf16.xpose.msra.mxu0 %v3337
        %3433 = vmatpush.bf16.xpose.msra.mxu0 %v3334
        %3434 = vmatpush.bf16.xpose.msra.mxu0 %v3331
        %3435 = vmatpush.bf16.xpose.msra.mxu0 %v3328
        %3436 = vmatpush.bf16.xpose.msra.mxu0 %v3325
        %3437 = vmatpush.bf16.xpose.msra.mxu0 %v3322
        %3438 = vmatpush.bf16.xpose.msra.mxu0 %v3319
        %3439 = vmatmul.bf16.gmra.mxu0 %v3247
        %v3440 = vpop.f32.mrf.mxu0
        %v3441 = vadd.f32 0.0, %v3440
        %v3442 = vpop.f32.mrf.mxu0
        %v3443 = vadd.f32 0.0, %v3442
        %3444 = vmatmul.bf16.gmra.mxu0 %v3250
        %v3445 = vpop.f32.mrf.mxu0
        %v3446 = vadd.f32 0.0, %v3445
        %v3447 = vpop.f32.mrf.mxu0
        %v3448 = vadd.f32 0.0, %v3447
        %3449 = vmatmul.bf16.gmra.mxu0 %v3253
        %v3450 = vpop.f32.mrf.mxu0
        %v3451 = vadd.f32 0.0, %v3450
        %v3452 = vpop.f32.mrf.mxu0
        %v3453 = vadd.f32 0.0, %v3452
        %3454 = vmatmul.bf16.gmra.mxu0 %v3256
        %v3455 = vpop.f32.mrf.mxu0
        %v3456 = vadd.f32 0.0, %v3455
        %v3457 = vpop.f32.mrf.mxu0
        %v3458 = vadd.f32 0.0, %v3457
        %3459 = vmatmul.bf16.gmra.mxu0 %v3259
        %v3460 = vpop.f32.mrf.mxu0
        %v3461 = vadd.f32 0.0, %v3460
        %v3462 = vpop.f32.mrf.mxu0
        %v3463 = vadd.f32 0.0, %v3462
        %3464 = vmatmul.bf16.gmra.mxu0 %v3262
        %v3465 = vpop.f32.mrf.mxu0
        %v3466 = vadd.f32 0.0, %v3465
        %v3467 = vpop.f32.mrf.mxu0
        %v3468 = vadd.f32 0.0, %v3467
        %3469 = vmatmul.bf16.gmra.mxu0 %v3265
        %v3470 = vpop.f32.mrf.mxu0
        %v3471 = vadd.f32 0.0, %v3470
        %v3472 = vpop.f32.mrf.mxu0
        %v3473 = vadd.f32 0.0, %v3472
        %3474 = vmatmul.bf16.gmra.mxu0 %v3268
        %v3475 = vpop.f32.mrf.mxu0
        %v3476 = vadd.f32 0.0, %v3475
        %v3477 = vpop.f32.mrf.mxu0
        %v3478 = vadd.f32 0.0, %v3477
        %3479 = vmatmul.bf16.gmra.mxu0 %v3271
        %v3480 = vpop.f32.mrf.mxu0
        %v3481 = vadd.f32 0.0, %v3480
        %v3482 = vpop.f32.mrf.mxu0
        %v3483 = vadd.f32 0.0, %v3482
        %3484 = vmatmul.bf16.gmra.mxu0 %v3274
        %v3485 = vpop.f32.mrf.mxu0
        %v3486 = vadd.f32 0.0, %v3485
        %v3487 = vpop.f32.mrf.mxu0
        %v3488 = vadd.f32 0.0, %v3487
        %3489 = vmatmul.bf16.gmra.mxu0 %v3277
        %v3490 = vpop.f32.mrf.mxu0
        %v3491 = vadd.f32 0.0, %v3490
        %v3492 = vpop.f32.mrf.mxu0
        %v3493 = vadd.f32 0.0, %v3492
        %3494 = vmatmul.bf16.gmra.mxu0 %v3280
        %v3495 = vpop.f32.mrf.mxu0
        %v3496 = vadd.f32 0.0, %v3495
        %v3497 = vpop.f32.mrf.mxu0
        %v3498 = vadd.f32 0.0, %v3497
        %3499 = vmatmul.bf16.gmra.mxu0 %v3283
        %v3500 = vpop.f32.mrf.mxu0
        %v3501 = vadd.f32 0.0, %v3500
        %v3502 = vpop.f32.mrf.mxu0
        %v3503 = vadd.f32 0.0, %v3502
        %3504 = vmatmul.bf16.gmra.mxu0 %v3286
        %v3505 = vpop.f32.mrf.mxu0
        %v3506 = vadd.f32 0.0, %v3505
        %v3507 = vpop.f32.mrf.mxu0
        %v3508 = vadd.f32 0.0, %v3507
        %3509 = vmatmul.bf16.gmra.mxu0 %v3289
        %v3510 = vpop.f32.mrf.mxu0
        %v3511 = vadd.f32 0.0, %v3510
        %v3512 = vpop.f32.mrf.mxu0
        %v3513 = vadd.f32 0.0, %v3512
        %3514 = vmatmul.bf16.gmra.mxu0 %v3292
        %v3515 = vpop.f32.mrf.mxu0
        %v3516 = vadd.f32 0.0, %v3515
        %v3517 = vpop.f32.mrf.mxu0
        %v3518 = vadd.f32 0.0, %v3517
        %3519 = vdwg.mxu0
        %v3520 = vmax.f32 %v3352, %v3441
        %3521 = vmax.xlane.f32.xlu0 %v3520
        %v3522 = vpop.xlane.xlu0 %3521
        %v3523 = vmax.f32 %v3354, %v3443
        %3524 = vmax.xlane.f32.xlu0 %v3523
        %v3525 = vpop.xlane.xlu0 %3524
        %v3526 = vmax.f32 %v3357, %v3446
        %3527 = vmax.xlane.f32.xlu0 %v3526
        %v3528 = vpop.xlane.xlu0 %3527
        %v3529 = vmax.f32 %v3359, %v3448
        %3530 = vmax.xlane.f32.xlu0 %v3529
        %v3531 = vpop.xlane.xlu0 %3530
        %v3532 = vmax.f32 %v3362, %v3451
        %3533 = vmax.xlane.f32.xlu0 %v3532
        %v3534 = vpop.xlane.xlu0 %3533
        %v3535 = vmax.f32 %v3364, %v3453
        %3536 = vmax.xlane.f32.xlu0 %v3535
        %v3537 = vpop.xlane.xlu0 %3536
        %v3538 = vmax.f32 %v3367, %v3456
        %3539 = vmax.xlane.f32.xlu0 %v3538
        %v3540 = vpop.xlane.xlu0 %3539
        %v3541 = vmax.f32 %v3369, %v3458
        %3542 = vmax.xlane.f32.xlu0 %v3541
        %v3543 = vpop.xlane.xlu0 %3542
        %v3544 = vmax.f32 %v3372, %v3461
        %3545 = vmax.xlane.f32.xlu0 %v3544
        %v3546 = vpop.xlane.xlu0 %3545
        %v3547 = vmax.f32 %v3374, %v3463
        %3548 = vmax.xlane.f32.xlu0 %v3547
        %v3549 = vpop.xlane.xlu0 %3548
        %v3550 = vmax.f32 %v3377, %v3466
        %3551 = vmax.xlane.f32.xlu0 %v3550
        %v3552 = vpop.xlane.xlu0 %3551
        %v3553 = vmax.f32 %v3379, %v3468
        %3554 = vmax.xlane.f32.xlu0 %v3553
        %v3555 = vpop.xlane.xlu0 %3554
        %v3556 = vmax.f32 %v3382, %v3471
        %3557 = vmax.xlane.f32.xlu0 %v3556
        %v3558 = vpop.xlane.xlu0 %3557
        %v3559 = vmax.f32 %v3384, %v3473
        %3560 = vmax.xlane.f32.xlu0 %v3559
        %v3561 = vpop.xlane.xlu0 %3560
        %v3562 = vmax.f32 %v3387, %v3476
        %3563 = vmax.xlane.f32.xlu0 %v3562
        %v3564 = vpop.xlane.xlu0 %3563
        %v3565 = vmax.f32 %v3389, %v3478
        %3566 = vmax.xlane.f32.xlu0 %v3565
        %v3567 = vpop.xlane.xlu0 %3566
        %v3568 = vmax.f32 %v3392, %v3481
        %3569 = vmax.xlane.f32.xlu0 %v3568
        %v3570 = vpop.xlane.xlu0 %3569
        %v3571 = vmax.f32 %v3394, %v3483
        %3572 = vmax.xlane.f32.xlu0 %v3571
        %v3573 = vpop.xlane.xlu0 %3572
        %v3574 = vmax.f32 %v3397, %v3486
        %3575 = vmax.xlane.f32.xlu0 %v3574
        %v3576 = vpop.xlane.xlu0 %3575
        %v3577 = vmax.f32 %v3399, %v3488
        %3578 = vmax.xlane.f32.xlu0 %v3577
        %v3579 = vpop.xlane.xlu0 %3578
        %v3580 = vmax.f32 %v3402, %v3491
        %3581 = vmax.xlane.f32.xlu0 %v3580
        %v3582 = vpop.xlane.xlu0 %3581
        %v3583 = vmax.f32 %v3404, %v3493
        %3584 = vmax.xlane.f32.xlu0 %v3583
        %v3585 = vpop.xlane.xlu0 %3584
        %v3586 = vmax.f32 %v3407, %v3496
        %3587 = vmax.xlane.f32.xlu0 %v3586
        %v3588 = vpop.xlane.xlu0 %3587
        %v3589 = vmax.f32 %v3409, %v3498
        %3590 = vmax.xlane.f32.xlu0 %v3589
        %v3591 = vpop.xlane.xlu0 %3590
        %v3592 = vmax.f32 %v3412, %v3501
        %3593 = vmax.xlane.f32.xlu0 %v3592
        %v3594 = vpop.xlane.xlu0 %3593
        %v3595 = vmax.f32 %v3414, %v3503
        %3596 = vmax.xlane.f32.xlu0 %v3595
        %v3597 = vpop.xlane.xlu0 %3596
        %v3598 = vmax.f32 %v3417, %v3506
        %3599 = vmax.xlane.f32.xlu0 %v3598
        %v3600 = vpop.xlane.xlu0 %3599
        %v3601 = vmax.f32 %v3419, %v3508
        %3602 = vmax.xlane.f32.xlu0 %v3601
        %v3603 = vpop.xlane.xlu0 %3602
        %v3604 = vmax.f32 %v3422, %v3511
        %3605 = vmax.xlane.f32.xlu0 %v3604
        %v3606 = vpop.xlane.xlu0 %3605
        %v3607 = vmax.f32 %v3424, %v3513
        %3608 = vmax.xlane.f32.xlu0 %v3607
        %v3609 = vpop.xlane.xlu0 %3608
        %v3610 = vmax.f32 %v3427, %v3516
        %3611 = vmax.xlane.f32.xlu0 %v3610
        %v3612 = vpop.xlane.xlu0 %3611
        %v3613 = vmax.f32 %v3429, %v3518
        %3614 = vmax.xlane.f32.xlu0 %v3613
        %v3615 = vpop.xlane.xlu0 %3614
        %v3616 = vsub.f32 %v3352, %v3522
        %v3617 = vsub.f32 %v3441, %v3522
        %v3618 = vsub.f32 %v3354, %v3525
        %v3619 = vsub.f32 %v3443, %v3525
        %v3620 = vsub.f32 %v3357, %v3528
        %v3621 = vsub.f32 %v3446, %v3528
        %v3622 = vsub.f32 %v3359, %v3531
        %v3623 = vsub.f32 %v3448, %v3531
        %v3624 = vsub.f32 %v3362, %v3534
        %v3625 = vsub.f32 %v3451, %v3534
        %v3626 = vsub.f32 %v3364, %v3537
        %v3627 = vsub.f32 %v3453, %v3537
        %v3628 = vsub.f32 %v3367, %v3540
        %v3629 = vsub.f32 %v3456, %v3540
        %v3630 = vsub.f32 %v3369, %v3543
        %v3631 = vsub.f32 %v3458, %v3543
        %v3632 = vsub.f32 %v3372, %v3546
        %v3633 = vsub.f32 %v3461, %v3546
        %v3634 = vsub.f32 %v3374, %v3549
        %v3635 = vsub.f32 %v3463, %v3549
        %v3636 = vsub.f32 %v3377, %v3552
        %v3637 = vsub.f32 %v3466, %v3552
        %v3638 = vsub.f32 %v3379, %v3555
        %v3639 = vsub.f32 %v3468, %v3555
        %v3640 = vsub.f32 %v3382, %v3558
        %v3641 = vsub.f32 %v3471, %v3558
        %v3642 = vsub.f32 %v3384, %v3561
        %v3643 = vsub.f32 %v3473, %v3561
        %v3644 = vsub.f32 %v3387, %v3564
        %v3645 = vsub.f32 %v3476, %v3564
        %v3646 = vsub.f32 %v3389, %v3567
        %v3647 = vsub.f32 %v3478, %v3567
        %v3648 = vsub.f32 %v3392, %v3570
        %v3649 = vsub.f32 %v3481, %v3570
        %v3650 = vsub.f32 %v3394, %v3573
        %v3651 = vsub.f32 %v3483, %v3573
        %v3652 = vsub.f32 %v3397, %v3576
        %v3653 = vsub.f32 %v3486, %v3576
        %v3654 = vsub.f32 %v3399, %v3579
        %v3655 = vsub.f32 %v3488, %v3579
        %v3656 = vsub.f32 %v3402, %v3582
        %v3657 = vsub.f32 %v3491, %v3582
        %v3658 = vsub.f32 %v3404, %v3585
        %v3659 = vsub.f32 %v3493, %v3585
        %v3660 = vsub.f32 %v3407, %v3588
        %v3661 = vsub.f32 %v3496, %v3588
        %v3662 = vsub.f32 %v3409, %v3591
        %v3663 = vsub.f32 %v3498, %v3591
        %v3664 = vsub.f32 %v3412, %v3594
        %v3665 = vsub.f32 %v3501, %v3594
        %v3666 = vsub.f32 %v3414, %v3597
        %v3667 = vsub.f32 %v3503, %v3597
        %v3668 = vsub.f32 %v3417, %v3600
        %v3669 = vsub.f32 %v3506, %v3600
        %v3670 = vsub.f32 %v3419, %v3603
        %v3671 = vsub.f32 %v3508, %v3603
        %v3672 = vsub.f32 %v3422, %v3606
        %v3673 = vsub.f32 %v3511, %v3606
        %v3674 = vsub.f32 %v3424, %v3609
        %v3675 = vsub.f32 %v3513, %v3609
        %v3676 = vsub.f32 %v3427, %v3612
        %v3677 = vsub.f32 %v3516, %v3612
        %v3678 = vsub.f32 %v3429, %v3615
        %v3679 = vsub.f32 %v3518, %v3615
        %v3680 = vmul.f32 %v3616, 1.442695
        %v3681 = vpow.pop %v3680
        %v3682 = vmul.f32 %v3617, 1.442695
        %v3683 = vpow.pop %v3682
        %v3684 = vmul.f32 %v3618, 1.442695
        %v3685 = vpow.pop %v3684
        %v3686 = vmul.f32 %v3619, 1.442695
        %v3687 = vpow.pop %v3686
        %v3688 = vmul.f32 %v3620, 1.442695
        %v3689 = vpow.pop %v3688
        %v3690 = vmul.f32 %v3621, 1.442695
        %v3691 = vpow.pop %v3690
        %v3692 = vmul.f32 %v3622, 1.442695
        %v3693 = vpow.pop %v3692
        %v3694 = vmul.f32 %v3623, 1.442695
        %v3695 = vpow.pop %v3694
        %v3696 = vmul.f32 %v3624, 1.442695
        %v3697 = vpow.pop %v3696
        %v3698 = vmul.f32 %v3625, 1.442695
        %v3699 = vpow.pop %v3698
        %v3700 = vmul.f32 %v3626, 1.442695
        %v3701 = vpow.pop %v3700
        %v3702 = vmul.f32 %v3627, 1.442695
        %v3703 = vpow.pop %v3702
        %v3704 = vmul.f32 %v3628, 1.442695
        %v3705 = vpow.pop %v3704
        %v3706 = vmul.f32 %v3629, 1.442695
        %v3707 = vpow.pop %v3706
        %v3708 = vmul.f32 %v3630, 1.442695
        %v3709 = vpow.pop %v3708
        %v3710 = vmul.f32 %v3631, 1.442695
        %v3711 = vpow.pop %v3710
        %v3712 = vmul.f32 %v3632, 1.442695
        %v3713 = vpow.pop %v3712
        %v3714 = vmul.f32 %v3633, 1.442695
        %v3715 = vpow.pop %v3714
        %v3716 = vmul.f32 %v3634, 1.442695
        %v3717 = vpow.pop %v3716
        %v3718 = vmul.f32 %v3635, 1.442695
        %v3719 = vpow.pop %v3718
        %v3720 = vmul.f32 %v3636, 1.442695
        %v3721 = vpow.pop %v3720
        %v3722 = vmul.f32 %v3637, 1.442695
        %v3723 = vpow.pop %v3722
        %v3724 = vmul.f32 %v3638, 1.442695
        %v3725 = vpow.pop %v3724
        %v3726 = vmul.f32 %v3639, 1.442695
        %v3727 = vpow.pop %v3726
        %v3728 = vmul.f32 %v3640, 1.442695
        %v3729 = vpow.pop %v3728
        %v3730 = vmul.f32 %v3641, 1.442695
        %v3731 = vpow.pop %v3730
        %v3732 = vmul.f32 %v3642, 1.442695
        %v3733 = vpow.pop %v3732
        %v3734 = vmul.f32 %v3643, 1.442695
        %v3735 = vpow.pop %v3734
        %v3736 = vmul.f32 %v3644, 1.442695
        %v3737 = vpow.pop %v3736
        %v3738 = vmul.f32 %v3645, 1.442695
        %v3739 = vpow.pop %v3738
        %v3740 = vmul.f32 %v3646, 1.442695
        %v3741 = vpow.pop %v3740
        %v3742 = vmul.f32 %v3647, 1.442695
        %v3743 = vpow.pop %v3742
        %v3744 = vmul.f32 %v3648, 1.442695
        %v3745 = vpow.pop %v3744
        %v3746 = vmul.f32 %v3649, 1.442695
        %v3747 = vpow.pop %v3746
        %v3748 = vmul.f32 %v3650, 1.442695
        %v3749 = vpow.pop %v3748
        %v3750 = vmul.f32 %v3651, 1.442695
        %v3751 = vpow.pop %v3750
        %v3752 = vmul.f32 %v3652, 1.442695
        %v3753 = vpow.pop %v3752
        %v3754 = vmul.f32 %v3653, 1.442695
        %v3755 = vpow.pop %v3754
        %v3756 = vmul.f32 %v3654, 1.442695
        %v3757 = vpow.pop %v3756
        %v3758 = vmul.f32 %v3655, 1.442695
        %v3759 = vpow.pop %v3758
        %v3760 = vmul.f32 %v3656, 1.442695
        %v3761 = vpow.pop %v3760
        %v3762 = vmul.f32 %v3657, 1.442695
        %v3763 = vpow.pop %v3762
        %v3764 = vmul.f32 %v3658, 1.442695
        %v3765 = vpow.pop %v3764
        %v3766 = vmul.f32 %v3659, 1.442695
        %v3767 = vpow.pop %v3766
        %v3768 = vmul.f32 %v3660, 1.442695
        %v3769 = vpow.pop %v3768
        %v3770 = vmul.f32 %v3661, 1.442695
        %v3771 = vpow.pop %v3770
        %v3772 = vmul.f32 %v3662, 1.442695
        %v3773 = vpow.pop %v3772
        %v3774 = vmul.f32 %v3663, 1.442695
        %v3775 = vpow.pop %v3774
        %v3776 = vmul.f32 %v3664, 1.442695
        %v3777 = vpow.pop %v3776
        %v3778 = vmul.f32 %v3665, 1.442695
        %v3779 = vpow.pop %v3778
        %v3780 = vmul.f32 %v3666, 1.442695
        %v3781 = vpow.pop %v3780
        %v3782 = vmul.f32 %v3667, 1.442695
        %v3783 = vpow.pop %v3782
        %v3784 = vmul.f32 %v3668, 1.442695
        %v3785 = vpow.pop %v3784
        %v3786 = vmul.f32 %v3669, 1.442695
        %v3787 = vpow.pop %v3786
        %v3788 = vmul.f32 %v3670, 1.442695
        %v3789 = vpow.pop %v3788
        %v3790 = vmul.f32 %v3671, 1.442695
        %v3791 = vpow.pop %v3790
        %v3792 = vmul.f32 %v3672, 1.442695
        %v3793 = vpow.pop %v3792
        %v3794 = vmul.f32 %v3673, 1.442695
        %v3795 = vpow.pop %v3794
        %v3796 = vmul.f32 %v3674, 1.442695
        %v3797 = vpow.pop %v3796
        %v3798 = vmul.f32 %v3675, 1.442695
        %v3799 = vpow.pop %v3798
        %v3800 = vmul.f32 %v3676, 1.442695
        %v3801 = vpow.pop %v3800
        %v3802 = vmul.f32 %v3677, 1.442695
        %v3803 = vpow.pop %v3802
        %v3804 = vmul.f32 %v3678, 1.442695
        %v3805 = vpow.pop %v3804
        %v3806 = vmul.f32 %v3679, 1.442695
        %v3807 = vpow.pop %v3806
        %v3808 = vadd.f32 %v3681, %v3683
        %3809 = vadd.xlane.f32.xlu0 %v3808
        %v3810 = vpop.xlane.xlu0 %3809
        %v3811 = vadd.f32 %v3685, %v3687
        %3812 = vadd.xlane.f32.xlu0 %v3811
        %v3813 = vpop.xlane.xlu0 %3812
        %v3814 = vadd.f32 %v3689, %v3691
        %3815 = vadd.xlane.f32.xlu0 %v3814
        %v3816 = vpop.xlane.xlu0 %3815
        %v3817 = vadd.f32 %v3693, %v3695
        %3818 = vadd.xlane.f32.xlu0 %v3817
        %v3819 = vpop.xlane.xlu0 %3818
        %v3820 = vadd.f32 %v3697, %v3699
        %3821 = vadd.xlane.f32.xlu0 %v3820
        %v3822 = vpop.xlane.xlu0 %3821
        %v3823 = vadd.f32 %v3701, %v3703
        %3824 = vadd.xlane.f32.xlu0 %v3823
        %v3825 = vpop.xlane.xlu0 %3824
        %v3826 = vadd.f32 %v3705, %v3707
        %3827 = vadd.xlane.f32.xlu0 %v3826
        %v3828 = vpop.xlane.xlu0 %3827
        %v3829 = vadd.f32 %v3709, %v3711
        %3830 = vadd.xlane.f32.xlu0 %v3829
        %v3831 = vpop.xlane.xlu0 %3830
        %v3832 = vadd.f32 %v3713, %v3715
        %3833 = vadd.xlane.f32.xlu0 %v3832
        %v3834 = vpop.xlane.xlu0 %3833
        %v3835 = vadd.f32 %v3717, %v3719
        %3836 = vadd.xlane.f32.xlu0 %v3835
        %v3837 = vpop.xlane.xlu0 %3836
        %v3838 = vadd.f32 %v3721, %v3723
        %3839 = vadd.xlane.f32.xlu0 %v3838
        %v3840 = vpop.xlane.xlu0 %3839
        %v3841 = vadd.f32 %v3725, %v3727
        %3842 = vadd.xlane.f32.xlu0 %v3841
        %v3843 = vpop.xlane.xlu0 %3842
        %v3844 = vadd.f32 %v3729, %v3731
        %3845 = vadd.xlane.f32.xlu0 %v3844
        %v3846 = vpop.xlane.xlu0 %3845
        %v3847 = vadd.f32 %v3733, %v3735
        %3848 = vadd.xlane.f32.xlu0 %v3847
        %v3849 = vpop.xlane.xlu0 %3848
        %v3850 = vadd.f32 %v3737, %v3739
        %3851 = vadd.xlane.f32.xlu0 %v3850
        %v3852 = vpop.xlane.xlu0 %3851
        %v3853 = vadd.f32 %v3741, %v3743
        %3854 = vadd.xlane.f32.xlu0 %v3853
        %v3855 = vpop.xlane.xlu0 %3854
        %v3856 = vadd.f32 %v3745, %v3747
        %3857 = vadd.xlane.f32.xlu0 %v3856
        %v3858 = vpop.xlane.xlu0 %3857
        %v3859 = vadd.f32 %v3749, %v3751
        %3860 = vadd.xlane.f32.xlu0 %v3859
        %v3861 = vpop.xlane.xlu0 %3860
        %v3862 = vadd.f32 %v3753, %v3755
        %3863 = vadd.xlane.f32.xlu0 %v3862
        %v3864 = vpop.xlane.xlu0 %3863
        %v3865 = vadd.f32 %v3757, %v3759
        %3866 = vadd.xlane.f32.xlu0 %v3865
        %v3867 = vpop.xlane.xlu0 %3866
        %v3868 = vadd.f32 %v3761, %v3763
        %3869 = vadd.xlane.f32.xlu0 %v3868
        %v3870 = vpop.xlane.xlu0 %3869
        %v3871 = vadd.f32 %v3765, %v3767
        %3872 = vadd.xlane.f32.xlu0 %v3871
        %v3873 = vpop.xlane.xlu0 %3872
        %v3874 = vadd.f32 %v3769, %v3771
        %3875 = vadd.xlane.f32.xlu0 %v3874
        %v3876 = vpop.xlane.xlu0 %3875
        %v3877 = vadd.f32 %v3773, %v3775
        %3878 = vadd.xlane.f32.xlu0 %v3877
        %v3879 = vpop.xlane.xlu0 %3878
        %v3880 = vadd.f32 %v3777, %v3779
        %3881 = vadd.xlane.f32.xlu0 %v3880
        %v3882 = vpop.xlane.xlu0 %3881
        %v3883 = vadd.f32 %v3781, %v3783
        %3884 = vadd.xlane.f32.xlu0 %v3883
        %v3885 = vpop.xlane.xlu0 %3884
        %v3886 = vadd.f32 %v3785, %v3787
        %3887 = vadd.xlane.f32.xlu0 %v3886
        %v3888 = vpop.xlane.xlu0 %3887
        %v3889 = vadd.f32 %v3789, %v3791
        %3890 = vadd.xlane.f32.xlu0 %v3889
        %v3891 = vpop.xlane.xlu0 %3890
        %v3892 = vadd.f32 %v3793, %v3795
        %3893 = vadd.xlane.f32.xlu0 %v3892
        %v3894 = vpop.xlane.xlu0 %3893
        %v3895 = vadd.f32 %v3797, %v3799
        %3896 = vadd.xlane.f32.xlu0 %v3895
        %v3897 = vpop.xlane.xlu0 %3896
        %v3898 = vadd.f32 %v3801, %v3803
        %3899 = vadd.xlane.f32.xlu0 %v3898
        %v3900 = vpop.xlane.xlu0 %3899
        %v3901 = vadd.f32 %v3805, %v3807
        %3902 = vadd.xlane.f32.xlu0 %v3901
        %v3903 = vpop.xlane.xlu0 %3902
        %v3904 = vpack.c.bf16 %v3685, %v3681
        %v3905 = vpack.c.bf16 %v3687, %v3683
        %v3906 = vpack.c.bf16 %v3693, %v3689
        %v3907 = vpack.c.bf16 %v3695, %v3691
        %v3908 = vpack.c.bf16 %v3701, %v3697
        %v3909 = vpack.c.bf16 %v3703, %v3699
        %v3910 = vpack.c.bf16 %v3709, %v3705
        %v3911 = vpack.c.bf16 %v3711, %v3707
        %v3912 = vpack.c.bf16 %v3717, %v3713
        %v3913 = vpack.c.bf16 %v3719, %v3715
        %v3914 = vpack.c.bf16 %v3725, %v3721
        %v3915 = vpack.c.bf16 %v3727, %v3723
        %v3916 = vpack.c.bf16 %v3733, %v3729
        %v3917 = vpack.c.bf16 %v3735, %v3731
        %v3918 = vpack.c.bf16 %v3741, %v3737
        %v3919 = vpack.c.bf16 %v3743, %v3739
        %v3920 = vpack.c.bf16 %v3749, %v3745
        %v3921 = vpack.c.bf16 %v3751, %v3747
        %v3922 = vpack.c.bf16 %v3757, %v3753
        %v3923 = vpack.c.bf16 %v3759, %v3755
        %v3924 = vpack.c.bf16 %v3765, %v3761
        %v3925 = vpack.c.bf16 %v3767, %v3763
        %v3926 = vpack.c.bf16 %v3773, %v3769
        %v3927 = vpack.c.bf16 %v3775, %v3771
        %v3928 = vpack.c.bf16 %v3781, %v3777
        %v3929 = vpack.c.bf16 %v3783, %v3779
        %v3930 = vpack.c.bf16 %v3789, %v3785
        %v3931 = vpack.c.bf16 %v3791, %v3787
        %v3932 = vpack.c.bf16 %v3797, %v3793
        %v3933 = vpack.c.bf16 %v3799, %v3795
        %v3934 = vpack.c.bf16 %v3805, %v3801
        %v3935 = vpack.c.bf16 %v3807, %v3803
        %3936 = vrot.lane.b32.xlu0 %v1800, 64
        %v3937 = vpop.permute.xlu0 %3936
        %3938 = vrot.lane.b32.xlu0 %v1801, 64
        %v3939 = vpop.permute.xlu0 %3938
        %3940 = vrot.lane.b32.xlu0 %v1802, 64
        %v3941 = vpop.permute.xlu0 %3940
        %3942 = vrot.lane.b32.xlu0 %v1803, 64
        %v3943 = vpop.permute.xlu0 %3942
        %3944 = vrot.lane.b32.xlu0 %v1804, 64
        %v3945 = vpop.permute.xlu0 %3944
        %3946 = vrot.lane.b32.xlu0 %v1805, 64
        %v3947 = vpop.permute.xlu0 %3946
        %3948 = vrot.lane.b32.xlu0 %v1806, 64
        %v3949 = vpop.permute.xlu0 %3948
        %3950 = vrot.lane.b32.xlu0 %v1807, 64
        %v3951 = vpop.permute.xlu0 %3950
        %3952 = vrot.lane.b32.xlu0 %v1808, 64
        %v3953 = vpop.permute.xlu0 %3952
        %3954 = vrot.lane.b32.xlu0 %v1809, 64
        %v3955 = vpop.permute.xlu0 %3954
        %3956 = vrot.lane.b32.xlu0 %v1810, 64
        %v3957 = vpop.permute.xlu0 %3956
        %3958 = vrot.lane.b32.xlu0 %v1811, 64
        %v3959 = vpop.permute.xlu0 %3958
        %3960 = vrot.lane.b32.xlu0 %v1812, 64
        %v3961 = vpop.permute.xlu0 %3960
        %3962 = vrot.lane.b32.xlu0 %v1813, 64
        %v3963 = vpop.permute.xlu0 %3962
        %3964 = vrot.lane.b32.xlu0 %v1814, 64
        %v3965 = vpop.permute.xlu0 %3964
        %3966 = vrot.lane.b32.xlu0 %v1815, 64
        %v3967 = vpop.permute.xlu0 %3966
        %3984 = vmatpush.bf16.msra.mxu0 %v3951
        %3985 = vmatpush.bf16.msra.mxu0 %v3949
        %3986 = vmatpush.bf16.msra.mxu0 %v3947
        %3987 = vmatpush.bf16.msra.mxu0 %v3945
        %3988 = vmatpush.bf16.msra.mxu0 %v3943
        %3989 = vmatpush.bf16.msra.mxu0 %v3941
        %3990 = vmatpush.bf16.msra.mxu0 %v3939
        %3991 = vmatpush.bf16.msra.mxu0 %v3937
        %3992 = vmatmul.bf16.gmra.mxu0 %v3904
        %v3993 = vpop.f32.mrf.mxu0
        %v3994 = vadd.f32 0.0, %v3993
        %v3995 = vpop.f32.mrf.mxu0
        %v3996 = vadd.f32 0.0, %v3995
        %3997 = vmatmul.bf16.gmra.mxu0 %v3906
        %v3998 = vpop.f32.mrf.mxu0
        %v3999 = vadd.f32 0.0, %v3998
        %v4000 = vpop.f32.mrf.mxu0
        %v4001 = vadd.f32 0.0, %v4000
        %4002 = vmatmul.bf16.gmra.mxu0 %v3908
        %v4003 = vpop.f32.mrf.mxu0
        %v4004 = vadd.f32 0.0, %v4003
        %v4005 = vpop.f32.mrf.mxu0
        %v4006 = vadd.f32 0.0, %v4005
        %4007 = vmatmul.bf16.gmra.mxu0 %v3910
        %v4008 = vpop.f32.mrf.mxu0
        %v4009 = vadd.f32 0.0, %v4008
        %v4010 = vpop.f32.mrf.mxu0
        %v4011 = vadd.f32 0.0, %v4010
        %4012 = vmatmul.bf16.gmra.mxu0 %v3912
        %v4013 = vpop.f32.mrf.mxu0
        %v4014 = vadd.f32 0.0, %v4013
        %v4015 = vpop.f32.mrf.mxu0
        %v4016 = vadd.f32 0.0, %v4015
        %4017 = vmatmul.bf16.gmra.mxu0 %v3914
        %v4018 = vpop.f32.mrf.mxu0
        %v4019 = vadd.f32 0.0, %v4018
        %v4020 = vpop.f32.mrf.mxu0
        %v4021 = vadd.f32 0.0, %v4020
        %4022 = vmatmul.bf16.gmra.mxu0 %v3916
        %v4023 = vpop.f32.mrf.mxu0
        %v4024 = vadd.f32 0.0, %v4023
        %v4025 = vpop.f32.mrf.mxu0
        %v4026 = vadd.f32 0.0, %v4025
        %4027 = vmatmul.bf16.gmra.mxu0 %v3918
        %v4028 = vpop.f32.mrf.mxu0
        %v4029 = vadd.f32 0.0, %v4028
        %v4030 = vpop.f32.mrf.mxu0
        %v4031 = vadd.f32 0.0, %v4030
        %4032 = vmatmul.bf16.gmra.mxu0 %v3920
        %v4033 = vpop.f32.mrf.mxu0
        %v4034 = vadd.f32 0.0, %v4033
        %v4035 = vpop.f32.mrf.mxu0
        %v4036 = vadd.f32 0.0, %v4035
        %4037 = vmatmul.bf16.gmra.mxu0 %v3922
        %v4038 = vpop.f32.mrf.mxu0
        %v4039 = vadd.f32 0.0, %v4038
        %v4040 = vpop.f32.mrf.mxu0
        %v4041 = vadd.f32 0.0, %v4040
        %4042 = vmatmul.bf16.gmra.mxu0 %v3924
        %v4043 = vpop.f32.mrf.mxu0
        %v4044 = vadd.f32 0.0, %v4043
        %v4045 = vpop.f32.mrf.mxu0
        %v4046 = vadd.f32 0.0, %v4045
        %4047 = vmatmul.bf16.gmra.mxu0 %v3926
        %v4048 = vpop.f32.mrf.mxu0
        %v4049 = vadd.f32 0.0, %v4048
        %v4050 = vpop.f32.mrf.mxu0
        %v4051 = vadd.f32 0.0, %v4050
        %4052 = vmatmul.bf16.gmra.mxu0 %v3928
        %v4053 = vpop.f32.mrf.mxu0
        %v4054 = vadd.f32 0.0, %v4053
        %v4055 = vpop.f32.mrf.mxu0
        %v4056 = vadd.f32 0.0, %v4055
        %4057 = vmatmul.bf16.gmra.mxu0 %v3930
        %v4058 = vpop.f32.mrf.mxu0
        %v4059 = vadd.f32 0.0, %v4058
        %v4060 = vpop.f32.mrf.mxu0
        %v4061 = vadd.f32 0.0, %v4060
        %4062 = vmatmul.bf16.gmra.mxu0 %v3932
        %v4063 = vpop.f32.mrf.mxu0
        %v4064 = vadd.f32 0.0, %v4063
        %v4065 = vpop.f32.mrf.mxu0
        %v4066 = vadd.f32 0.0, %v4065
        %4067 = vmatmul.bf16.gmra.mxu0 %v3934
        %v4068 = vpop.f32.mrf.mxu0
        %v4069 = vadd.f32 0.0, %v4068
        %v4070 = vpop.f32.mrf.mxu0
        %v4071 = vadd.f32 0.0, %v4070
        %4072 = vdwg.mxu0
        %4073 = vmatpush.bf16.msra.mxu0 %v3967
        %4074 = vmatpush.bf16.msra.mxu0 %v3965
        %4075 = vmatpush.bf16.msra.mxu0 %v3963
        %4076 = vmatpush.bf16.msra.mxu0 %v3961
        %4077 = vmatpush.bf16.msra.mxu0 %v3959
        %4078 = vmatpush.bf16.msra.mxu0 %v3957
        %4079 = vmatpush.bf16.msra.mxu0 %v3955
        %4080 = vmatpush.bf16.msra.mxu0 %v3953
        %4081 = vmatmul.bf16.gmra.mxu0 %v3905
        %v4082 = vpop.f32.mrf.mxu0
        %v4083 = vadd.f32 %v3994, %v4082
        %v4084 = vpop.f32.mrf.mxu0
        %v4085 = vadd.f32 %v3996, %v4084
        %4086 = vmatmul.bf16.gmra.mxu0 %v3907
        %v4087 = vpop.f32.mrf.mxu0
        %v4088 = vadd.f32 %v3999, %v4087
        %v4089 = vpop.f32.mrf.mxu0
        %v4090 = vadd.f32 %v4001, %v4089
        %4091 = vmatmul.bf16.gmra.mxu0 %v3909
        %v4092 = vpop.f32.mrf.mxu0
        %v4093 = vadd.f32 %v4004, %v4092
        %v4094 = vpop.f32.mrf.mxu0
        %v4095 = vadd.f32 %v4006, %v4094
        %4096 = vmatmul.bf16.gmra.mxu0 %v3911
        %v4097 = vpop.f32.mrf.mxu0
        %v4098 = vadd.f32 %v4009, %v4097
        %v4099 = vpop.f32.mrf.mxu0
        %v4100 = vadd.f32 %v4011, %v4099
        %4101 = vmatmul.bf16.gmra.mxu0 %v3913
        %v4102 = vpop.f32.mrf.mxu0
        %v4103 = vadd.f32 %v4014, %v4102
        %v4104 = vpop.f32.mrf.mxu0
        %v4105 = vadd.f32 %v4016, %v4104
        %4106 = vmatmul.bf16.gmra.mxu0 %v3915
        %v4107 = vpop.f32.mrf.mxu0
        %v4108 = vadd.f32 %v4019, %v4107
        %v4109 = vpop.f32.mrf.mxu0
        %v4110 = vadd.f32 %v4021, %v4109
        %4111 = vmatmul.bf16.gmra.mxu0 %v3917
        %v4112 = vpop.f32.mrf.mxu0
        %v4113 = vadd.f32 %v4024, %v4112
        %v4114 = vpop.f32.mrf.mxu0
        %v4115 = vadd.f32 %v4026, %v4114
        %4116 = vmatmul.bf16.gmra.mxu0 %v3919
        %v4117 = vpop.f32.mrf.mxu0
        %v4118 = vadd.f32 %v4029, %v4117
        %v4119 = vpop.f32.mrf.mxu0
        %v4120 = vadd.f32 %v4031, %v4119
        %4121 = vmatmul.bf16.gmra.mxu0 %v3921
        %v4122 = vpop.f32.mrf.mxu0
        %v4123 = vadd.f32 %v4034, %v4122
        %v4124 = vpop.f32.mrf.mxu0
        %v4125 = vadd.f32 %v4036, %v4124
        %4126 = vmatmul.bf16.gmra.mxu0 %v3923
        %v4127 = vpop.f32.mrf.mxu0
        %v4128 = vadd.f32 %v4039, %v4127
        %v4129 = vpop.f32.mrf.mxu0
        %v4130 = vadd.f32 %v4041, %v4129
        %4131 = vmatmul.bf16.gmra.mxu0 %v3925
        %v4132 = vpop.f32.mrf.mxu0
        %v4133 = vadd.f32 %v4044, %v4132
        %v4134 = vpop.f32.mrf.mxu0
        %v4135 = vadd.f32 %v4046, %v4134
        %4136 = vmatmul.bf16.gmra.mxu0 %v3927
        %v4137 = vpop.f32.mrf.mxu0
        %v4138 = vadd.f32 %v4049, %v4137
        %v4139 = vpop.f32.mrf.mxu0
        %v4140 = vadd.f32 %v4051, %v4139
        %4141 = vmatmul.bf16.gmra.mxu0 %v3929
        %v4142 = vpop.f32.mrf.mxu0
        %v4143 = vadd.f32 %v4054, %v4142
        %v4144 = vpop.f32.mrf.mxu0
        %v4145 = vadd.f32 %v4056, %v4144
        %4146 = vmatmul.bf16.gmra.mxu0 %v3931
        %v4147 = vpop.f32.mrf.mxu0
        %v4148 = vadd.f32 %v4059, %v4147
        %v4149 = vpop.f32.mrf.mxu0
        %v4150 = vadd.f32 %v4061, %v4149
        %4151 = vmatmul.bf16.gmra.mxu0 %v3933
        %v4152 = vpop.f32.mrf.mxu0
        %v4153 = vadd.f32 %v4064, %v4152
        %v4154 = vpop.f32.mrf.mxu0
        %v4155 = vadd.f32 %v4066, %v4154
        %4156 = vmatmul.bf16.gmra.mxu0 %v3935
        %v4157 = vpop.f32.mrf.mxu0
        %v4158 = vadd.f32 %v4069, %v4157
        %v4159 = vpop.f32.mrf.mxu0
        %v4160 = vadd.f32 %v4071, %v4159
        %4161 = vdwg.mxu0
        %v4162 = vrcp.pop %v3810
        %v4163 = vrcp.pop %v3813
        %v4164 = vrcp.pop %v3816
        %v4165 = vrcp.pop %v3819
        %v4166 = vrcp.pop %v3822
        %v4167 = vrcp.pop %v3825
        %v4168 = vrcp.pop %v3828
        %v4169 = vrcp.pop %v3831
        %v4170 = vrcp.pop %v3834
        %v4171 = vrcp.pop %v3837
        %v4172 = vrcp.pop %v3840
        %v4173 = vrcp.pop %v3843
        %v4174 = vrcp.pop %v3846
        %v4175 = vrcp.pop %v3849
        %v4176 = vrcp.pop %v3852
        %v4177 = vrcp.pop %v3855
        %v4178 = vrcp.pop %v3858
        %v4179 = vrcp.pop %v3861
        %v4180 = vrcp.pop %v3864
        %v4181 = vrcp.pop %v3867
        %v4182 = vrcp.pop %v3870
        %v4183 = vrcp.pop %v3873
        %v4184 = vrcp.pop %v3876
        %v4185 = vrcp.pop %v3879
        %v4186 = vrcp.pop %v3882
        %v4187 = vrcp.pop %v3885
        %v4188 = vrcp.pop %v3888
        %v4189 = vrcp.pop %v3891
        %v4190 = vrcp.pop %v3894
        %v4191 = vrcp.pop %v3897
        %v4192 = vrcp.pop %v3900
        %v4193 = vrcp.pop %v3903
        %v4194 = vmul.f32 %v4083, %v4162
        %v4195 = vmul.f32 %v4085, %v4163
        %v4196 = vmul.f32 %v4088, %v4164
        %v4197 = vmul.f32 %v4090, %v4165
        %v4198 = vmul.f32 %v4093, %v4166
        %v4199 = vmul.f32 %v4095, %v4167
        %v4200 = vmul.f32 %v4098, %v4168
        %v4201 = vmul.f32 %v4100, %v4169
        %v4202 = vmul.f32 %v4103, %v4170
        %v4203 = vmul.f32 %v4105, %v4171
        %v4204 = vmul.f32 %v4108, %v4172
        %v4205 = vmul.f32 %v4110, %v4173
        %v4206 = vmul.f32 %v4113, %v4174
        %v4207 = vmul.f32 %v4115, %v4175
        %v4208 = vmul.f32 %v4118, %v4176
        %v4209 = vmul.f32 %v4120, %v4177
        %v4210 = vmul.f32 %v4123, %v4178
        %v4211 = vmul.f32 %v4125, %v4179
        %v4212 = vmul.f32 %v4128, %v4180
        %v4213 = vmul.f32 %v4130, %v4181
        %v4214 = vmul.f32 %v4133, %v4182
        %v4215 = vmul.f32 %v4135, %v4183
        %v4216 = vmul.f32 %v4138, %v4184
        %v4217 = vmul.f32 %v4140, %v4185
        %v4218 = vmul.f32 %v4143, %v4186
        %v4219 = vmul.f32 %v4145, %v4187
        %v4220 = vmul.f32 %v4148, %v4188
        %v4221 = vmul.f32 %v4150, %v4189
        %v4222 = vmul.f32 %v4153, %v4190
        %v4223 = vmul.f32 %v4155, %v4191
        %v4224 = vmul.f32 %v4158, %v4192
        %v4225 = vmul.f32 %v4160, %v4193
        %v4226 = vpack.c.bf16 %v4194, %v4194
        %v4227 = vpack.c.bf16 %v4195, %v4195
        %v4228 = vpack.c.bf16 %v4196, %v4196
        %v4229 = vpack.c.bf16 %v4197, %v4197
        %v4230 = vpack.c.bf16 %v4198, %v4198
        %v4231 = vpack.c.bf16 %v4199, %v4199
        %v4232 = vpack.c.bf16 %v4200, %v4200
        %v4233 = vpack.c.bf16 %v4201, %v4201
        %v4234 = vpack.c.bf16 %v4202, %v4202
        %v4235 = vpack.c.bf16 %v4203, %v4203
        %v4236 = vpack.c.bf16 %v4204, %v4204
        %v4237 = vpack.c.bf16 %v4205, %v4205
        %v4238 = vpack.c.bf16 %v4206, %v4206
        %v4239 = vpack.c.bf16 %v4207, %v4207
        %v4240 = vpack.c.bf16 %v4208, %v4208
        %v4241 = vpack.c.bf16 %v4209, %v4209
        %v4242 = vpack.c.bf16 %v4210, %v4210
        %v4243 = vpack.c.bf16 %v4211, %v4211
        %v4244 = vpack.c.bf16 %v4212, %v4212
        %v4245 = vpack.c.bf16 %v4213, %v4213
        %v4246 = vpack.c.bf16 %v4214, %v4214
        %v4247 = vpack.c.bf16 %v4215, %v4215
        %v4248 = vpack.c.bf16 %v4216, %v4216
        %v4249 = vpack.c.bf16 %v4217, %v4217
        %v4250 = vpack.c.bf16 %v4218, %v4218
        %v4251 = vpack.c.bf16 %v4219, %v4219
        %v4252 = vpack.c.bf16 %v4220, %v4220
        %v4253 = vpack.c.bf16 %v4221, %v4221
        %v4254 = vpack.c.bf16 %v4222, %v4222
        %v4255 = vpack.c.bf16 %v4223, %v4223
        %v4256 = vpack.c.bf16 %v4224, %v4224
        %v4257 = vpack.c.bf16 %v4225, %v4225
        %4258 = vrot.lane.b32.xlu0 %v949, 32
        %v4259 = vpop.permute.xlu0 %4258
        %4260 = vrot.lane.b32.xlu0 %v950, 32
        %v4261 = vpop.permute.xlu0 %4260
        %4262 = vrot.lane.b32.xlu0 %v951, 32
        %v4263 = vpop.permute.xlu0 %4262
        %4264 = vrot.lane.b32.xlu0 %v952, 32
        %v4265 = vpop.permute.xlu0 %4264
        %4266 = vrot.lane.b32.xlu0 %v953, 32
        %v4267 = vpop.permute.xlu0 %4266
        %4268 = vrot.lane.b32.xlu0 %v954, 32
        %v4269 = vpop.permute.xlu0 %4268
        %4270 = vrot.lane.b32.xlu0 %v955, 32
        %v4271 = vpop.permute.xlu0 %4270
        %4272 = vrot.lane.b32.xlu0 %v956, 32
        %v4273 = vpop.permute.xlu0 %4272
        %4274 = vrot.lane.b32.xlu0 %v957, 32
        %v4275 = vpop.permute.xlu0 %4274
        %4276 = vrot.lane.b32.xlu0 %v958, 32
        %v4277 = vpop.permute.xlu0 %4276
        %4278 = vrot.lane.b32.xlu0 %v959, 32
        %v4279 = vpop.permute.xlu0 %4278
        %4280 = vrot.lane.b32.xlu0 %v960, 32
        %v4281 = vpop.permute.xlu0 %4280
        %4282 = vrot.lane.b32.xlu0 %v961, 32
        %v4283 = vpop.permute.xlu0 %4282
        %4284 = vrot.lane.b32.xlu0 %v962, 32
        %v4285 = vpop.permute.xlu0 %4284
        %4286 = vrot.lane.b32.xlu0 %v963, 32
        %v4287 = vpop.permute.xlu0 %4286
        %4288 = vrot.lane.b32.xlu0 %v964, 32
        %v4289 = vpop.permute.xlu0 %4288
        %4290 = vrot.lane.b32.xlu0 %v1029, 32
        %v4291 = vpop.permute.xlu0 %4290
        %4292 = vrot.lane.b32.xlu0 %v1030, 32
        %v4293 = vpop.permute.xlu0 %4292
        %4294 = vrot.lane.b32.xlu0 %v1031, 32
        %v4295 = vpop.permute.xlu0 %4294
        %4296 = vrot.lane.b32.xlu0 %v1032, 32
        %v4297 = vpop.permute.xlu0 %4296
        %4298 = vrot.lane.b32.xlu0 %v1033, 32
        %v4299 = vpop.permute.xlu0 %4298
        %4300 = vrot.lane.b32.xlu0 %v1034, 32
        %v4301 = vpop.permute.xlu0 %4300
        %4302 = vrot.lane.b32.xlu0 %v1035, 32
        %v4303 = vpop.permute.xlu0 %4302
        %4304 = vrot.lane.b32.xlu0 %v1036, 32
        %v4305 = vpop.permute.xlu0 %4304
        %4306 = vrot.lane.b32.xlu0 %v1037, 32
        %v4307 = vpop.permute.xlu0 %4306
        %4308 = vrot.lane.b32.xlu0 %v1038, 32
        %v4309 = vpop.permute.xlu0 %4308
        %4310 = vrot.lane.b32.xlu0 %v1039, 32
        %v4311 = vpop.permute.xlu0 %4310
        %4312 = vrot.lane.b32.xlu0 %v1040, 32
        %v4313 = vpop.permute.xlu0 %4312
        %4314 = vrot.lane.b32.xlu0 %v1041, 32
        %v4315 = vpop.permute.xlu0 %4314
        %4316 = vrot.lane.b32.xlu0 %v1042, 32
        %v4317 = vpop.permute.xlu0 %4316
        %4318 = vrot.lane.b32.xlu0 %v1043, 32
        %v4319 = vpop.permute.xlu0 %4318
        %4320 = vrot.lane.b32.xlu0 %v1044, 32
        %v4321 = vpop.permute.xlu0 %4320
        %v4323 = vsel %vm1045, %v4259, 0
        %v4326 = vsel %vm1045, %v4261, 0
        %v4329 = vsel %vm1045, %v4263, 0
        %v4332 = vsel %vm1045, %v4265, 0
        %v4335 = vsel %vm1045, %v4267, 0
        %v4338 = vsel %vm1045, %v4269, 0
        %v4341 = vsel %vm1045, %v4271, 0
        %v4344 = vsel %vm1045, %v4273, 0
        %v4347 = vsel %vm1045, %v4275, 0
        %v4350 = vsel %vm1045, %v4277, 0
        %v4353 = vsel %vm1045, %v4279, 0
        %v4356 = vsel %vm1045, %v4281, 0
        %v4359 = vsel %vm1045, %v4283, 0
        %v4362 = vsel %vm1045, %v4285, 0
        %v4365 = vsel %vm1045, %v4287, 0
        %v4368 = vsel %vm1045, %v4289, 0
        %v4371 = vsel %vm1045, %v4291, 0
        %v4374 = vsel %vm1045, %v4293, 0
        %v4377 = vsel %vm1045, %v4295, 0
        %v4380 = vsel %vm1045, %v4297, 0
        %v4383 = vsel %vm1045, %v4299, 0
        %v4386 = vsel %vm1045, %v4301, 0
        %v4389 = vsel %vm1045, %v4303, 0
        %v4392 = vsel %vm1045, %v4305, 0
        %v4395 = vsel %vm1045, %v4307, 0
        %v4398 = vsel %vm1045, %v4309, 0
        %v4401 = vsel %vm1045, %v4311, 0
        %v4404 = vsel %vm1045, %v4313, 0
        %v4407 = vsel %vm1045, %v4315, 0
        %v4410 = vsel %vm1045, %v4317, 0
        %v4413 = vsel %vm1045, %v4319, 0
        %v4416 = vsel %vm1045, %v4321, 0
        %4418 = vmatpush.bf16.xpose.msra.mxu0 %v4392
        %4419 = vmatpush.bf16.xpose.msra.mxu0 %v4389
        %4420 = vmatpush.bf16.xpose.msra.mxu0 %v4386
        %4421 = vmatpush.bf16.xpose.msra.mxu0 %v4383
        %4422 = vmatpush.bf16.xpose.msra.mxu0 %v4380
        %4423 = vmatpush.bf16.xpose.msra.mxu0 %v4377
        %4424 = vmatpush.bf16.xpose.msra.mxu0 %v4374
        %4425 = vmatpush.bf16.xpose.msra.mxu0 %v4371
        %4426 = vmatmul.bf16.gmra.mxu0 %v4323
        %v4427 = vpop.f32.mrf.mxu0
        %v4428 = vadd.f32 0.0, %v4427
        %v4429 = vpop.f32.mrf.mxu0
        %v4430 = vadd.f32 0.0, %v4429
        %4431 = vmatmul.bf16.gmra.mxu0 %v4326
        %v4432 = vpop.f32.mrf.mxu0
        %v4433 = vadd.f32 0.0, %v4432
        %v4434 = vpop.f32.mrf.mxu0
        %v4435 = vadd.f32 0.0, %v4434
        %4436 = vmatmul.bf16.gmra.mxu0 %v4329
        %v4437 = vpop.f32.mrf.mxu0
        %v4438 = vadd.f32 0.0, %v4437
        %v4439 = vpop.f32.mrf.mxu0
        %v4440 = vadd.f32 0.0, %v4439
        %4441 = vmatmul.bf16.gmra.mxu0 %v4332
        %v4442 = vpop.f32.mrf.mxu0
        %v4443 = vadd.f32 0.0, %v4442
        %v4444 = vpop.f32.mrf.mxu0
        %v4445 = vadd.f32 0.0, %v4444
        %4446 = vmatmul.bf16.gmra.mxu0 %v4335
        %v4447 = vpop.f32.mrf.mxu0
        %v4448 = vadd.f32 0.0, %v4447
        %v4449 = vpop.f32.mrf.mxu0
        %v4450 = vadd.f32 0.0, %v4449
        %4451 = vmatmul.bf16.gmra.mxu0 %v4338
        %v4452 = vpop.f32.mrf.mxu0
        %v4453 = vadd.f32 0.0, %v4452
        %v4454 = vpop.f32.mrf.mxu0
        %v4455 = vadd.f32 0.0, %v4454
        %4456 = vmatmul.bf16.gmra.mxu0 %v4341
        %v4457 = vpop.f32.mrf.mxu0
        %v4458 = vadd.f32 0.0, %v4457
        %v4459 = vpop.f32.mrf.mxu0
        %v4460 = vadd.f32 0.0, %v4459
        %4461 = vmatmul.bf16.gmra.mxu0 %v4344
        %v4462 = vpop.f32.mrf.mxu0
        %v4463 = vadd.f32 0.0, %v4462
        %v4464 = vpop.f32.mrf.mxu0
        %v4465 = vadd.f32 0.0, %v4464
        %4466 = vmatmul.bf16.gmra.mxu0 %v4347
        %v4467 = vpop.f32.mrf.mxu0
        %v4468 = vadd.f32 0.0, %v4467
        %v4469 = vpop.f32.mrf.mxu0
        %v4470 = vadd.f32 0.0, %v4469
        %4471 = vmatmul.bf16.gmra.mxu0 %v4350
        %v4472 = vpop.f32.mrf.mxu0
        %v4473 = vadd.f32 0.0, %v4472
        %v4474 = vpop.f32.mrf.mxu0
        %v4475 = vadd.f32 0.0, %v4474
        %4476 = vmatmul.bf16.gmra.mxu0 %v4353
        %v4477 = vpop.f32.mrf.mxu0
        %v4478 = vadd.f32 0.0, %v4477
        %v4479 = vpop.f32.mrf.mxu0
        %v4480 = vadd.f32 0.0, %v4479
        %4481 = vmatmul.bf16.gmra.mxu0 %v4356
        %v4482 = vpop.f32.mrf.mxu0
        %v4483 = vadd.f32 0.0, %v4482
        %v4484 = vpop.f32.mrf.mxu0
        %v4485 = vadd.f32 0.0, %v4484
        %4486 = vmatmul.bf16.gmra.mxu0 %v4359
        %v4487 = vpop.f32.mrf.mxu0
        %v4488 = vadd.f32 0.0, %v4487
        %v4489 = vpop.f32.mrf.mxu0
        %v4490 = vadd.f32 0.0, %v4489
        %4491 = vmatmul.bf16.gmra.mxu0 %v4362
        %v4492 = vpop.f32.mrf.mxu0
        %v4493 = vadd.f32 0.0, %v4492
        %v4494 = vpop.f32.mrf.mxu0
        %v4495 = vadd.f32 0.0, %v4494
        %4496 = vmatmul.bf16.gmra.mxu0 %v4365
        %v4497 = vpop.f32.mrf.mxu0
        %v4498 = vadd.f32 0.0, %v4497
        %v4499 = vpop.f32.mrf.mxu0
        %v4500 = vadd.f32 0.0, %v4499
        %4501 = vmatmul.bf16.gmra.mxu0 %v4368
        %v4502 = vpop.f32.mrf.mxu0
        %v4503 = vadd.f32 0.0, %v4502
        %v4504 = vpop.f32.mrf.mxu0
        %v4505 = vadd.f32 0.0, %v4504
        %4506 = vdwg.mxu0
        %4507 = vmatpush.bf16.xpose.msra.mxu0 %v4416
        %4508 = vmatpush.bf16.xpose.msra.mxu0 %v4413
        %4509 = vmatpush.bf16.xpose.msra.mxu0 %v4410
        %4510 = vmatpush.bf16.xpose.msra.mxu0 %v4407
        %4511 = vmatpush.bf16.xpose.msra.mxu0 %v4404
        %4512 = vmatpush.bf16.xpose.msra.mxu0 %v4401
        %4513 = vmatpush.bf16.xpose.msra.mxu0 %v4398
        %4514 = vmatpush.bf16.xpose.msra.mxu0 %v4395
        %4515 = vmatmul.bf16.gmra.mxu0 %v4323
        %v4516 = vpop.f32.mrf.mxu0
        %v4517 = vadd.f32 0.0, %v4516
        %v4518 = vpop.f32.mrf.mxu0
        %v4519 = vadd.f32 0.0, %v4518
        %4520 = vmatmul.bf16.gmra.mxu0 %v4326
        %v4521 = vpop.f32.mrf.mxu0
        %v4522 = vadd.f32 0.0, %v4521
        %v4523 = vpop.f32.mrf.mxu0
        %v4524 = vadd.f32 0.0, %v4523
        %4525 = vmatmul.bf16.gmra.mxu0 %v4329
        %v4526 = vpop.f32.mrf.mxu0
        %v4527 = vadd.f32 0.0, %v4526
        %v4528 = vpop.f32.mrf.mxu0
        %v4529 = vadd.f32 0.0, %v4528
        %4530 = vmatmul.bf16.gmra.mxu0 %v4332
        %v4531 = vpop.f32.mrf.mxu0
        %v4532 = vadd.f32 0.0, %v4531
        %v4533 = vpop.f32.mrf.mxu0
        %v4534 = vadd.f32 0.0, %v4533
        %4535 = vmatmul.bf16.gmra.mxu0 %v4335
        %v4536 = vpop.f32.mrf.mxu0
        %v4537 = vadd.f32 0.0, %v4536
        %v4538 = vpop.f32.mrf.mxu0
        %v4539 = vadd.f32 0.0, %v4538
        %4540 = vmatmul.bf16.gmra.mxu0 %v4338
        %v4541 = vpop.f32.mrf.mxu0
        %v4542 = vadd.f32 0.0, %v4541
        %v4543 = vpop.f32.mrf.mxu0
        %v4544 = vadd.f32 0.0, %v4543
        %4545 = vmatmul.bf16.gmra.mxu0 %v4341
        %v4546 = vpop.f32.mrf.mxu0
        %v4547 = vadd.f32 0.0, %v4546
        %v4548 = vpop.f32.mrf.mxu0
        %v4549 = vadd.f32 0.0, %v4548
        %4550 = vmatmul.bf16.gmra.mxu0 %v4344
        %v4551 = vpop.f32.mrf.mxu0
        %v4552 = vadd.f32 0.0, %v4551
        %v4553 = vpop.f32.mrf.mxu0
        %v4554 = vadd.f32 0.0, %v4553
        %4555 = vmatmul.bf16.gmra.mxu0 %v4347
        %v4556 = vpop.f32.mrf.mxu0
        %v4557 = vadd.f32 0.0, %v4556
        %v4558 = vpop.f32.mrf.mxu0
        %v4559 = vadd.f32 0.0, %v4558
        %4560 = vmatmul.bf16.gmra.mxu0 %v4350
        %v4561 = vpop.f32.mrf.mxu0
        %v4562 = vadd.f32 0.0, %v4561
        %v4563 = vpop.f32.mrf.mxu0
        %v4564 = vadd.f32 0.0, %v4563
        %4565 = vmatmul.bf16.gmra.mxu0 %v4353
        %v4566 = vpop.f32.mrf.mxu0
        %v4567 = vadd.f32 0.0, %v4566
        %v4568 = vpop.f32.mrf.mxu0
        %v4569 = vadd.f32 0.0, %v4568
        %4570 = vmatmul.bf16.gmra.mxu0 %v4356
        %v4571 = vpop.f32.mrf.mxu0
        %v4572 = vadd.f32 0.0, %v4571
        %v4573 = vpop.f32.mrf.mxu0
        %v4574 = vadd.f32 0.0, %v4573
        %4575 = vmatmul.bf16.gmra.mxu0 %v4359
        %v4576 = vpop.f32.mrf.mxu0
        %v4577 = vadd.f32 0.0, %v4576
        %v4578 = vpop.f32.mrf.mxu0
        %v4579 = vadd.f32 0.0, %v4578
        %4580 = vmatmul.bf16.gmra.mxu0 %v4362
        %v4581 = vpop.f32.mrf.mxu0
        %v4582 = vadd.f32 0.0, %v4581
        %v4583 = vpop.f32.mrf.mxu0
        %v4584 = vadd.f32 0.0, %v4583
        %4585 = vmatmul.bf16.gmra.mxu0 %v4365
        %v4586 = vpop.f32.mrf.mxu0
        %v4587 = vadd.f32 0.0, %v4586
        %v4588 = vpop.f32.mrf.mxu0
        %v4589 = vadd.f32 0.0, %v4588
        %4590 = vmatmul.bf16.gmra.mxu0 %v4368
        %v4591 = vpop.f32.mrf.mxu0
        %v4592 = vadd.f32 0.0, %v4591
        %v4593 = vpop.f32.mrf.mxu0
        %v4594 = vadd.f32 0.0, %v4593
        %4595 = vdwg.mxu0
        %v4596 = vmax.f32 %v4428, %v4517
        %4597 = vmax.xlane.f32.xlu0 %v4596
        %v4598 = vpop.xlane.xlu0 %4597
        %v4599 = vmax.f32 %v4430, %v4519
        %4600 = vmax.xlane.f32.xlu0 %v4599
        %v4601 = vpop.xlane.xlu0 %4600
        %v4602 = vmax.f32 %v4433, %v4522
        %4603 = vmax.xlane.f32.xlu0 %v4602
        %v4604 = vpop.xlane.xlu0 %4603
        %v4605 = vmax.f32 %v4435, %v4524
        %4606 = vmax.xlane.f32.xlu0 %v4605
        %v4607 = vpop.xlane.xlu0 %4606
        %v4608 = vmax.f32 %v4438, %v4527
        %4609 = vmax.xlane.f32.xlu0 %v4608
        %v4610 = vpop.xlane.xlu0 %4609
        %v4611 = vmax.f32 %v4440, %v4529
        %4612 = vmax.xlane.f32.xlu0 %v4611
        %v4613 = vpop.xlane.xlu0 %4612
        %v4614 = vmax.f32 %v4443, %v4532
        %4615 = vmax.xlane.f32.xlu0 %v4614
        %v4616 = vpop.xlane.xlu0 %4615
        %v4617 = vmax.f32 %v4445, %v4534
        %4618 = vmax.xlane.f32.xlu0 %v4617
        %v4619 = vpop.xlane.xlu0 %4618
        %v4620 = vmax.f32 %v4448, %v4537
        %4621 = vmax.xlane.f32.xlu0 %v4620
        %v4622 = vpop.xlane.xlu0 %4621
        %v4623 = vmax.f32 %v4450, %v4539
        %4624 = vmax.xlane.f32.xlu0 %v4623
        %v4625 = vpop.xlane.xlu0 %4624
        %v4626 = vmax.f32 %v4453, %v4542
        %4627 = vmax.xlane.f32.xlu0 %v4626
        %v4628 = vpop.xlane.xlu0 %4627
        %v4629 = vmax.f32 %v4455, %v4544
        %4630 = vmax.xlane.f32.xlu0 %v4629
        %v4631 = vpop.xlane.xlu0 %4630
        %v4632 = vmax.f32 %v4458, %v4547
        %4633 = vmax.xlane.f32.xlu0 %v4632
        %v4634 = vpop.xlane.xlu0 %4633
        %v4635 = vmax.f32 %v4460, %v4549
        %4636 = vmax.xlane.f32.xlu0 %v4635
        %v4637 = vpop.xlane.xlu0 %4636
        %v4638 = vmax.f32 %v4463, %v4552
        %4639 = vmax.xlane.f32.xlu0 %v4638
        %v4640 = vpop.xlane.xlu0 %4639
        %v4641 = vmax.f32 %v4465, %v4554
        %4642 = vmax.xlane.f32.xlu0 %v4641
        %v4643 = vpop.xlane.xlu0 %4642
        %v4644 = vmax.f32 %v4468, %v4557
        %4645 = vmax.xlane.f32.xlu0 %v4644
        %v4646 = vpop.xlane.xlu0 %4645
        %v4647 = vmax.f32 %v4470, %v4559
        %4648 = vmax.xlane.f32.xlu0 %v4647
        %v4649 = vpop.xlane.xlu0 %4648
        %v4650 = vmax.f32 %v4473, %v4562
        %4651 = vmax.xlane.f32.xlu0 %v4650
        %v4652 = vpop.xlane.xlu0 %4651
        %v4653 = vmax.f32 %v4475, %v4564
        %4654 = vmax.xlane.f32.xlu0 %v4653
        %v4655 = vpop.xlane.xlu0 %4654
        %v4656 = vmax.f32 %v4478, %v4567
        %4657 = vmax.xlane.f32.xlu0 %v4656
        %v4658 = vpop.xlane.xlu0 %4657
        %v4659 = vmax.f32 %v4480, %v4569
        %4660 = vmax.xlane.f32.xlu0 %v4659
        %v4661 = vpop.xlane.xlu0 %4660
        %v4662 = vmax.f32 %v4483, %v4572
        %4663 = vmax.xlane.f32.xlu0 %v4662
        %v4664 = vpop.xlane.xlu0 %4663
        %v4665 = vmax.f32 %v4485, %v4574
        %4666 = vmax.xlane.f32.xlu0 %v4665
        %v4667 = vpop.xlane.xlu0 %4666
        %v4668 = vmax.f32 %v4488, %v4577
        %4669 = vmax.xlane.f32.xlu0 %v4668
        %v4670 = vpop.xlane.xlu0 %4669
        %v4671 = vmax.f32 %v4490, %v4579
        %4672 = vmax.xlane.f32.xlu0 %v4671
        %v4673 = vpop.xlane.xlu0 %4672
        %v4674 = vmax.f32 %v4493, %v4582
        %4675 = vmax.xlane.f32.xlu0 %v4674
        %v4676 = vpop.xlane.xlu0 %4675
        %v4677 = vmax.f32 %v4495, %v4584
        %4678 = vmax.xlane.f32.xlu0 %v4677
        %v4679 = vpop.xlane.xlu0 %4678
        %v4680 = vmax.f32 %v4498, %v4587
        %4681 = vmax.xlane.f32.xlu0 %v4680
        %v4682 = vpop.xlane.xlu0 %4681
        %v4683 = vmax.f32 %v4500, %v4589
        %4684 = vmax.xlane.f32.xlu0 %v4683
        %v4685 = vpop.xlane.xlu0 %4684
        %v4686 = vmax.f32 %v4503, %v4592
        %4687 = vmax.xlane.f32.xlu0 %v4686
        %v4688 = vpop.xlane.xlu0 %4687
        %v4689 = vmax.f32 %v4505, %v4594
        %4690 = vmax.xlane.f32.xlu0 %v4689
        %v4691 = vpop.xlane.xlu0 %4690
        %v4692 = vsub.f32 %v4428, %v4598
        %v4693 = vsub.f32 %v4517, %v4598
        %v4694 = vsub.f32 %v4430, %v4601
        %v4695 = vsub.f32 %v4519, %v4601
        %v4696 = vsub.f32 %v4433, %v4604
        %v4697 = vsub.f32 %v4522, %v4604
        %v4698 = vsub.f32 %v4435, %v4607
        %v4699 = vsub.f32 %v4524, %v4607
        %v4700 = vsub.f32 %v4438, %v4610
        %v4701 = vsub.f32 %v4527, %v4610
        %v4702 = vsub.f32 %v4440, %v4613
        %v4703 = vsub.f32 %v4529, %v4613
        %v4704 = vsub.f32 %v4443, %v4616
        %v4705 = vsub.f32 %v4532, %v4616
        %v4706 = vsub.f32 %v4445, %v4619
        %v4707 = vsub.f32 %v4534, %v4619
        %v4708 = vsub.f32 %v4448, %v4622
        %v4709 = vsub.f32 %v4537, %v4622
        %v4710 = vsub.f32 %v4450, %v4625
        %v4711 = vsub.f32 %v4539, %v4625
        %v4712 = vsub.f32 %v4453, %v4628
        %v4713 = vsub.f32 %v4542, %v4628
        %v4714 = vsub.f32 %v4455, %v4631
        %v4715 = vsub.f32 %v4544, %v4631
        %v4716 = vsub.f32 %v4458, %v4634
        %v4717 = vsub.f32 %v4547, %v4634
        %v4718 = vsub.f32 %v4460, %v4637
        %v4719 = vsub.f32 %v4549, %v4637
        %v4720 = vsub.f32 %v4463, %v4640
        %v4721 = vsub.f32 %v4552, %v4640
        %v4722 = vsub.f32 %v4465, %v4643
        %v4723 = vsub.f32 %v4554, %v4643
        %v4724 = vsub.f32 %v4468, %v4646
        %v4725 = vsub.f32 %v4557, %v4646
        %v4726 = vsub.f32 %v4470, %v4649
        %v4727 = vsub.f32 %v4559, %v4649
        %v4728 = vsub.f32 %v4473, %v4652
        %v4729 = vsub.f32 %v4562, %v4652
        %v4730 = vsub.f32 %v4475, %v4655
        %v4731 = vsub.f32 %v4564, %v4655
        %v4732 = vsub.f32 %v4478, %v4658
        %v4733 = vsub.f32 %v4567, %v4658
        %v4734 = vsub.f32 %v4480, %v4661
        %v4735 = vsub.f32 %v4569, %v4661
        %v4736 = vsub.f32 %v4483, %v4664
        %v4737 = vsub.f32 %v4572, %v4664
        %v4738 = vsub.f32 %v4485, %v4667
        %v4739 = vsub.f32 %v4574, %v4667
        %v4740 = vsub.f32 %v4488, %v4670
        %v4741 = vsub.f32 %v4577, %v4670
        %v4742 = vsub.f32 %v4490, %v4673
        %v4743 = vsub.f32 %v4579, %v4673
        %v4744 = vsub.f32 %v4493, %v4676
        %v4745 = vsub.f32 %v4582, %v4676
        %v4746 = vsub.f32 %v4495, %v4679
        %v4747 = vsub.f32 %v4584, %v4679
        %v4748 = vsub.f32 %v4498, %v4682
        %v4749 = vsub.f32 %v4587, %v4682
        %v4750 = vsub.f32 %v4500, %v4685
        %v4751 = vsub.f32 %v4589, %v4685
        %v4752 = vsub.f32 %v4503, %v4688
        %v4753 = vsub.f32 %v4592, %v4688
        %v4754 = vsub.f32 %v4505, %v4691
        %v4755 = vsub.f32 %v4594, %v4691
        %v4756 = vmul.f32 %v4692, 1.442695
        %v4757 = vpow.pop %v4756
        %v4758 = vmul.f32 %v4693, 1.442695
        %v4759 = vpow.pop %v4758
        %v4760 = vmul.f32 %v4694, 1.442695
        %v4761 = vpow.pop %v4760
        %v4762 = vmul.f32 %v4695, 1.442695
        %v4763 = vpow.pop %v4762
        %v4764 = vmul.f32 %v4696, 1.442695
        %v4765 = vpow.pop %v4764
        %v4766 = vmul.f32 %v4697, 1.442695
        %v4767 = vpow.pop %v4766
        %v4768 = vmul.f32 %v4698, 1.442695
        %v4769 = vpow.pop %v4768
        %v4770 = vmul.f32 %v4699, 1.442695
        %v4771 = vpow.pop %v4770
        %v4772 = vmul.f32 %v4700, 1.442695
        %v4773 = vpow.pop %v4772
        %v4774 = vmul.f32 %v4701, 1.442695
        %v4775 = vpow.pop %v4774
        %v4776 = vmul.f32 %v4702, 1.442695
        %v4777 = vpow.pop %v4776
        %v4778 = vmul.f32 %v4703, 1.442695
        %v4779 = vpow.pop %v4778
        %v4780 = vmul.f32 %v4704, 1.442695
        %v4781 = vpow.pop %v4780
        %v4782 = vmul.f32 %v4705, 1.442695
        %v4783 = vpow.pop %v4782
        %v4784 = vmul.f32 %v4706, 1.442695
        %v4785 = vpow.pop %v4784
        %v4786 = vmul.f32 %v4707, 1.442695
        %v4787 = vpow.pop %v4786
        %v4788 = vmul.f32 %v4708, 1.442695
        %v4789 = vpow.pop %v4788
        %v4790 = vmul.f32 %v4709, 1.442695
        %v4791 = vpow.pop %v4790
        %v4792 = vmul.f32 %v4710, 1.442695
        %v4793 = vpow.pop %v4792
        %v4794 = vmul.f32 %v4711, 1.442695
        %v4795 = vpow.pop %v4794
        %v4796 = vmul.f32 %v4712, 1.442695
        %v4797 = vpow.pop %v4796
        %v4798 = vmul.f32 %v4713, 1.442695
        %v4799 = vpow.pop %v4798
        %v4800 = vmul.f32 %v4714, 1.442695
        %v4801 = vpow.pop %v4800
        %v4802 = vmul.f32 %v4715, 1.442695
        %v4803 = vpow.pop %v4802
        %v4804 = vmul.f32 %v4716, 1.442695
        %v4805 = vpow.pop %v4804
        %v4806 = vmul.f32 %v4717, 1.442695
        %v4807 = vpow.pop %v4806
        %v4808 = vmul.f32 %v4718, 1.442695
        %v4809 = vpow.pop %v4808
        %v4810 = vmul.f32 %v4719, 1.442695
        %v4811 = vpow.pop %v4810
        %v4812 = vmul.f32 %v4720, 1.442695
        %v4813 = vpow.pop %v4812
        %v4814 = vmul.f32 %v4721, 1.442695
        %v4815 = vpow.pop %v4814
        %v4816 = vmul.f32 %v4722, 1.442695
        %v4817 = vpow.pop %v4816
        %v4818 = vmul.f32 %v4723, 1.442695
        %v4819 = vpow.pop %v4818
        %v4820 = vmul.f32 %v4724, 1.442695
        %v4821 = vpow.pop %v4820
        %v4822 = vmul.f32 %v4725, 1.442695
        %v4823 = vpow.pop %v4822
        %v4824 = vmul.f32 %v4726, 1.442695
        %v4825 = vpow.pop %v4824
        %v4826 = vmul.f32 %v4727, 1.442695
        %v4827 = vpow.pop %v4826
        %v4828 = vmul.f32 %v4728, 1.442695
        %v4829 = vpow.pop %v4828
        %v4830 = vmul.f32 %v4729, 1.442695
        %v4831 = vpow.pop %v4830
        %v4832 = vmul.f32 %v4730, 1.442695
        %v4833 = vpow.pop %v4832
        %v4834 = vmul.f32 %v4731, 1.442695
        %v4835 = vpow.pop %v4834
        %v4836 = vmul.f32 %v4732, 1.442695
        %v4837 = vpow.pop %v4836
        %v4838 = vmul.f32 %v4733, 1.442695
        %v4839 = vpow.pop %v4838
        %v4840 = vmul.f32 %v4734, 1.442695
        %v4841 = vpow.pop %v4840
        %v4842 = vmul.f32 %v4735, 1.442695
        %v4843 = vpow.pop %v4842
        %v4844 = vmul.f32 %v4736, 1.442695
        %v4845 = vpow.pop %v4844
        %v4846 = vmul.f32 %v4737, 1.442695
        %v4847 = vpow.pop %v4846
        %v4848 = vmul.f32 %v4738, 1.442695
        %v4849 = vpow.pop %v4848
        %v4850 = vmul.f32 %v4739, 1.442695
        %v4851 = vpow.pop %v4850
        %v4852 = vmul.f32 %v4740, 1.442695
        %v4853 = vpow.pop %v4852
        %v4854 = vmul.f32 %v4741, 1.442695
        %v4855 = vpow.pop %v4854
        %v4856 = vmul.f32 %v4742, 1.442695
        %v4857 = vpow.pop %v4856
        %v4858 = vmul.f32 %v4743, 1.442695
        %v4859 = vpow.pop %v4858
        %v4860 = vmul.f32 %v4744, 1.442695
        %v4861 = vpow.pop %v4860
        %v4862 = vmul.f32 %v4745, 1.442695
        %v4863 = vpow.pop %v4862
        %v4864 = vmul.f32 %v4746, 1.442695
        %v4865 = vpow.pop %v4864
        %v4866 = vmul.f32 %v4747, 1.442695
        %v4867 = vpow.pop %v4866
        %v4868 = vmul.f32 %v4748, 1.442695
        %v4869 = vpow.pop %v4868
        %v4870 = vmul.f32 %v4749, 1.442695
        %v4871 = vpow.pop %v4870
        %v4872 = vmul.f32 %v4750, 1.442695
        %v4873 = vpow.pop %v4872
        %v4874 = vmul.f32 %v4751, 1.442695
        %v4875 = vpow.pop %v4874
        %v4876 = vmul.f32 %v4752, 1.442695
        %v4877 = vpow.pop %v4876
        %v4878 = vmul.f32 %v4753, 1.442695
        %v4879 = vpow.pop %v4878
        %v4880 = vmul.f32 %v4754, 1.442695
        %v4881 = vpow.pop %v4880
        %v4882 = vmul.f32 %v4755, 1.442695
        %v4883 = vpow.pop %v4882
        %v4884 = vadd.f32 %v4757, %v4759
        %4885 = vadd.xlane.f32.xlu0 %v4884
        %v4886 = vpop.xlane.xlu0 %4885
        %v4887 = vadd.f32 %v4761, %v4763
        %4888 = vadd.xlane.f32.xlu0 %v4887
        %v4889 = vpop.xlane.xlu0 %4888
        %v4890 = vadd.f32 %v4765, %v4767
        %4891 = vadd.xlane.f32.xlu0 %v4890
        %v4892 = vpop.xlane.xlu0 %4891
        %v4893 = vadd.f32 %v4769, %v4771
        %4894 = vadd.xlane.f32.xlu0 %v4893
        %v4895 = vpop.xlane.xlu0 %4894
        %v4896 = vadd.f32 %v4773, %v4775
        %4897 = vadd.xlane.f32.xlu0 %v4896
        %v4898 = vpop.xlane.xlu0 %4897
        %v4899 = vadd.f32 %v4777, %v4779
        %4900 = vadd.xlane.f32.xlu0 %v4899
        %v4901 = vpop.xlane.xlu0 %4900
        %v4902 = vadd.f32 %v4781, %v4783
        %4903 = vadd.xlane.f32.xlu0 %v4902
        %v4904 = vpop.xlane.xlu0 %4903
        %v4905 = vadd.f32 %v4785, %v4787
        %4906 = vadd.xlane.f32.xlu0 %v4905
        %v4907 = vpop.xlane.xlu0 %4906
        %v4908 = vadd.f32 %v4789, %v4791
        %4909 = vadd.xlane.f32.xlu0 %v4908
        %v4910 = vpop.xlane.xlu0 %4909
        %v4911 = vadd.f32 %v4793, %v4795
        %4912 = vadd.xlane.f32.xlu0 %v4911
        %v4913 = vpop.xlane.xlu0 %4912
        %v4914 = vadd.f32 %v4797, %v4799
        %4915 = vadd.xlane.f32.xlu0 %v4914
        %v4916 = vpop.xlane.xlu0 %4915
        %v4917 = vadd.f32 %v4801, %v4803
        %4918 = vadd.xlane.f32.xlu0 %v4917
        %v4919 = vpop.xlane.xlu0 %4918
        %v4920 = vadd.f32 %v4805, %v4807
        %4921 = vadd.xlane.f32.xlu0 %v4920
        %v4922 = vpop.xlane.xlu0 %4921
        %v4923 = vadd.f32 %v4809, %v4811
        %4924 = vadd.xlane.f32.xlu0 %v4923
        %v4925 = vpop.xlane.xlu0 %4924
        %v4926 = vadd.f32 %v4813, %v4815
        %4927 = vadd.xlane.f32.xlu0 %v4926
        %v4928 = vpop.xlane.xlu0 %4927
        %v4929 = vadd.f32 %v4817, %v4819
        %4930 = vadd.xlane.f32.xlu0 %v4929
        %v4931 = vpop.xlane.xlu0 %4930
        %v4932 = vadd.f32 %v4821, %v4823
        %4933 = vadd.xlane.f32.xlu0 %v4932
        %v4934 = vpop.xlane.xlu0 %4933
        %v4935 = vadd.f32 %v4825, %v4827
        %4936 = vadd.xlane.f32.xlu0 %v4935
        %v4937 = vpop.xlane.xlu0 %4936
        %v4938 = vadd.f32 %v4829, %v4831
        %4939 = vadd.xlane.f32.xlu0 %v4938
        %v4940 = vpop.xlane.xlu0 %4939
        %v4941 = vadd.f32 %v4833, %v4835
        %4942 = vadd.xlane.f32.xlu0 %v4941
        %v4943 = vpop.xlane.xlu0 %4942
        %v4944 = vadd.f32 %v4837, %v4839
        %4945 = vadd.xlane.f32.xlu0 %v4944
        %v4946 = vpop.xlane.xlu0 %4945
        %v4947 = vadd.f32 %v4841, %v4843
        %4948 = vadd.xlane.f32.xlu0 %v4947
        %v4949 = vpop.xlane.xlu0 %4948
        %v4950 = vadd.f32 %v4845, %v4847
        %4951 = vadd.xlane.f32.xlu0 %v4950
        %v4952 = vpop.xlane.xlu0 %4951
        %v4953 = vadd.f32 %v4849, %v4851
        %4954 = vadd.xlane.f32.xlu0 %v4953
        %v4955 = vpop.xlane.xlu0 %4954
        %v4956 = vadd.f32 %v4853, %v4855
        %4957 = vadd.xlane.f32.xlu0 %v4956
        %v4958 = vpop.xlane.xlu0 %4957
        %v4959 = vadd.f32 %v4857, %v4859
        %4960 = vadd.xlane.f32.xlu0 %v4959
        %v4961 = vpop.xlane.xlu0 %4960
        %v4962 = vadd.f32 %v4861, %v4863
        %4963 = vadd.xlane.f32.xlu0 %v4962
        %v4964 = vpop.xlane.xlu0 %4963
        %v4965 = vadd.f32 %v4865, %v4867
        %4966 = vadd.xlane.f32.xlu0 %v4965
        %v4967 = vpop.xlane.xlu0 %4966
        %v4968 = vadd.f32 %v4869, %v4871
        %4969 = vadd.xlane.f32.xlu0 %v4968
        %v4970 = vpop.xlane.xlu0 %4969
        %v4971 = vadd.f32 %v4873, %v4875
        %4972 = vadd.xlane.f32.xlu0 %v4971
        %v4973 = vpop.xlane.xlu0 %4972
        %v4974 = vadd.f32 %v4877, %v4879
        %4975 = vadd.xlane.f32.xlu0 %v4974
        %v4976 = vpop.xlane.xlu0 %4975
        %v4977 = vadd.f32 %v4881, %v4883
        %4978 = vadd.xlane.f32.xlu0 %v4977
        %v4979 = vpop.xlane.xlu0 %4978
        %v4980 = vpack.c.bf16 %v4761, %v4757
        %v4981 = vpack.c.bf16 %v4763, %v4759
        %v4982 = vpack.c.bf16 %v4769, %v4765
        %v4983 = vpack.c.bf16 %v4771, %v4767
        %v4984 = vpack.c.bf16 %v4777, %v4773
        %v4985 = vpack.c.bf16 %v4779, %v4775
        %v4986 = vpack.c.bf16 %v4785, %v4781
        %v4987 = vpack.c.bf16 %v4787, %v4783
        %v4988 = vpack.c.bf16 %v4793, %v4789
        %v4989 = vpack.c.bf16 %v4795, %v4791
        %v4990 = vpack.c.bf16 %v4801, %v4797
        %v4991 = vpack.c.bf16 %v4803, %v4799
        %v4992 = vpack.c.bf16 %v4809, %v4805
        %v4993 = vpack.c.bf16 %v4811, %v4807
        %v4994 = vpack.c.bf16 %v4817, %v4813
        %v4995 = vpack.c.bf16 %v4819, %v4815
        %v4996 = vpack.c.bf16 %v4825, %v4821
        %v4997 = vpack.c.bf16 %v4827, %v4823
        %v4998 = vpack.c.bf16 %v4833, %v4829
        %v4999 = vpack.c.bf16 %v4835, %v4831
        %v5000 = vpack.c.bf16 %v4841, %v4837
        %v5001 = vpack.c.bf16 %v4843, %v4839
        %v5002 = vpack.c.bf16 %v4849, %v4845
        %v5003 = vpack.c.bf16 %v4851, %v4847
        %v5004 = vpack.c.bf16 %v4857, %v4853
        %v5005 = vpack.c.bf16 %v4859, %v4855
        %v5006 = vpack.c.bf16 %v4865, %v4861
        %v5007 = vpack.c.bf16 %v4867, %v4863
        %v5008 = vpack.c.bf16 %v4873, %v4869
        %v5009 = vpack.c.bf16 %v4875, %v4871
        %v5010 = vpack.c.bf16 %v4881, %v4877
        %v5011 = vpack.c.bf16 %v4883, %v4879
        %5012 = vrot.lane.b32.xlu0 %v1800, 32
        %v5013 = vpop.permute.xlu0 %5012
        %5014 = vrot.lane.b32.xlu0 %v1801, 32
        %v5015 = vpop.permute.xlu0 %5014
        %5016 = vrot.lane.b32.xlu0 %v1802, 32
        %v5017 = vpop.permute.xlu0 %5016
        %5018 = vrot.lane.b32.xlu0 %v1803, 32
        %v5019 = vpop.permute.xlu0 %5018
        %5020 = vrot.lane.b32.xlu0 %v1804, 32
        %v5021 = vpop.permute.xlu0 %5020
        %5022 = vrot.lane.b32.xlu0 %v1805, 32
        %v5023 = vpop.permute.xlu0 %5022
        %5024 = vrot.lane.b32.xlu0 %v1806, 32
        %v5025 = vpop.permute.xlu0 %5024
        %5026 = vrot.lane.b32.xlu0 %v1807, 32
        %v5027 = vpop.permute.xlu0 %5026
        %5028 = vrot.lane.b32.xlu0 %v1808, 32
        %v5029 = vpop.permute.xlu0 %5028
        %5030 = vrot.lane.b32.xlu0 %v1809, 32
        %v5031 = vpop.permute.xlu0 %5030
        %5032 = vrot.lane.b32.xlu0 %v1810, 32
        %v5033 = vpop.permute.xlu0 %5032
        %5034 = vrot.lane.b32.xlu0 %v1811, 32
        %v5035 = vpop.permute.xlu0 %5034
        %5036 = vrot.lane.b32.xlu0 %v1812, 32
        %v5037 = vpop.permute.xlu0 %5036
        %5038 = vrot.lane.b32.xlu0 %v1813, 32
        %v5039 = vpop.permute.xlu0 %5038
        %5040 = vrot.lane.b32.xlu0 %v1814, 32
        %v5041 = vpop.permute.xlu0 %5040
        %5042 = vrot.lane.b32.xlu0 %v1815, 32
        %v5043 = vpop.permute.xlu0 %5042
        %5060 = vmatpush.bf16.msra.mxu0 %v5027
        %5061 = vmatpush.bf16.msra.mxu0 %v5025
        %5062 = vmatpush.bf16.msra.mxu0 %v5023
        %5063 = vmatpush.bf16.msra.mxu0 %v5021
        %5064 = vmatpush.bf16.msra.mxu0 %v5019
        %5065 = vmatpush.bf16.msra.mxu0 %v5017
        %5066 = vmatpush.bf16.msra.mxu0 %v5015
        %5067 = vmatpush.bf16.msra.mxu0 %v5013
        %5068 = vmatmul.bf16.gmra.mxu0 %v4980
        %v5069 = vpop.f32.mrf.mxu0
        %v5070 = vadd.f32 0.0, %v5069
        %v5071 = vpop.f32.mrf.mxu0
        %v5072 = vadd.f32 0.0, %v5071
        %5073 = vmatmul.bf16.gmra.mxu0 %v4982
        %v5074 = vpop.f32.mrf.mxu0
        %v5075 = vadd.f32 0.0, %v5074
        %v5076 = vpop.f32.mrf.mxu0
        %v5077 = vadd.f32 0.0, %v5076
        %5078 = vmatmul.bf16.gmra.mxu0 %v4984
        %v5079 = vpop.f32.mrf.mxu0
        %v5080 = vadd.f32 0.0, %v5079
        %v5081 = vpop.f32.mrf.mxu0
        %v5082 = vadd.f32 0.0, %v5081
        %5083 = vmatmul.bf16.gmra.mxu0 %v4986
        %v5084 = vpop.f32.mrf.mxu0
        %v5085 = vadd.f32 0.0, %v5084
        %v5086 = vpop.f32.mrf.mxu0
        %v5087 = vadd.f32 0.0, %v5086
        %5088 = vmatmul.bf16.gmra.mxu0 %v4988
        %v5089 = vpop.f32.mrf.mxu0
        %v5090 = vadd.f32 0.0, %v5089
        %v5091 = vpop.f32.mrf.mxu0
        %v5092 = vadd.f32 0.0, %v5091
        %5093 = vmatmul.bf16.gmra.mxu0 %v4990
        %v5094 = vpop.f32.mrf.mxu0
        %v5095 = vadd.f32 0.0, %v5094
        %v5096 = vpop.f32.mrf.mxu0
        %v5097 = vadd.f32 0.0, %v5096
        %5098 = vmatmul.bf16.gmra.mxu0 %v4992
        %v5099 = vpop.f32.mrf.mxu0
        %v5100 = vadd.f32 0.0, %v5099
        %v5101 = vpop.f32.mrf.mxu0
        %v5102 = vadd.f32 0.0, %v5101
        %5103 = vmatmul.bf16.gmra.mxu0 %v4994
        %v5104 = vpop.f32.mrf.mxu0
        %v5105 = vadd.f32 0.0, %v5104
        %v5106 = vpop.f32.mrf.mxu0
        %v5107 = vadd.f32 0.0, %v5106
        %5108 = vmatmul.bf16.gmra.mxu0 %v4996
        %v5109 = vpop.f32.mrf.mxu0
        %v5110 = vadd.f32 0.0, %v5109
        %v5111 = vpop.f32.mrf.mxu0
        %v5112 = vadd.f32 0.0, %v5111
        %5113 = vmatmul.bf16.gmra.mxu0 %v4998
        %v5114 = vpop.f32.mrf.mxu0
        %v5115 = vadd.f32 0.0, %v5114
        %v5116 = vpop.f32.mrf.mxu0
        %v5117 = vadd.f32 0.0, %v5116
        %5118 = vmatmul.bf16.gmra.mxu0 %v5000
        %v5119 = vpop.f32.mrf.mxu0
        %v5120 = vadd.f32 0.0, %v5119
        %v5121 = vpop.f32.mrf.mxu0
        %v5122 = vadd.f32 0.0, %v5121
        %5123 = vmatmul.bf16.gmra.mxu0 %v5002
        %v5124 = vpop.f32.mrf.mxu0
        %v5125 = vadd.f32 0.0, %v5124
        %v5126 = vpop.f32.mrf.mxu0
        %v5127 = vadd.f32 0.0, %v5126
        %5128 = vmatmul.bf16.gmra.mxu0 %v5004
        %v5129 = vpop.f32.mrf.mxu0
        %v5130 = vadd.f32 0.0, %v5129
        %v5131 = vpop.f32.mrf.mxu0
        %v5132 = vadd.f32 0.0, %v5131
        %5133 = vmatmul.bf16.gmra.mxu0 %v5006
        %v5134 = vpop.f32.mrf.mxu0
        %v5135 = vadd.f32 0.0, %v5134
        %v5136 = vpop.f32.mrf.mxu0
        %v5137 = vadd.f32 0.0, %v5136
        %5138 = vmatmul.bf16.gmra.mxu0 %v5008
        %v5139 = vpop.f32.mrf.mxu0
        %v5140 = vadd.f32 0.0, %v5139
        %v5141 = vpop.f32.mrf.mxu0
        %v5142 = vadd.f32 0.0, %v5141
        %5143 = vmatmul.bf16.gmra.mxu0 %v5010
        %v5144 = vpop.f32.mrf.mxu0
        %v5145 = vadd.f32 0.0, %v5144
        %v5146 = vpop.f32.mrf.mxu0
        %v5147 = vadd.f32 0.0, %v5146
        %5148 = vdwg.mxu0
        %5149 = vmatpush.bf16.msra.mxu0 %v5043
        %5150 = vmatpush.bf16.msra.mxu0 %v5041
        %5151 = vmatpush.bf16.msra.mxu0 %v5039
        %5152 = vmatpush.bf16.msra.mxu0 %v5037
        %5153 = vmatpush.bf16.msra.mxu0 %v5035
        %5154 = vmatpush.bf16.msra.mxu0 %v5033
        %5155 = vmatpush.bf16.msra.mxu0 %v5031
        %5156 = vmatpush.bf16.msra.mxu0 %v5029
        %5157 = vmatmul.bf16.gmra.mxu0 %v4981
        %v5158 = vpop.f32.mrf.mxu0
        %v5159 = vadd.f32 %v5070, %v5158
        %v5160 = vpop.f32.mrf.mxu0
        %v5161 = vadd.f32 %v5072, %v5160
        %5162 = vmatmul.bf16.gmra.mxu0 %v4983
        %v5163 = vpop.f32.mrf.mxu0
        %v5164 = vadd.f32 %v5075, %v5163
        %v5165 = vpop.f32.mrf.mxu0
        %v5166 = vadd.f32 %v5077, %v5165
        %5167 = vmatmul.bf16.gmra.mxu0 %v4985
        %v5168 = vpop.f32.mrf.mxu0
        %v5169 = vadd.f32 %v5080, %v5168
        %v5170 = vpop.f32.mrf.mxu0
        %v5171 = vadd.f32 %v5082, %v5170
        %5172 = vmatmul.bf16.gmra.mxu0 %v4987
        %v5173 = vpop.f32.mrf.mxu0
        %v5174 = vadd.f32 %v5085, %v5173
        %v5175 = vpop.f32.mrf.mxu0
        %v5176 = vadd.f32 %v5087, %v5175
        %5177 = vmatmul.bf16.gmra.mxu0 %v4989
        %v5178 = vpop.f32.mrf.mxu0
        %v5179 = vadd.f32 %v5090, %v5178
        %v5180 = vpop.f32.mrf.mxu0
        %v5181 = vadd.f32 %v5092, %v5180
        %5182 = vmatmul.bf16.gmra.mxu0 %v4991
        %v5183 = vpop.f32.mrf.mxu0
        %v5184 = vadd.f32 %v5095, %v5183
        %v5185 = vpop.f32.mrf.mxu0
        %v5186 = vadd.f32 %v5097, %v5185
        %5187 = vmatmul.bf16.gmra.mxu0 %v4993
        %v5188 = vpop.f32.mrf.mxu0
        %v5189 = vadd.f32 %v5100, %v5188
        %v5190 = vpop.f32.mrf.mxu0
        %v5191 = vadd.f32 %v5102, %v5190
        %5192 = vmatmul.bf16.gmra.mxu0 %v4995
        %v5193 = vpop.f32.mrf.mxu0
        %v5194 = vadd.f32 %v5105, %v5193
        %v5195 = vpop.f32.mrf.mxu0
        %v5196 = vadd.f32 %v5107, %v5195
        %5197 = vmatmul.bf16.gmra.mxu0 %v4997
        %v5198 = vpop.f32.mrf.mxu0
        %v5199 = vadd.f32 %v5110, %v5198
        %v5200 = vpop.f32.mrf.mxu0
        %v5201 = vadd.f32 %v5112, %v5200
        %5202 = vmatmul.bf16.gmra.mxu0 %v4999
        %v5203 = vpop.f32.mrf.mxu0
        %v5204 = vadd.f32 %v5115, %v5203
        %v5205 = vpop.f32.mrf.mxu0
        %v5206 = vadd.f32 %v5117, %v5205
        %5207 = vmatmul.bf16.gmra.mxu0 %v5001
        %v5208 = vpop.f32.mrf.mxu0
        %v5209 = vadd.f32 %v5120, %v5208
        %v5210 = vpop.f32.mrf.mxu0
        %v5211 = vadd.f32 %v5122, %v5210
        %5212 = vmatmul.bf16.gmra.mxu0 %v5003
        %v5213 = vpop.f32.mrf.mxu0
        %v5214 = vadd.f32 %v5125, %v5213
        %v5215 = vpop.f32.mrf.mxu0
        %v5216 = vadd.f32 %v5127, %v5215
        %5217 = vmatmul.bf16.gmra.mxu0 %v5005
        %v5218 = vpop.f32.mrf.mxu0
        %v5219 = vadd.f32 %v5130, %v5218
        %v5220 = vpop.f32.mrf.mxu0
        %v5221 = vadd.f32 %v5132, %v5220
        %5222 = vmatmul.bf16.gmra.mxu0 %v5007
        %v5223 = vpop.f32.mrf.mxu0
        %v5224 = vadd.f32 %v5135, %v5223
        %v5225 = vpop.f32.mrf.mxu0
        %v5226 = vadd.f32 %v5137, %v5225
        %5227 = vmatmul.bf16.gmra.mxu0 %v5009
        %v5228 = vpop.f32.mrf.mxu0
        %v5229 = vadd.f32 %v5140, %v5228
        %v5230 = vpop.f32.mrf.mxu0
        %v5231 = vadd.f32 %v5142, %v5230
        %5232 = vmatmul.bf16.gmra.mxu0 %v5011
        %v5233 = vpop.f32.mrf.mxu0
        %v5234 = vadd.f32 %v5145, %v5233
        %v5235 = vpop.f32.mrf.mxu0
        %v5236 = vadd.f32 %v5147, %v5235
        %5237 = vdwg.mxu0
        %v5238 = vrcp.pop %v4886
        %v5239 = vrcp.pop %v4889
        %v5240 = vrcp.pop %v4892
        %v5241 = vrcp.pop %v4895
        %v5242 = vrcp.pop %v4898
        %v5243 = vrcp.pop %v4901
        %v5244 = vrcp.pop %v4904
        %v5245 = vrcp.pop %v4907
        %v5246 = vrcp.pop %v4910
        %v5247 = vrcp.pop %v4913
        %v5248 = vrcp.pop %v4916
        %v5249 = vrcp.pop %v4919
        %v5250 = vrcp.pop %v4922
        %v5251 = vrcp.pop %v4925
        %v5252 = vrcp.pop %v4928
        %v5253 = vrcp.pop %v4931
        %v5254 = vrcp.pop %v4934
        %v5255 = vrcp.pop %v4937
        %v5256 = vrcp.pop %v4940
        %v5257 = vrcp.pop %v4943
        %v5258 = vrcp.pop %v4946
        %v5259 = vrcp.pop %v4949
        %v5260 = vrcp.pop %v4952
        %v5261 = vrcp.pop %v4955
        %v5262 = vrcp.pop %v4958
        %v5263 = vrcp.pop %v4961
        %v5264 = vrcp.pop %v4964
        %v5265 = vrcp.pop %v4967
        %v5266 = vrcp.pop %v4970
        %v5267 = vrcp.pop %v4973
        %v5268 = vrcp.pop %v4976
        %v5269 = vrcp.pop %v4979
        %v5270 = vmul.f32 %v5159, %v5238
        %v5271 = vmul.f32 %v5161, %v5239
        %v5272 = vmul.f32 %v5164, %v5240
        %v5273 = vmul.f32 %v5166, %v5241
        %v5274 = vmul.f32 %v5169, %v5242
        %v5275 = vmul.f32 %v5171, %v5243
        %v5276 = vmul.f32 %v5174, %v5244
        %v5277 = vmul.f32 %v5176, %v5245
        %v5278 = vmul.f32 %v5179, %v5246
        %v5279 = vmul.f32 %v5181, %v5247
        %v5280 = vmul.f32 %v5184, %v5248
        %v5281 = vmul.f32 %v5186, %v5249
        %v5282 = vmul.f32 %v5189, %v5250
        %v5283 = vmul.f32 %v5191, %v5251
        %v5284 = vmul.f32 %v5194, %v5252
        %v5285 = vmul.f32 %v5196, %v5253
        %v5286 = vmul.f32 %v5199, %v5254
        %v5287 = vmul.f32 %v5201, %v5255
        %v5288 = vmul.f32 %v5204, %v5256
        %v5289 = vmul.f32 %v5206, %v5257
        %v5290 = vmul.f32 %v5209, %v5258
        %v5291 = vmul.f32 %v5211, %v5259
        %v5292 = vmul.f32 %v5214, %v5260
        %v5293 = vmul.f32 %v5216, %v5261
        %v5294 = vmul.f32 %v5219, %v5262
        %v5295 = vmul.f32 %v5221, %v5263
        %v5296 = vmul.f32 %v5224, %v5264
        %v5297 = vmul.f32 %v5226, %v5265
        %v5298 = vmul.f32 %v5229, %v5266
        %v5299 = vmul.f32 %v5231, %v5267
        %v5300 = vmul.f32 %v5234, %v5268
        %v5301 = vmul.f32 %v5236, %v5269
        %v5302 = vpack.c.bf16 %v5270, %v5270
        %v5303 = vpack.c.bf16 %v5271, %v5271
        %v5304 = vpack.c.bf16 %v5272, %v5272
        %v5305 = vpack.c.bf16 %v5273, %v5273
        %v5306 = vpack.c.bf16 %v5274, %v5274
        %v5307 = vpack.c.bf16 %v5275, %v5275
        %v5308 = vpack.c.bf16 %v5276, %v5276
        %v5309 = vpack.c.bf16 %v5277, %v5277
        %v5310 = vpack.c.bf16 %v5278, %v5278
        %v5311 = vpack.c.bf16 %v5279, %v5279
        %v5312 = vpack.c.bf16 %v5280, %v5280
        %v5313 = vpack.c.bf16 %v5281, %v5281
        %v5314 = vpack.c.bf16 %v5282, %v5282
        %v5315 = vpack.c.bf16 %v5283, %v5283
        %v5316 = vpack.c.bf16 %v5284, %v5284
        %v5317 = vpack.c.bf16 %v5285, %v5285
        %v5318 = vpack.c.bf16 %v5286, %v5286
        %v5319 = vpack.c.bf16 %v5287, %v5287
        %v5320 = vpack.c.bf16 %v5288, %v5288
        %v5321 = vpack.c.bf16 %v5289, %v5289
        %v5322 = vpack.c.bf16 %v5290, %v5290
        %v5323 = vpack.c.bf16 %v5291, %v5291
        %v5324 = vpack.c.bf16 %v5292, %v5292
        %v5325 = vpack.c.bf16 %v5293, %v5293
        %v5326 = vpack.c.bf16 %v5294, %v5294
        %v5327 = vpack.c.bf16 %v5295, %v5295
        %v5328 = vpack.c.bf16 %v5296, %v5296
        %v5329 = vpack.c.bf16 %v5297, %v5297
        %v5330 = vpack.c.bf16 %v5298, %v5298
        %v5331 = vpack.c.bf16 %v5299, %v5299
        %v5332 = vpack.c.bf16 %v5300, %v5300
        %v5333 = vpack.c.bf16 %v5301, %v5301
        %v5366 = vunpack.c.l.b16 %v2074
        %v5367 = vunpack.c.l.b16 %v2075
        %v5368 = vunpack.c.l.b16 %v2076
        %v5369 = vunpack.c.l.b16 %v2077
        %v5370 = vunpack.c.l.b16 %v2078
        %v5371 = vunpack.c.l.b16 %v2079
        %v5372 = vunpack.c.l.b16 %v2080
        %v5373 = vunpack.c.l.b16 %v2081
        %v5374 = vunpack.c.l.b16 %v2082
        %v5375 = vunpack.c.l.b16 %v2083
        %v5376 = vunpack.c.l.b16 %v2084
        %v5377 = vunpack.c.l.b16 %v2085
        %v5378 = vunpack.c.l.b16 %v2086
        %v5379 = vunpack.c.l.b16 %v2087
        %v5380 = vunpack.c.l.b16 %v2088
        %v5381 = vunpack.c.l.b16 %v2089
        %v5382 = vunpack.c.l.b16 %v2090
        %v5383 = vunpack.c.l.b16 %v2091
        %v5384 = vunpack.c.l.b16 %v2092
        %v5385 = vunpack.c.l.b16 %v2093
        %v5386 = vunpack.c.l.b16 %v2094
        %v5387 = vunpack.c.l.b16 %v2095
        %v5388 = vunpack.c.l.b16 %v2096
        %v5389 = vunpack.c.l.b16 %v2097
        %v5390 = vunpack.c.l.b16 %v2098
        %v5391 = vunpack.c.l.b16 %v2099
        %v5392 = vunpack.c.l.b16 %v2100
        %v5393 = vunpack.c.l.b16 %v2101
        %v5394 = vunpack.c.l.b16 %v2102
        %v5395 = vunpack.c.l.b16 %v2103
        %v5396 = vunpack.c.l.b16 %v2104
        %v5397 = vunpack.c.l.b16 %v2105
        %v5398 = vpack.c.b16 %v5367, %v5366
        %v5399 = vpack.c.b16 %v5369, %v5368
        %v5400 = vpack.c.b16 %v5371, %v5370
        %v5401 = vpack.c.b16 %v5373, %v5372
        %v5402 = vpack.c.b16 %v5375, %v5374
        %v5403 = vpack.c.b16 %v5377, %v5376
        %v5404 = vpack.c.b16 %v5379, %v5378
        %v5405 = vpack.c.b16 %v5381, %v5380
        %v5406 = vpack.c.b16 %v5383, %v5382
        %v5407 = vpack.c.b16 %v5385, %v5384
        %v5408 = vpack.c.b16 %v5387, %v5386
        %v5409 = vpack.c.b16 %v5389, %v5388
        %v5410 = vpack.c.b16 %v5391, %v5390
        %v5411 = vpack.c.b16 %v5393, %v5392
        %v5412 = vpack.c.b16 %v5395, %v5394
        %v5413 = vpack.c.b16 %v5397, %v5396
        %v5446 = vunpack.c.l.b16 %v3150
        %v5447 = vunpack.c.l.b16 %v3151
        %v5448 = vunpack.c.l.b16 %v3152
        %v5449 = vunpack.c.l.b16 %v3153
        %v5450 = vunpack.c.l.b16 %v3154
        %v5451 = vunpack.c.l.b16 %v3155
        %v5452 = vunpack.c.l.b16 %v3156
        %v5453 = vunpack.c.l.b16 %v3157
        %v5454 = vunpack.c.l.b16 %v3158
        %v5455 = vunpack.c.l.b16 %v3159
        %v5456 = vunpack.c.l.b16 %v3160
        %v5457 = vunpack.c.l.b16 %v3161
        %v5458 = vunpack.c.l.b16 %v3162
        %v5459 = vunpack.c.l.b16 %v3163
        %v5460 = vunpack.c.l.b16 %v3164
        %v5461 = vunpack.c.l.b16 %v3165
        %v5462 = vunpack.c.l.b16 %v3166
        %v5463 = vunpack.c.l.b16 %v3167
        %v5464 = vunpack.c.l.b16 %v3168
        %v5465 = vunpack.c.l.b16 %v3169
        %v5466 = vunpack.c.l.b16 %v3170
        %v5467 = vunpack.c.l.b16 %v3171
        %v5468 = vunpack.c.l.b16 %v3172
        %v5469 = vunpack.c.l.b16 %v3173
        %v5470 = vunpack.c.l.b16 %v3174
        %v5471 = vunpack.c.l.b16 %v3175
        %v5472 = vunpack.c.l.b16 %v3176
        %v5473 = vunpack.c.l.b16 %v3177
        %v5474 = vunpack.c.l.b16 %v3178
        %v5475 = vunpack.c.l.b16 %v3179
        %v5476 = vunpack.c.l.b16 %v3180
        %v5477 = vunpack.c.l.b16 %v3181
        %v5478 = vpack.c.b16 %v5447, %v5446
        %v5479 = vpack.c.b16 %v5449, %v5448
        %v5480 = vpack.c.b16 %v5451, %v5450
        %v5481 = vpack.c.b16 %v5453, %v5452
        %v5482 = vpack.c.b16 %v5455, %v5454
        %v5483 = vpack.c.b16 %v5457, %v5456
        %v5484 = vpack.c.b16 %v5459, %v5458
        %v5485 = vpack.c.b16 %v5461, %v5460
        %v5486 = vpack.c.b16 %v5463, %v5462
        %v5487 = vpack.c.b16 %v5465, %v5464
        %v5488 = vpack.c.b16 %v5467, %v5466
        %v5489 = vpack.c.b16 %v5469, %v5468
        %v5490 = vpack.c.b16 %v5471, %v5470
        %v5491 = vpack.c.b16 %v5473, %v5472
        %v5492 = vpack.c.b16 %v5475, %v5474
        %v5493 = vpack.c.b16 %v5477, %v5476
        %5494 = vrot.lane.b32.xlu0 %v5478, 32
        %v5495 = vpop.permute.xlu0 %5494
        %5496 = vrot.lane.b32.xlu0 %v5479, 32
        %v5497 = vpop.permute.xlu0 %5496
        %5498 = vrot.lane.b32.xlu0 %v5480, 32
        %v5499 = vpop.permute.xlu0 %5498
        %5500 = vrot.lane.b32.xlu0 %v5481, 32
        %v5501 = vpop.permute.xlu0 %5500
        %5502 = vrot.lane.b32.xlu0 %v5482, 32
        %v5503 = vpop.permute.xlu0 %5502
        %5504 = vrot.lane.b32.xlu0 %v5483, 32
        %v5505 = vpop.permute.xlu0 %5504
        %5506 = vrot.lane.b32.xlu0 %v5484, 32
        %v5507 = vpop.permute.xlu0 %5506
        %5508 = vrot.lane.b32.xlu0 %v5485, 32
        %v5509 = vpop.permute.xlu0 %5508
        %5510 = vrot.lane.b32.xlu0 %v5486, 32
        %v5511 = vpop.permute.xlu0 %5510
        %5512 = vrot.lane.b32.xlu0 %v5487, 32
        %v5513 = vpop.permute.xlu0 %5512
        %5514 = vrot.lane.b32.xlu0 %v5488, 32
        %v5515 = vpop.permute.xlu0 %5514
        %5516 = vrot.lane.b32.xlu0 %v5489, 32
        %v5517 = vpop.permute.xlu0 %5516
        %5518 = vrot.lane.b32.xlu0 %v5490, 32
        %v5519 = vpop.permute.xlu0 %5518
        %5520 = vrot.lane.b32.xlu0 %v5491, 32
        %v5521 = vpop.permute.xlu0 %5520
        %5522 = vrot.lane.b32.xlu0 %v5492, 32
        %v5523 = vpop.permute.xlu0 %5522
        %5524 = vrot.lane.b32.xlu0 %v5493, 32
        %v5525 = vpop.permute.xlu0 %5524
        %v5558 = vunpack.c.l.b16 %v4226
        %v5559 = vunpack.c.l.b16 %v4227
        %v5560 = vunpack.c.l.b16 %v4228
        %v5561 = vunpack.c.l.b16 %v4229
        %v5562 = vunpack.c.l.b16 %v4230
        %v5563 = vunpack.c.l.b16 %v4231
        %v5564 = vunpack.c.l.b16 %v4232
        %v5565 = vunpack.c.l.b16 %v4233
        %v5566 = vunpack.c.l.b16 %v4234
        %v5567 = vunpack.c.l.b16 %v4235
        %v5568 = vunpack.c.l.b16 %v4236
        %v5569 = vunpack.c.l.b16 %v4237
        %v5570 = vunpack.c.l.b16 %v4238
        %v5571 = vunpack.c.l.b16 %v4239
        %v5572 = vunpack.c.l.b16 %v4240
        %v5573 = vunpack.c.l.b16 %v4241
        %v5574 = vunpack.c.l.b16 %v4242
        %v5575 = vunpack.c.l.b16 %v4243
        %v5576 = vunpack.c.l.b16 %v4244
        %v5577 = vunpack.c.l.b16 %v4245
        %v5578 = vunpack.c.l.b16 %v4246
        %v5579 = vunpack.c.l.b16 %v4247
        %v5580 = vunpack.c.l.b16 %v4248
        %v5581 = vunpack.c.l.b16 %v4249
        %v5582 = vunpack.c.l.b16 %v4250
        %v5583 = vunpack.c.l.b16 %v4251
        %v5584 = vunpack.c.l.b16 %v4252
        %v5585 = vunpack.c.l.b16 %v4253
        %v5586 = vunpack.c.l.b16 %v4254
        %v5587 = vunpack.c.l.b16 %v4255
        %v5588 = vunpack.c.l.b16 %v4256
        %v5589 = vunpack.c.l.b16 %v4257
        %v5590 = vpack.c.b16 %v5559, %v5558
        %v5591 = vpack.c.b16 %v5561, %v5560
        %v5592 = vpack.c.b16 %v5563, %v5562
        %v5593 = vpack.c.b16 %v5565, %v5564
        %v5594 = vpack.c.b16 %v5567, %v5566
        %v5595 = vpack.c.b16 %v5569, %v5568
        %v5596 = vpack.c.b16 %v5571, %v5570
        %v5597 = vpack.c.b16 %v5573, %v5572
        %v5598 = vpack.c.b16 %v5575, %v5574
        %v5599 = vpack.c.b16 %v5577, %v5576
        %v5600 = vpack.c.b16 %v5579, %v5578
        %v5601 = vpack.c.b16 %v5581, %v5580
        %v5602 = vpack.c.b16 %v5583, %v5582
        %v5603 = vpack.c.b16 %v5585, %v5584
        %v5604 = vpack.c.b16 %v5587, %v5586
        %v5605 = vpack.c.b16 %v5589, %v5588
        %5606 = vrot.lane.b32.xlu0 %v5590, 64
        %v5607 = vpop.permute.xlu0 %5606
        %5608 = vrot.lane.b32.xlu0 %v5591, 64
        %v5609 = vpop.permute.xlu0 %5608
        %5610 = vrot.lane.b32.xlu0 %v5592, 64
        %v5611 = vpop.permute.xlu0 %5610
        %5612 = vrot.lane.b32.xlu0 %v5593, 64
        %v5613 = vpop.permute.xlu0 %5612
        %5614 = vrot.lane.b32.xlu0 %v5594, 64
        %v5615 = vpop.permute.xlu0 %5614
        %5616 = vrot.lane.b32.xlu0 %v5595, 64
        %v5617 = vpop.permute.xlu0 %5616
        %5618 = vrot.lane.b32.xlu0 %v5596, 64
        %v5619 = vpop.permute.xlu0 %5618
        %5620 = vrot.lane.b32.xlu0 %v5597, 64
        %v5621 = vpop.permute.xlu0 %5620
        %5622 = vrot.lane.b32.xlu0 %v5598, 64
        %v5623 = vpop.permute.xlu0 %5622
        %5624 = vrot.lane.b32.xlu0 %v5599, 64
        %v5625 = vpop.permute.xlu0 %5624
        %5626 = vrot.lane.b32.xlu0 %v5600, 64
        %v5627 = vpop.permute.xlu0 %5626
        %5628 = vrot.lane.b32.xlu0 %v5601, 64
        %v5629 = vpop.permute.xlu0 %5628
        %5630 = vrot.lane.b32.xlu0 %v5602, 64
        %v5631 = vpop.permute.xlu0 %5630
        %5632 = vrot.lane.b32.xlu0 %v5603, 64
        %v5633 = vpop.permute.xlu0 %5632
        %5634 = vrot.lane.b32.xlu0 %v5604, 64
        %v5635 = vpop.permute.xlu0 %5634
        %5636 = vrot.lane.b32.xlu0 %v5605, 64
        %v5637 = vpop.permute.xlu0 %5636
        %v5670 = vunpack.c.l.b16 %v5302
        %v5671 = vunpack.c.l.b16 %v5303
        %v5672 = vunpack.c.l.b16 %v5304
        %v5673 = vunpack.c.l.b16 %v5305
        %v5674 = vunpack.c.l.b16 %v5306
        %v5675 = vunpack.c.l.b16 %v5307
        %v5676 = vunpack.c.l.b16 %v5308
        %v5677 = vunpack.c.l.b16 %v5309
        %v5678 = vunpack.c.l.b16 %v5310
        %v5679 = vunpack.c.l.b16 %v5311
        %v5680 = vunpack.c.l.b16 %v5312
        %v5681 = vunpack.c.l.b16 %v5313
        %v5682 = vunpack.c.l.b16 %v5314
        %v5683 = vunpack.c.l.b16 %v5315
        %v5684 = vunpack.c.l.b16 %v5316
        %v5685 = vunpack.c.l.b16 %v5317
        %v5686 = vunpack.c.l.b16 %v5318
        %v5687 = vunpack.c.l.b16 %v5319
        %v5688 = vunpack.c.l.b16 %v5320
        %v5689 = vunpack.c.l.b16 %v5321
        %v5690 = vunpack.c.l.b16 %v5322
        %v5691 = vunpack.c.l.b16 %v5323
        %v5692 = vunpack.c.l.b16 %v5324
        %v5693 = vunpack.c.l.b16 %v5325
        %v5694 = vunpack.c.l.b16 %v5326
        %v5695 = vunpack.c.l.b16 %v5327
        %v5696 = vunpack.c.l.b16 %v5328
        %v5697 = vunpack.c.l.b16 %v5329
        %v5698 = vunpack.c.l.b16 %v5330
        %v5699 = vunpack.c.l.b16 %v5331
        %v5700 = vunpack.c.l.b16 %v5332
        %v5701 = vunpack.c.l.b16 %v5333
        %v5702 = vpack.c.b16 %v5671, %v5670
        %v5703 = vpack.c.b16 %v5673, %v5672
        %v5704 = vpack.c.b16 %v5675, %v5674
        %v5705 = vpack.c.b16 %v5677, %v5676
        %v5706 = vpack.c.b16 %v5679, %v5678
        %v5707 = vpack.c.b16 %v5681, %v5680
        %v5708 = vpack.c.b16 %v5683, %v5682
        %v5709 = vpack.c.b16 %v5685, %v5684
        %v5710 = vpack.c.b16 %v5687, %v5686
        %v5711 = vpack.c.b16 %v5689, %v5688
        %v5712 = vpack.c.b16 %v5691, %v5690
        %v5713 = vpack.c.b16 %v5693, %v5692
        %v5714 = vpack.c.b16 %v5695, %v5694
        %v5715 = vpack.c.b16 %v5697, %v5696
        %v5716 = vpack.c.b16 %v5699, %v5698
        %v5717 = vpack.c.b16 %v5701, %v5700
        %5718 = vrot.lane.b32.xlu0 %v5702, 96
        %v5719 = vpop.permute.xlu0 %5718
        %5720 = vrot.lane.b32.xlu0 %v5703, 96
        %v5721 = vpop.permute.xlu0 %5720
        %5722 = vrot.lane.b32.xlu0 %v5704, 96
        %v5723 = vpop.permute.xlu0 %5722
        %5724 = vrot.lane.b32.xlu0 %v5705, 96
        %v5725 = vpop.permute.xlu0 %5724
        %5726 = vrot.lane.b32.xlu0 %v5706, 96
        %v5727 = vpop.permute.xlu0 %5726
        %5728 = vrot.lane.b32.xlu0 %v5707, 96
        %v5729 = vpop.permute.xlu0 %5728
        %5730 = vrot.lane.b32.xlu0 %v5708, 96
        %v5731 = vpop.permute.xlu0 %5730
        %5732 = vrot.lane.b32.xlu0 %v5709, 96
        %v5733 = vpop.permute.xlu0 %5732
        %5734 = vrot.lane.b32.xlu0 %v5710, 96
        %v5735 = vpop.permute.xlu0 %5734
        %5736 = vrot.lane.b32.xlu0 %v5711, 96
        %v5737 = vpop.permute.xlu0 %5736
        %5738 = vrot.lane.b32.xlu0 %v5712, 96
        %v5739 = vpop.permute.xlu0 %5738
        %5740 = vrot.lane.b32.xlu0 %v5713, 96
        %v5741 = vpop.permute.xlu0 %5740
        %5742 = vrot.lane.b32.xlu0 %v5714, 96
        %v5743 = vpop.permute.xlu0 %5742
        %5744 = vrot.lane.b32.xlu0 %v5715, 96
        %v5745 = vpop.permute.xlu0 %5744
        %5746 = vrot.lane.b32.xlu0 %v5716, 96
        %v5747 = vpop.permute.xlu0 %5746
        %5748 = vrot.lane.b32.xlu0 %v5717, 96
        %v5749 = vpop.permute.xlu0 %5748
        %v5752 = vsel %vm1045, %v5398, %v5495
        %v5755 = vsel %vm1045, %v5399, %v5497
        %v5758 = vsel %vm1045, %v5400, %v5499
        %v5761 = vsel %vm1045, %v5401, %v5501
        %v5764 = vsel %vm1045, %v5402, %v5503
        %v5767 = vsel %vm1045, %v5403, %v5505
        %v5770 = vsel %vm1045, %v5404, %v5507
        %v5773 = vsel %vm1045, %v5405, %v5509
        %v5776 = vsel %vm1045, %v5406, %v5511
        %v5779 = vsel %vm1045, %v5407, %v5513
        %v5782 = vsel %vm1045, %v5408, %v5515
        %v5785 = vsel %vm1045, %v5409, %v5517
        %v5788 = vsel %vm1045, %v5410, %v5519
        %v5791 = vsel %vm1045, %v5411, %v5521
        %v5794 = vsel %vm1045, %v5412, %v5523
        %v5797 = vsel %vm1045, %v5413, %v5525
        %vm5798 = vcmask 523264
        %v5800 = vsel %vm5798, %v5752, %v5607
        %v5802 = vsel %vm5798, %v5755, %v5609
        %v5804 = vsel %vm5798, %v5758, %v5611
        %v5806 = vsel %vm5798, %v5761, %v5613
        %v5808 = vsel %vm5798, %v5764, %v5615
        %v5810 = vsel %vm5798, %v5767, %v5617
        %v5812 = vsel %vm5798, %v5770, %v5619
        %v5814 = vsel %vm5798, %v5773, %v5621
        %v5816 = vsel %vm5798, %v5776, %v5623
        %v5818 = vsel %vm5798, %v5779, %v5625
        %v5820 = vsel %vm5798, %v5782, %v5627
        %v5822 = vsel %vm5798, %v5785, %v5629
        %v5824 = vsel %vm5798, %v5788, %v5631
        %v5826 = vsel %vm5798, %v5791, %v5633
        %v5828 = vsel %vm5798, %v5794, %v5635
        %v5830 = vsel %vm5798, %v5797, %v5637
        %vm5831 = vcmask 785408
        %v5833 = vsel %vm5831, %v5800, %v5719
        %v5836 = vsel %vm5831, %v5802, %v5721
        %v5839 = vsel %vm5831, %v5804, %v5723
        %v5842 = vsel %vm5831, %v5806, %v5725
        %v5845 = vsel %vm5831, %v5808, %v5727
        %v5848 = vsel %vm5831, %v5810, %v5729
        %v5851 = vsel %vm5831, %v5812, %v5731
        %v5854 = vsel %vm5831, %v5814, %v5733
        %v5857 = vsel %vm5831, %v5816, %v5735
        %v5860 = vsel %vm5831, %v5818, %v5737
        %v5863 = vsel %vm5831, %v5820, %v5739
        %v5866 = vsel %vm5831, %v5822, %v5741
        %v5869 = vsel %vm5831, %v5824, %v5743
        %v5872 = vsel %vm5831, %v5826, %v5745
        %v5875 = vsel %vm5831, %v5828, %v5747
        %v5878 = vsel %vm5831, %v5830, %v5749
        %v5880 = vld [vmem:[%s2] sm:$0xf]
        %v5881 = vpack.c.bf16 %v5880, %v5880
        %v5882 = vld [vmem:[%s3] sm:$0xf]
        %5884 = vset.pattern.permute.xlu0 0
        %5885 = vperm.xlu0 %5884, %v5882
        %v5886 = vpop.permute.xlu0 %5885
        %5888 = vmatpush.bf16.xpose.msra.mxu0 %v5854
        %5889 = vmatpush.bf16.xpose.msra.mxu0 %v5851
        %5890 = vmatpush.bf16.xpose.msra.mxu0 %v5848
        %5891 = vmatpush.bf16.xpose.msra.mxu0 %v5845
        %5892 = vmatpush.bf16.xpose.msra.mxu0 %v5842
        %5893 = vmatpush.bf16.xpose.msra.mxu0 %v5839
        %5894 = vmatpush.bf16.xpose.msra.mxu0 %v5836
        %5895 = vmatpush.bf16.xpose.msra.mxu0 %v5833
        %5896 = vmatmul.bf16.gmra.mxu0 %v5881
        %v5897 = vpop.f32.mrf.mxu0
        %v5898 = vadd.f32 %v5886, %v5897
        %v5899 = vpop.f32.mrf.mxu0
        %5900 = vdwg.mxu0
        %5901 = vmatpush.bf16.xpose.msra.mxu0 %v5878
        %5902 = vmatpush.bf16.xpose.msra.mxu0 %v5875
        %5903 = vmatpush.bf16.xpose.msra.mxu0 %v5872
        %5904 = vmatpush.bf16.xpose.msra.mxu0 %v5869
        %5905 = vmatpush.bf16.xpose.msra.mxu0 %v5866
        %5906 = vmatpush.bf16.xpose.msra.mxu0 %v5863
        %5907 = vmatpush.bf16.xpose.msra.mxu0 %v5860
        %5908 = vmatpush.bf16.xpose.msra.mxu0 %v5857
        %5909 = vmatmul.bf16.gmra.mxu0 %v5881
        %v5910 = vpop.f32.mrf.mxu0
        %v5911 = vadd.f32 %v5886, %v5910
        %v5912 = vpop.f32.mrf.mxu0
        %5913 = vdwg.mxu0
        %v5916 = vrot.slane %v5911, 4
        %vm5917 = vcmask 1043456
        %v5918 = vsel %vm5917, %v5898, %v5916
        %5920 = vst [vmem:[%s244] sm:$0xff] %v5918
        %s5921 = sand.u32 %s133, 1
        %s5922 = scalar_lea.sflag [#allocation5], %s5921
        %s5923 = sand.u32 %s133, 1
        %s5924 = smul.addr %s5923, 8
        %s5925 = scalar_lea.vmem [#allocation8], %s5924
        // Predicated region
        $region49: #{tpu_custom_call.1} parent=35 // pred_check
          %p5926 = pneg %p143
        $region50: #{tpu_custom_call.1} parent=35 // pred_check_branch
          %5928 = sbr.rel (%p5926) target = $region52
        $region51: #{tpu_custom_call.1} parent=35 // pred_region
          %s5929 = smul.u32 2, %s27
          %5931 = vsyncadd %s5922, 0
          %s5932 = smul.addr %s26, 2
          %s5933 = sadd.s32 %s5929, %s5932
          %s5934 = smul.addr %s5933, 4
          %s5935 = scalar_lea.hbm %s4, %s5934
          %s5937 = sshll.u32 %s5925, 4
          %s5938 = int_to_ptr.vmem [resolvable:$true] %s5937
          %s5939 = sshll.u32 %s5935, 4
          %s5940 = int_to_ptr.hbm [resolvable:$true] %s5939
          %5942 = dma.vmem_to_hbm [thread:$0]  %s5938, 128, %s5940, %s5922
        $region52: #{tpu_custom_call.1} parent=35 // pred_fallthru
          _
      $region36: #{tpu_custom_call.1} parent=5 // pred_fallthru
        _
      %p5943 = scmp.le.s32.totalorder 2, %s17
      // Predicated region
      $region53: #{tpu_custom_call.1} parent=5 // pred_check
        %p5944 = pneg %p5943
      $region54: #{tpu_custom_call.1} parent=5 // pred_check_branch
        %5946 = sbr.rel (%p5944) target = $region56
      $region55: #{tpu_custom_call.1} parent=5 // pred_region
        %s5947 = ssub.s32 %s17, 2
        // Predicated region
        $region57: #{tpu_custom_call.1} parent=55 // pred_check
          %p5948 = pneg %p149
        $region58: #{tpu_custom_call.1} parent=55 // pred_check_branch
          %5950 = sbr.rel (%p5948) target = $region60
        $region59: #{tpu_custom_call.1} parent=55 // pred_region
          %s5951 = sand.u32 %s134, 1
          %s5952 = scalar_lea.sflag [#allocation5], %s5951
          %s5953 = sand.u32 %s134, 1
          %s5954 = smul.addr %s5953, 8
          %s5955 = scalar_lea.vmem [#allocation8], %s5954
          %5957 = dma.done %s5952, 128
        $region60: #{tpu_custom_call.1} parent=55 // pred_fallthru
          _
      $region56: #{tpu_custom_call.1} parent=5 // pred_fallthru
        _
    $region6: #{tpu_custom_call.1} parent=1 // loop_footer
      %s21 = sadd.s32 1, %s17
    $region7: #{tpu_custom_call.1} parent=1 // loop_footer_branch
      %16 = sbr.rel target = $region3
    $region8: #{tpu_custom_call.1} parent=1 // loop_exit
      _
    %5958 = vsyncpa [#allocation4], 1
    %s5959 = scalar_lea.sflag [#allocation4], 1
    %5960 = vsyncpa %s5959, 1
    %5961 = vsyncpa [#allocation7], 1
    %5962 = vsyncpa [#allocation5], 1
    %s5963 = scalar_lea.sflag [#allocation5], 1
    %5964 = vsyncpa %s5963, 1

</llo_original>
